<compile_context>
chip_gen: v7x
topology: tpu7x:2x2x1
jax: 0.10.0
libtpu: 0.0.40
codegen_flags: <defaults>
</compile_context>

<pallas_src>
import numpy as np
import jax
import jax.numpy as jnp
from jax import lax
from jax.experimental import pallas as pl
from jax.experimental.pallas import tpu as pltpu

N_QUBITS = 4
DIM = 2 ** N_QUBITS            # 16 basis states
PATCHES = 14 * 14              # 196 patches per 28x28 image (2x2 window, stride 2)
P_PAD = 256                    # patch axis padded to 2 full lane-vregs
HID = 64
HID_PAD = 128                  # fc1 width padded to lane-dense 128
N_CLASSES = 10
OUT_PAD = 128                  # logits padded to lane-dense 128
B_TILE = 8                     # images per grid step  (B_TILE * DIM = 128 MXU rows)
ROWS = B_TILE * DIM            # 128


# ----------------------------------------------------------------------------
# Circuit construction (plain numpy glue, deterministic)
# ----------------------------------------------------------------------------
def _ry(theta):
    c, s = np.cos(theta / 2.0), np.sin(theta / 2.0)
    return np.array([[c, -s], [s, c]], dtype=np.float64)


def _kron_all(mats):
    out = mats[0]
    for m in mats[1:]:
        out = np.kron(out, m)
    return out


def _cnot(n, ctrl, tgt):
    dim = 2 ** n
    u = np.zeros((dim, dim), dtype=np.float64)
    for i in range(dim):
        bits = [(i >> (n - 1 - q)) & 1 for q in range(n)]
        if bits[ctrl] == 1:
            bits[tgt] ^= 1
        j = sum(b << (n - 1 - q) for q, b in enumerate(bits))
        u[j, i] = 1.0
    return u


def build_circuit_unitary():
    """Fixed (real) 16x16 circuit unitary."""
    thetas = np.linspace(0.1, 0.7, N_QUBITS)              # deterministic params
    u = _kron_all([_ry(t) for t in thetas])               # RY layer
    for q in range(N_QUBITS):                             # CNOT ring entangler
        u = _cnot(N_QUBITS, q, (q + 1) % N_QUBITS) @ u
    return jnp.asarray(u, jnp.float32)


# ----------------------------------------------------------------------------
# Fused Pallas kernel: quanv + flatten + fc1 + relu + fc2  (B_TILE images/step)
# ----------------------------------------------------------------------------
def fused_net_kernel(ang_ref, ublk_ref, sperm_ref, w1_ref, b1_ref, w2_ref,
                     b2_ref, out_ref):
    # angles: (B_TILE, 4*P_PAD), lane index = q*P_PAD + p (zero for p >= 196)
    ang = ang_ref[...]
    c = jnp.cos(ang * 0.5)                                   # (8, 1024)
    s = jnp.sin(ang * 0.5)                                   # (8, 1024)

    # Expansion matrix E[r, b] = 1 iff r // 16 == b (row r = b*16 + j), built
    # in-kernel from iotas; the batch->row expansion runs on the idle MXU.
    row = lax.broadcasted_iota(jnp.int32, (ROWS, B_TILE), 0)
    col = lax.broadcasted_iota(jnp.int32, (ROWS, B_TILE), 1)
    expand = ((row >> N_QUBITS) == col).astype(jnp.float32)  # (128, 8)

    c_rep = jnp.dot(expand, c, preferred_element_type=jnp.float32)   # (128, 1024)
    s_rep = jnp.dot(expand, s, preferred_element_type=jnp.float32)   # (128, 1024)

    # basis-state bits per row (row r = b*16 + j  =>  bit_q = (r >> (3-q)) & 1),
    # hoisted once and reused for all qubits.
    r_idx = lax.broadcasted_iota(jnp.int32, (ROWS, 1), 0)             # (128, 1)

    # product state psi[b*16+j, p] = prod_q (cos if bit_q(j)==0 else sin)
    psi = None
    for q in range(N_QUBITS):
        bit = ((r_idx >> (N_QUBITS - 1 - q)) & 1) > 0                 # (128, 1) bool
        lo, hi = q * P_PAD, (q + 1) * P_PAD
        factor = jnp.where(bit, s_rep[:, lo:hi], c_rep[:, lo:hi])     # (128, 256)
        psi = factor if psi is None else psi * factor

    # apply the block-diagonal circuit unitary: one full 128-row MXU matmul
    psi_out = jnp.dot(ublk_ref[...], psi, preferred_element_type=jnp.float32)
    probs = psi_out * psi_out                                         # (128, 256)

    # per-qubit <Z> readout as one MXU dot; z rows ordered q*B_TILE + b
    z = jnp.dot(sperm_ref[...], probs, preferred_element_type=jnp.float32)  # (32, 256)

    # fc1: channel-major torch.flatten folded into W1's (4, 256, 128) layout
    h = None
    for q in range(N_QUBITS):
        zq = z[q * B_TILE:(q + 1) * B_TILE, :]                        # (8, 256)
        hq = jnp.dot(zq, w1_ref[q], preferred_element_type=jnp.float32)  # (8, 128)
        h = hq if h is None else h + hq
    h = jnp.maximum(h + b1_ref[...], 0.0)                             # (8, 128)

    # fc2 into a lane-dense (B_TILE, 128) block (cols >= 10 are zero weights)
    logits = jnp.dot(h, w2_ref[...], preferred_element_type=jnp.float32)
    out_ref[...] = logits + b2_ref[...]                               # (8, 128)


def net_forward(x, u_blk, s_perm, w1_pad, b1_pad, w2_pad, b2_pad):
    """x: (B, 1, 28, 28) NCHW -> logits (B, 10)."""
    b = x.shape[0]
    img = x[:, 0]                                           # (B, 28, 28)
    # 2x2 / stride-2 patch extraction as four strided slices (no 5-D transpose)
    planes = [img[:, 0::2, 0::2], img[:, 0::2, 1::2],
              img[:, 1::2, 0::2], img[:, 1::2, 1::2]]
    ang = jnp.pi * jnp.stack([p.reshape(b, PATCHES) for p in planes], axis=1)
    ang = jnp.pad(ang, ((0, 0), (0, 0), (0, P_PAD - PATCHES)))        # (B, 4, 256)
    ang = ang.reshape(b, N_QUBITS * P_PAD)                            # (B, 1024)

    # pad batch to a multiple of B_TILE (padded rows are garbage, sliced off)
    b_pad = -(-b // B_TILE) * B_TILE
    if b_pad != b:
        ang = jnp.pad(ang, ((0, b_pad - b), (0, 0)))

    out = pl.pallas_call(
        fused_net_kernel,
        out_shape=jax.ShapeDtypeStruct((b_pad, OUT_PAD), jnp.float32),
        grid_spec=pltpu.PrefetchScalarGridSpec(
            num_scalar_prefetch=0,
            grid=(b_pad // B_TILE,),
            in_specs=[
                pl.BlockSpec((B_TILE, N_QUBITS * P_PAD), lambda i: (i, 0)),   # angles
                pl.BlockSpec((ROWS, ROWS), lambda i: (0, 0)),                 # block-diag U (resident)
                pl.BlockSpec((N_QUBITS * B_TILE, ROWS), lambda i: (0, 0)),    # Z-sign readout matrix
                pl.BlockSpec((N_QUBITS, P_PAD, HID_PAD), lambda i: (0, 0, 0)),# W1 (resident)
                pl.BlockSpec((1, HID_PAD), lambda i: (0, 0)),                 # b1 padded
                pl.BlockSpec((HID_PAD, OUT_PAD), lambda i: (0, 0)),           # W2 padded (resident)
                pl.BlockSpec((1, OUT_PAD), lambda i: (0, 0)),                 # b2 padded
            ],
            out_specs=pl.BlockSpec((B_TILE, OUT_PAD), lambda i: (i, 0)),
        ),
        compiler_params=pltpu.CompilerParams(
            dimension_semantics=("parallel",)),
    )(ang, u_blk, s_perm, w1_pad, b1_pad, w2_pad, b2_pad)

    return out[:b, :N_CLASSES]


# ----------------------------------------------------------------------------
# Parameter init + prep
# ----------------------------------------------------------------------------
def init_params(key):
    k1, k2, k3, k4 = jax.random.split(key, 4)
    fan1, fan2 = PATCHES * N_QUBITS, HID
    lim1, lim2 = 1.0 / np.sqrt(fan1), 1.0 / np.sqrt(fan2)
    w1t = jax.random.uniform(k1, (fan1, HID), jnp.float32, -lim1, lim1)
    b1 = jax.random.uniform(k2, (1, HID), jnp.float32, -lim1, lim1)
    w2t = jax.random.uniform(k3, (HID, N_CLASSES), jnp.float32, -lim2, lim2)
    b2 = jax.random.uniform(k4, (1, N_CLASSES), jnp.float32, -lim2, lim2)
    return w1t, b1, w2t, b2


def prep_kernel_params(u, w1t, b1, w2t, b2):
    # block-diagonal unitary: 8 copies of the 16x16 circuit along the diagonal
    u_blk = jnp.asarray(np.kron(np.eye(B_TILE, dtype=np.float32),
                                np.asarray(u, np.float32)), jnp.float32)
    # permuted block-diag Z-sign matrix: S_perm[q*8+b, b*16+j] = 1 - 2*bit_q(j)
    sp = np.zeros((N_QUBITS * B_TILE, ROWS), np.float32)
    for q in range(N_QUBITS):
        sign = 1.0 - 2.0 * np.array(
            [(j >> (N_QUBITS - 1 - q)) & 1 for j in range(DIM)], np.float32)
        for bb in range(B_TILE):
            sp[q * B_TILE + bb, bb * DIM:(bb + 1) * DIM] = sign
    s_perm = jnp.asarray(sp)

    # fold torch.flatten(x,1) channel-major order into W1; pad patches+hidden
    # with exact zeros (padded angle columns then contribute nothing to fc1).
    w1_pad = jnp.zeros((N_QUBITS, P_PAD, HID_PAD), jnp.float32)
    w1_pad = w1_pad.at[:, :PATCHES, :HID].set(w1t.reshape(N_QUBITS, PATCHES, HID))
    b1_pad = jnp.zeros((1, HID_PAD), jnp.float32).at[:, :HID].set(b1)
    w2_pad = jnp.zeros((HID_PAD, OUT_PAD), jnp.float32).at[:HID, :N_CLASSES].set(w2t)
    b2_pad = jnp.zeros((1, OUT_PAD), jnp.float32).at[:, :N_CLASSES].set(b2)
    return u_blk, s_perm, w1_pad, b1_pad, w2_pad, b2_pad


# ----------------------------------------------------------------------------
# Pure-JAX reference for correctness checking
# ----------------------------------------------------------------------------
def reference_forward(x, u, params):
    w1t, b1, w2t, b2 = params
    b = x.shape[0]
    bits = np.zeros((DIM, N_QUBITS), dtype=np.float32)
    for j in range(DIM):
        for q in range(N_QUBITS):
            bits[j, q] = (j >> (N_QUBITS - 1 - q)) & 1
    bits = jnp.asarray(bits)
    zsigns = 1.0 - 2.0 * bits

    xi = x[:, 0].reshape(b, 14, 2, 14, 2).transpose(0, 1, 3, 2, 4)
    ang = jnp.pi * xi.reshape(b * PATCHES, N_QUBITS)
    c, s = jnp.cos(ang / 2), jnp.sin(ang / 2)
    sel = jnp.where(bits[None] > 0.5, s[:, None, :], c[:, None, :])
    psi = jnp.prod(sel, axis=-1)                     # (B*196, 16)
    probs = (psi @ u.T) ** 2
    feat = probs @ zsigns                            # (B*196, 4)
    feat = feat.reshape(b, 14, 14, 4).transpose(0, 3, 1, 2).reshape(b, -1)
    h = jnp.maximum(feat @ w1t + b1[0], 0.0)
    return h @ w2t + b2[0]


if __name__ == "__main__":
    key = jax.random.PRNGKey(0)
    kx, kp = jax.random.split(key)

    # MNIST-like input (forward requires 28x28 so that quanv -> 4x14x14 = 784).
    # B = 16 -> 2 grid steps of 8 images (keeps both v7x TensorCores busy).
    B = 16
    x = jax.random.uniform(kx, (B, 1, 28, 28), jnp.float32)

    u = build_circuit_unitary()
    w1t, b1, w2t, b2 = init_params(kp)
    kparams = prep_kernel_params(u, w1t, b1, w2t, b2)

    fwd = jax.jit(net_forward)
    out = jax.block_until_ready(fwd(x, *kparams))

    ref = reference_forward(x, u, (w1t, b1, w2t, b2))
    assert out.shape == (B, N_CLASSES)
    np.testing.assert_allclose(np.asarray(out), np.asarray(ref),
                               rtol=1e-4, atol=1e-4)

    print("KERNEL_OK")
</pallas_src>

<mosaic_0001>
module attributes {stable_mosaic.version = 11 : i64} {
  func.func @fused_net_kernel(%arg0: i32, %arg1: memref<8x1024xf32, #tpu.memory_space<vmem>>, %arg2: memref<128x128xf32, #tpu.memory_space<vmem>>, %arg3: memref<32x128xf32, #tpu.memory_space<vmem>>, %arg4: memref<4x256x128xf32, #tpu.memory_space<vmem>>, %arg5: memref<1x128xf32, #tpu.memory_space<vmem>>, %arg6: memref<128x128xf32, #tpu.memory_space<vmem>>, %arg7: memref<1x128xf32, #tpu.memory_space<vmem>>, %arg8: memref<8x128xf32, #tpu.memory_space<vmem>>) attributes {dimension_semantics = [#tpu.dimension_semantics<parallel>], iteration_bounds = array<i64: 2>, scalar_prefetch = 0 : i64, scratch_operands = 0 : i64, tpu.core_type = #tpu.core_type<tc>, window_params = [{transform_indices = @transform_0, window_bounds = array<i64: 8, 1024>}, {pipeline_mode = #tpu.pipeline_mode<synchronous>, transform_indices = @transform_1, window_bounds = array<i64: 128, 128>}, {pipeline_mode = #tpu.pipeline_mode<synchronous>, transform_indices = @transform_2, window_bounds = array<i64: 32, 128>}, {pipeline_mode = #tpu.pipeline_mode<synchronous>, transform_indices = @transform_3, window_bounds = array<i64: 4, 256, 128>}, {pipeline_mode = #tpu.pipeline_mode<synchronous>, transform_indices = @transform_4, window_bounds = array<i64: 1, 128>}, {pipeline_mode = #tpu.pipeline_mode<synchronous>, transform_indices = @transform_5, window_bounds = array<i64: 128, 128>}, {pipeline_mode = #tpu.pipeline_mode<synchronous>, transform_indices = @transform_6, window_bounds = array<i64: 1, 128>}, {transform_indices = @transform_7, window_bounds = array<i64: 8, 128>}]} {
    %c0 = arith.constant 0 : index
    %c0_0 = arith.constant 0 : index
    %0 = vector.load %arg1[%c0, %c0_0] : memref<8x1024xf32, #tpu.memory_space<vmem>>, vector<8x1024xf32>
    %cst = arith.constant 5.000000e-01 : f32
    %1 = vector.broadcast %cst : f32 to vector<8x1024xf32>
    %2 = arith.mulf %0, %1 : vector<8x1024xf32>
    %3 = math.cos %2 : vector<8x1024xf32>
    %cst_1 = arith.constant 5.000000e-01 : f32
    %4 = vector.broadcast %cst_1 : f32 to vector<8x1024xf32>
    %5 = arith.mulf %0, %4 : vector<8x1024xf32>
    %6 = math.sin %5 : vector<8x1024xf32>
    %7 = tpu.iota {dimensions = array<i32: 0>} : vector<128x8xi32>
    %8 = tpu.iota {dimensions = array<i32: 1>} : vector<128x8xi32>
    %c4_i32 = arith.constant 4 : i32
    %9 = vector.broadcast %c4_i32 : i32 to vector<128x8xi32>
    %10 = arith.shrsi %7, %9 : vector<128x8xi32>
    %11 = arith.cmpi eq, %10, %8 : vector<128x8xi32>
    %12 = arith.extui %11 : vector<128x8xi1> to vector<128x8xi32>
    %13 = arith.sitofp %12 : vector<128x8xi32> to vector<128x8xf32>
    %cst_2 = arith.constant dense<0.000000e+00> : vector<128x1024xf32>
    %14 = tpu.matmul %13, %3, %cst_2 {dimension_numbers = #tpu.dot_dimension_numbers<[1], [0], [0], [1], [0, 0, 1, 1], [], []>} : vector<128x8xf32>, vector<8x1024xf32>, vector<128x1024xf32> -> vector<128x1024xf32>
    %cst_3 = arith.constant dense<0.000000e+00> : vector<128x1024xf32>
    %15 = tpu.matmul %13, %6, %cst_3 {dimension_numbers = #tpu.dot_dimension_numbers<[1], [0], [0], [1], [0, 0, 1, 1], [], []>} : vector<128x8xf32>, vector<8x1024xf32>, vector<128x1024xf32> -> vector<128x1024xf32>
    %16 = tpu.iota {dimensions = array<i32: 0>} : vector<128x1xi32>
    %c3_i32 = arith.constant 3 : i32
    %17 = vector.broadcast %c3_i32 : i32 to vector<128x1xi32>
    %18 = arith.shrsi %16, %17 : vector<128x1xi32>
    %c1_i32 = arith.constant 1 : i32
    %19 = vector.broadcast %c1_i32 : i32 to vector<128x1xi32>
    %20 = arith.andi %18, %19 : vector<128x1xi32>
    %c0_i32 = arith.constant 0 : i32
    %21 = vector.broadcast %c0_i32 : i32 to vector<128x1xi32>
    %22 = arith.cmpi sgt, %20, %21 : vector<128x1xi32>
    %23 = vector.extract_strided_slice %15 {offsets = [0, 0], sizes = [128, 256], strides = [1, 1]} : vector<128x1024xf32> to vector<128x256xf32>
    %24 = vector.extract_strided_slice %14 {offsets = [0, 0], sizes = [128, 256], strides = [1, 1]} : vector<128x1024xf32> to vector<128x256xf32>
    %25 = vector.shape_cast %22 : vector<128x1xi1> to vector<128x1xi1>
    %26 = vector.broadcast %25 : vector<128x1xi1> to vector<128x256xi1>
    %27 = arith.select %26, %23, %24 : vector<128x256xi1>, vector<128x256xf32>
    %c2_i32 = arith.constant 2 : i32
    %28 = vector.broadcast %c2_i32 : i32 to vector<128x1xi32>
    %29 = arith.shrsi %16, %28 : vector<128x1xi32>
    %c1_i32_4 = arith.constant 1 : i32
    %30 = vector.broadcast %c1_i32_4 : i32 to vector<128x1xi32>
    %31 = arith.andi %29, %30 : vector<128x1xi32>
    %c0_i32_5 = arith.constant 0 : i32
    %32 = vector.broadcast %c0_i32_5 : i32 to vector<128x1xi32>
    %33 = arith.cmpi sgt, %31, %32 : vector<128x1xi32>
    %34 = vector.extract_strided_slice %15 {offsets = [0, 256], sizes = [128, 256], strides = [1, 1]} : vector<128x1024xf32> to vector<128x256xf32>
    %35 = vector.extract_strided_slice %14 {offsets = [0, 256], sizes = [128, 256], strides = [1, 1]} : vector<128x1024xf32> to vector<128x256xf32>
    %36 = vector.shape_cast %33 : vector<128x1xi1> to vector<128x1xi1>
    %37 = vector.broadcast %36 : vector<128x1xi1> to vector<128x256xi1>
    %38 = arith.select %37, %34, %35 : vector<128x256xi1>, vector<128x256xf32>
    %39 = arith.mulf %27, %38 : vector<128x256xf32>
    %c1_i32_6 = arith.constant 1 : i32
    %40 = vector.broadcast %c1_i32_6 : i32 to vector<128x1xi32>
    %41 = arith.shrsi %16, %40 : vector<128x1xi32>
    %c1_i32_7 = arith.constant 1 : i32
    %42 = vector.broadcast %c1_i32_7 : i32 to vector<128x1xi32>
    %43 = arith.andi %41, %42 : vector<128x1xi32>
    %c0_i32_8 = arith.constant 0 : i32
    %44 = vector.broadcast %c0_i32_8 : i32 to vector<128x1xi32>
    %45 = arith.cmpi sgt, %43, %44 : vector<128x1xi32>
    %46 = vector.extract_strided_slice %15 {offsets = [0, 512], sizes = [128, 256], strides = [1, 1]} : vector<128x1024xf32> to vector<128x256xf32>
    %47 = vector.extract_strided_slice %14 {offsets = [0, 512], sizes = [128, 256], strides = [1, 1]} : vector<128x1024xf32> to vector<128x256xf32>
    %48 = vector.shape_cast %45 : vector<128x1xi1> to vector<128x1xi1>
    %49 = vector.broadcast %48 : vector<128x1xi1> to vector<128x256xi1>
    %50 = arith.select %49, %46, %47 : vector<128x256xi1>, vector<128x256xf32>
    %51 = arith.mulf %39, %50 : vector<128x256xf32>
    %c0_i32_9 = arith.constant 0 : i32
    %52 = vector.broadcast %c0_i32_9 : i32 to vector<128x1xi32>
    %53 = arith.shrsi %16, %52 : vector<128x1xi32>
    %c1_i32_10 = arith.constant 1 : i32
    %54 = vector.broadcast %c1_i32_10 : i32 to vector<128x1xi32>
    %55 = arith.andi %53, %54 : vector<128x1xi32>
    %c0_i32_11 = arith.constant 0 : i32
    %56 = vector.broadcast %c0_i32_11 : i32 to vector<128x1xi32>
    %57 = arith.cmpi sgt, %55, %56 : vector<128x1xi32>
    %58 = vector.extract_strided_slice %15 {offsets = [0, 768], sizes = [128, 256], strides = [1, 1]} : vector<128x1024xf32> to vector<128x256xf32>
    %59 = vector.extract_strided_slice %14 {offsets = [0, 768], sizes = [128, 256], strides = [1, 1]} : vector<128x1024xf32> to vector<128x256xf32>
    %60 = vector.shape_cast %57 : vector<128x1xi1> to vector<128x1xi1>
    %61 = vector.broadcast %60 : vector<128x1xi1> to vector<128x256xi1>
    %62 = arith.select %61, %58, %59 : vector<128x256xi1>, vector<128x256xf32>
    %63 = arith.mulf %51, %62 : vector<128x256xf32>
    %c0_12 = arith.constant 0 : index
    %c0_13 = arith.constant 0 : index
    %64 = vector.load %arg2[%c0_12, %c0_13] : memref<128x128xf32, #tpu.memory_space<vmem>>, vector<128x128xf32>
    %cst_14 = arith.constant dense<0.000000e+00> : vector<128x256xf32>
    %65 = tpu.matmul %64, %63, %cst_14 {dimension_numbers = #tpu.dot_dimension_numbers<[1], [0], [0], [1], [0, 0, 1, 1], [], []>} : vector<128x128xf32>, vector<128x256xf32>, vector<128x256xf32> -> vector<128x256xf32>
    %66 = arith.mulf %65, %65 : vector<128x256xf32>
    %c0_15 = arith.constant 0 : index
    %c0_16 = arith.constant 0 : index
    %67 = vector.load %arg3[%c0_15, %c0_16] : memref<32x128xf32, #tpu.memory_space<vmem>>, vector<32x128xf32>
    %cst_17 = arith.constant dense<0.000000e+00> : vector<32x256xf32>
    %68 = tpu.matmul %67, %66, %cst_17 {dimension_numbers = #tpu.dot_dimension_numbers<[1], [0], [0], [1], [0, 0, 1, 1], [], []>} : vector<32x128xf32>, vector<128x256xf32>, vector<32x256xf32> -> vector<32x256xf32>
    %69 = vector.extract_strided_slice %68 {offsets = [0, 0], sizes = [8, 256], strides = [1, 1]} : vector<32x256xf32> to vector<8x256xf32>
    %c0_18 = arith.constant 0 : index
    %c0_19 = arith.constant 0 : index
    %c0_20 = arith.constant 0 : index
    %70 = vector.load %arg4[%c0_18, %c0_19, %c0_20] : memref<4x256x128xf32, #tpu.memory_space<vmem>>, vector<1x256x128xf32>
    %71 = vector.shape_cast %70 : vector<1x256x128xf32> to vector<256x128xf32>
    %cst_21 = arith.constant dense<0.000000e+00> : vector<8x128xf32>
    %72 = tpu.matmul %69, %71, %cst_21 {dimension_numbers = #tpu.dot_dimension_numbers<[1], [0], [0], [1], [0, 0, 1, 1], [], []>} : vector<8x256xf32>, vector<256x128xf32>, vector<8x128xf32> -> vector<8x128xf32>
    %73 = vector.extract_strided_slice %68 {offsets = [8, 0], sizes = [8, 256], strides = [1, 1]} : vector<32x256xf32> to vector<8x256xf32>
    %c1 = arith.constant 1 : index
    %c0_22 = arith.constant 0 : index
    %c0_23 = arith.constant 0 : index
    %74 = vector.load %arg4[%c1, %c0_22, %c0_23] : memref<4x256x128xf32, #tpu.memory_space<vmem>>, vector<1x256x128xf32>
    %75 = vector.shape_cast %74 : vector<1x256x128xf32> to vector<256x128xf32>
    %cst_24 = arith.constant dense<0.000000e+00> : vector<8x128xf32>
    %76 = tpu.matmul %73, %75, %cst_24 {dimension_numbers = #tpu.dot_dimension_numbers<[1], [0], [0], [1], [0, 0, 1, 1], [], []>} : vector<8x256xf32>, vector<256x128xf32>, vector<8x128xf32> -> vector<8x128xf32>
    %77 = arith.addf %72, %76 : vector<8x128xf32>
    %78 = vector.extract_strided_slice %68 {offsets = [16, 0], sizes = [8, 256], strides = [1, 1]} : vector<32x256xf32> to vector<8x256xf32>
    %c2 = arith.constant 2 : index
    %c0_25 = arith.constant 0 : index
    %c0_26 = arith.constant 0 : index
    %79 = vector.load %arg4[%c2, %c0_25, %c0_26] : memref<4x256x128xf32, #tpu.memory_space<vmem>>, vector<1x256x128xf32>
    %80 = vector.shape_cast %79 : vector<1x256x128xf32> to vector<256x128xf32>
    %cst_27 = arith.constant dense<0.000000e+00> : vector<8x128xf32>
    %81 = tpu.matmul %78, %80, %cst_27 {dimension_numbers = #tpu.dot_dimension_numbers<[1], [0], [0], [1], [0, 0, 1, 1], [], []>} : vector<8x256xf32>, vector<256x128xf32>, vector<8x128xf32> -> vector<8x128xf32>
    %82 = arith.addf %77, %81 : vector<8x128xf32>
    %83 = vector.extract_strided_slice %68 {offsets = [24, 0], sizes = [8, 256], strides = [1, 1]} : vector<32x256xf32> to vector<8x256xf32>
    %c3 = arith.constant 3 : index
    %c0_28 = arith.constant 0 : index
    %c0_29 = arith.constant 0 : index
    %84 = vector.load %arg4[%c3, %c0_28, %c0_29] : memref<4x256x128xf32, #tpu.memory_space<vmem>>, vector<1x256x128xf32>
    %85 = vector.shape_cast %84 : vector<1x256x128xf32> to vector<256x128xf32>
    %cst_30 = arith.constant dense<0.000000e+00> : vector<8x128xf32>
    %86 = tpu.matmul %83, %85, %cst_30 {dimension_numbers = #tpu.dot_dimension_numbers<[1], [0], [0], [1], [0, 0, 1, 1], [], []>} : vector<8x256xf32>, vector<256x128xf32>, vector<8x128xf32> -> vector<8x128xf32>
    %87 = arith.addf %82, %86 : vector<8x128xf32>
    %c0_31 = arith.constant 0 : index
    %c0_32 = arith.constant 0 : index
    %88 = vector.load %arg5[%c0_31, %c0_32] : memref<1x128xf32, #tpu.memory_space<vmem>>, vector<1x128xf32>
    %89 = vector.broadcast %88 : vector<1x128xf32> to vector<8x128xf32>
    %90 = arith.addf %87, %89 : vector<8x128xf32>
    %cst_33 = arith.constant 0.000000e+00 : f32
    %91 = vector.broadcast %cst_33 : f32 to vector<8x128xf32>
    %92 = arith.maximumf %90, %91 : vector<8x128xf32>
    %c0_34 = arith.constant 0 : index
    %c0_35 = arith.constant 0 : index
    %93 = vector.load %arg6[%c0_34, %c0_35] : memref<128x128xf32, #tpu.memory_space<vmem>>, vector<128x128xf32>
    %cst_36 = arith.constant dense<0.000000e+00> : vector<8x128xf32>
    %94 = tpu.matmul %92, %93, %cst_36 {dimension_numbers = #tpu.dot_dimension_numbers<[1], [0], [0], [1], [0, 0, 1, 1], [], []>} : vector<8x128xf32>, vector<128x128xf32>, vector<8x128xf32> -> vector<8x128xf32>
    %c0_37 = arith.constant 0 : index
    %c0_38 = arith.constant 0 : index
    %95 = vector.load %arg7[%c0_37, %c0_38] : memref<1x128xf32, #tpu.memory_space<vmem>>, vector<1x128xf32>
    %96 = vector.broadcast %95 : vector<1x128xf32> to vector<8x128xf32>
    %97 = arith.addf %94, %96 : vector<8x128xf32>
    %c0_39 = arith.constant 0 : index
    %c0_40 = arith.constant 0 : index
    %98 = vector.load %arg8[%c0_39, %c0_40] : memref<8x128xf32, #tpu.memory_space<vmem>>, vector<8x128xf32>
    tpu.vector_store %arg8[%c0_39, %c0_40], %97 {strides = array<i32>} : memref<8x128xf32, #tpu.memory_space<vmem>>, vector<8x128xf32>,
    return
  }
  func.func @transform_0(%arg0: i32) -> (i32, i32) {
    %c0_i32 = arith.constant 0 : i32
    %c0_i32_0 = arith.constant 0 : i32
    return %arg0, %c0_i32 : i32, i32
  }
  func.func @transform_1(%arg0: i32) -> (i32, i32) {
    %c0_i32 = arith.constant 0 : i32
    %c0_i32_0 = arith.constant 0 : i32
    %c0_i32_1 = arith.constant 0 : i32
    return %c0_i32, %c0_i32_0 : i32, i32
  }
  func.func @transform_2(%arg0: i32) -> (i32, i32) {
    %c0_i32 = arith.constant 0 : i32
    %c0_i32_0 = arith.constant 0 : i32
    %c0_i32_1 = arith.constant 0 : i32
    return %c0_i32, %c0_i32_0 : i32, i32
  }
  func.func @transform_3(%arg0: i32) -> (i32, i32, i32) {
    %c0_i32 = arith.constant 0 : i32
    %c0_i32_0 = arith.constant 0 : i32
    %c0_i32_1 = arith.constant 0 : i32
    %c0_i32_2 = arith.constant 0 : i32
    return %c0_i32, %c0_i32_0, %c0_i32_1 : i32, i32, i32
  }
  func.func @transform_4(%arg0: i32) -> (i32, i32) {
    %c0_i32 = arith.constant 0 : i32
    %c0_i32_0 = arith.constant 0 : i32
    %c0_i32_1 = arith.constant 0 : i32
    return %c0_i32, %c0_i32_0 : i32, i32
  }
  func.func @transform_5(%arg0: i32) -> (i32, i32) {
    %c0_i32 = arith.constant 0 : i32
    %c0_i32_0 = arith.constant 0 : i32
    %c0_i32_1 = arith.constant 0 : i32
    return %c0_i32, %c0_i32_0 : i32, i32
  }
  func.func @transform_6(%arg0: i32) -> (i32, i32) {
    %c0_i32 = arith.constant 0 : i32
    %c0_i32_0 = arith.constant 0 : i32
    %c0_i32_1 = arith.constant 0 : i32
    return %c0_i32, %c0_i32_0 : i32, i32
  }
  func.func @transform_7(%arg0: i32) -> (i32, i32) {
    %c0_i32 = arith.constant 0 : i32
    %c0_i32_0 = arith.constant 0 : i32
    return %arg0, %c0_i32 : i32, i32
  }
}

</mosaic_0001>

<llo_original>
// kernel: net_forward.1
$region0: #{net_forward.1}
  #allocation0 [shape = 'u32[]', space=smem, size = 0x4, offset = 0x4, fixed_abs, tag = 'smem constant byte address 0x4 - core index']
  #allocation1 [shape = 'u32[144,128]{1,0:T(1,128)}', space=vmem, size = 0x12000, scoped, tag = 'internal scratch']
  %s0 = inlined_call_operand.vmem [shape: f32[16,1024], index: 0, kind: input, shape index: {}]
  %s1 = inlined_call_operand.vmem [shape: f32[128,128], index: 1, kind: input, shape index: {}]
  %s2 = inlined_call_operand.vmem [shape: f32[32,128], index: 2, kind: input, shape index: {}]
  %s3 = inlined_call_operand.vmem [shape: f32[4,256,128], index: 3, kind: input, shape index: {}]
  %s4 = inlined_call_operand.vmem [shape: f32[1,128], index: 4, kind: input, shape index: {}]
  %s5 = inlined_call_operand.vmem [shape: f32[128,128], index: 5, kind: input, shape index: {}]
  %s6 = inlined_call_operand.vmem [shape: f32[1,128], index: 6, kind: input, shape index: {}]
  %s7 = inlined_call_operand.hbm [shape: f32[16,128], index: 7, kind: output, shape index: {}]
  %s8 = sld [smem:[#allocation0]]
  $region61: #{net_forward.1} parent=0
    _
  %s10 = ssub.s32 1, %s8
  %s11 = scalar_select 0, %s10, %s8
  $region1: #{net_forward.1} parent=0
    #allocation2 [shape = 'u8[8192]{0}', space=vmem, size = 0x2000, scoped, tag = 'output window, operand 0']
    #allocation3 [shape = 's32[2]{0}', space=sflag, size = 0x8, scoped, tag = 'scoped memory for net_forward.1']
    %12 = vsyncpa [#allocation3], 0
    %s13 = scalar_lea.sflag [#allocation3], 1
    %14 = vsyncpa %s13, 0
    loop: start=0, step=1, limit=4
    $region2: #{net_forward.1} parent=1 // loop_pre_header
      _
    $region3: #{net_forward.1} parent=1 // loop_header
      %s16 = sphi 0, %s20
      %p17 = scmp.ge.s32.totalorder %s16, 4
      %s26 = sphi 0, %s28
      %s29 = sphi 0, %s26
      %s30 = sphi 0, %s29
      %s46 = sphi 0, %s30
      %s50 = sphi 0, %s50
      %s52 = sphi 0, %s50
      %s53 = sphi 0, %s52
      %s67 = sphi 0, %s53
      %s71 = sphi 0, %s71
      %s73 = sphi 0, %s71
      %s74 = sphi 0, %s73
      %s88 = sphi 0, %s74
      %s92 = sphi 0, %s92
      %s94 = sphi 0, %s92
      %s95 = sphi 0, %s94
      %s109 = sphi 0, %s95
      %s113 = sphi 0, %s113
      %s115 = sphi 0, %s113
      %s116 = sphi 0, %s115
      %s130 = sphi 0, %s116
      %s134 = sphi 0, %s134
      %s136 = sphi 0, %s134
      %s137 = sphi 0, %s136
      %s151 = sphi 0, %s137
      %s155 = sphi 0, %s155
      %s157 = sphi 0, %s155
      %s158 = sphi 0, %s157
      %s172 = sphi 0, %s158
      %s178 = sphi 0, %s180
      %s181 = sphi 0, %s178
      %s182 = sphi 0, %s181
      %s198 = sphi 0, %s182
    $region4: #{net_forward.1} parent=1 // loop_header_branch
      %19 = sbr.rel (%p17) target = $region8
    $region5: #{net_forward.1} parent=1 // loop_body
      %s21 = ssub.s32 %s16, 1
      %s22 = ssub.s32 %s16, 2
      %s23 = sadd.s32 %s16, 1
      %s24 = ssub.s32 %s16, %s23
      %p25 = scmp.eq.s32.totalorder %s24, 0
      %s27 = sadd.s32 %s26, 1
      %s28 = scalar_select %p25, %s26, %s27
      %p31 = pneg %p25
      %p32 = scmp.eq.s32.totalorder %s16, 1
      %p33 = por %p31, %p32
      %p34 = scmp.ne.s32.totalorder %s26, %s29
      %p35 = scmp.eq.s32.totalorder %s16, 0
      %p36 = por %p34, %p35
      %p37 = scmp.ne.s32.totalorder %s26, %s29
      %p38 = scmp.eq.s32.totalorder %s21, 1
      %p39 = por %p37, %p38
      %p40 = scmp.ne.s32.totalorder %s29, %s30
      %p41 = scmp.eq.s32.totalorder %s21, 0
      %p42 = por %p40, %p41
      %p43 = scmp.ne.s32.totalorder %s29, %s30
      %p44 = scmp.eq.s32.totalorder %s22, 1
      %p45 = por %p43, %p44
      %p47 = scmp.ne.s32.totalorder %s30, %s46
      %p48 = scmp.eq.s32.totalorder %s22, 0
      %p49 = por %p47, %p48
      %s51 = sadd.s32 %s50, 1
      %p54 = scmp.eq.s32.totalorder %s16, 1
      %p55 = scmp.ne.s32.totalorder %s50, %s52
      %p56 = scmp.eq.s32.totalorder %s16, 0
      %p57 = por %p55, %p56
      %p58 = scmp.ne.s32.totalorder %s50, %s52
      %p59 = scmp.eq.s32.totalorder %s21, 1
      %p60 = por %p58, %p59
      %p61 = scmp.ne.s32.totalorder %s52, %s53
      %p62 = scmp.eq.s32.totalorder %s21, 0
      %p63 = por %p61, %p62
      %p64 = scmp.ne.s32.totalorder %s52, %s53
      %p65 = scmp.eq.s32.totalorder %s22, 1
      %p66 = por %p64, %p65
      %p68 = scmp.ne.s32.totalorder %s53, %s67
      %p69 = scmp.eq.s32.totalorder %s22, 0
      %p70 = por %p68, %p69
      %s72 = sadd.s32 %s71, 1
      %p75 = scmp.eq.s32.totalorder %s16, 1
      %p76 = scmp.ne.s32.totalorder %s71, %s73
      %p77 = scmp.eq.s32.totalorder %s16, 0
      %p78 = por %p76, %p77
      %p79 = scmp.ne.s32.totalorder %s71, %s73
      %p80 = scmp.eq.s32.totalorder %s21, 1
      %p81 = por %p79, %p80
      %p82 = scmp.ne.s32.totalorder %s73, %s74
      %p83 = scmp.eq.s32.totalorder %s21, 0
      %p84 = por %p82, %p83
      %p85 = scmp.ne.s32.totalorder %s73, %s74
      %p86 = scmp.eq.s32.totalorder %s22, 1
      %p87 = por %p85, %p86
      %p89 = scmp.ne.s32.totalorder %s74, %s88
      %p90 = scmp.eq.s32.totalorder %s22, 0
      %p91 = por %p89, %p90
      %s93 = sadd.s32 %s92, 1
      %p96 = scmp.eq.s32.totalorder %s16, 1
      %p97 = scmp.ne.s32.totalorder %s92, %s94
      %p98 = scmp.eq.s32.totalorder %s16, 0
      %p99 = por %p97, %p98
      %p100 = scmp.ne.s32.totalorder %s92, %s94
      %p101 = scmp.eq.s32.totalorder %s21, 1
      %p102 = por %p100, %p101
      %p103 = scmp.ne.s32.totalorder %s94, %s95
      %p104 = scmp.eq.s32.totalorder %s21, 0
      %p105 = por %p103, %p104
      %p106 = scmp.ne.s32.totalorder %s94, %s95
      %p107 = scmp.eq.s32.totalorder %s22, 1
      %p108 = por %p106, %p107
      %p110 = scmp.ne.s32.totalorder %s95, %s109
      %p111 = scmp.eq.s32.totalorder %s22, 0
      %p112 = por %p110, %p111
      %s114 = sadd.s32 %s113, 1
      %p117 = scmp.eq.s32.totalorder %s16, 1
      %p118 = scmp.ne.s32.totalorder %s113, %s115
      %p119 = scmp.eq.s32.totalorder %s16, 0
      %p120 = por %p118, %p119
      %p121 = scmp.ne.s32.totalorder %s113, %s115
      %p122 = scmp.eq.s32.totalorder %s21, 1
      %p123 = por %p121, %p122
      %p124 = scmp.ne.s32.totalorder %s115, %s116
      %p125 = scmp.eq.s32.totalorder %s21, 0
      %p126 = por %p124, %p125
      %p127 = scmp.ne.s32.totalorder %s115, %s116
      %p128 = scmp.eq.s32.totalorder %s22, 1
      %p129 = por %p127, %p128
      %p131 = scmp.ne.s32.totalorder %s116, %s130
      %p132 = scmp.eq.s32.totalorder %s22, 0
      %p133 = por %p131, %p132
      %s135 = sadd.s32 %s134, 1
      %p138 = scmp.eq.s32.totalorder %s16, 1
      %p139 = scmp.ne.s32.totalorder %s134, %s136
      %p140 = scmp.eq.s32.totalorder %s16, 0
      %p141 = por %p139, %p140
      %p142 = scmp.ne.s32.totalorder %s134, %s136
      %p143 = scmp.eq.s32.totalorder %s21, 1
      %p144 = por %p142, %p143
      %p145 = scmp.ne.s32.totalorder %s136, %s137
      %p146 = scmp.eq.s32.totalorder %s21, 0
      %p147 = por %p145, %p146
      %p148 = scmp.ne.s32.totalorder %s136, %s137
      %p149 = scmp.eq.s32.totalorder %s22, 1
      %p150 = por %p148, %p149
      %p152 = scmp.ne.s32.totalorder %s137, %s151
      %p153 = scmp.eq.s32.totalorder %s22, 0
      %p154 = por %p152, %p153
      %s156 = sadd.s32 %s155, 1
      %p159 = scmp.eq.s32.totalorder %s16, 1
      %p160 = scmp.ne.s32.totalorder %s155, %s157
      %p161 = scmp.eq.s32.totalorder %s16, 0
      %p162 = por %p160, %p161
      %p163 = scmp.ne.s32.totalorder %s155, %s157
      %p164 = scmp.eq.s32.totalorder %s21, 1
      %p165 = por %p163, %p164
      %p166 = scmp.ne.s32.totalorder %s157, %s158
      %p167 = scmp.eq.s32.totalorder %s21, 0
      %p168 = por %p166, %p167
      %p169 = scmp.ne.s32.totalorder %s157, %s158
      %p170 = scmp.eq.s32.totalorder %s22, 1
      %p171 = por %p169, %p170
      %p173 = scmp.ne.s32.totalorder %s158, %s172
      %p174 = scmp.eq.s32.totalorder %s22, 0
      %p175 = por %p173, %p174
      %s176 = ssub.s32 %s16, %s23
      %p177 = scmp.eq.s32.totalorder %s176, 0
      %s179 = sadd.s32 %s178, 1
      %s180 = scalar_select %p177, %s178, %s179
      %p183 = pneg %p177
      %p184 = scmp.eq.s32.totalorder %s16, 1
      %p185 = por %p183, %p184
      %p186 = scmp.ne.s32.totalorder %s178, %s181
      %p187 = scmp.eq.s32.totalorder %s16, 0
      %p188 = por %p186, %p187
      %p189 = scmp.ne.s32.totalorder %s178, %s181
      %p190 = scmp.eq.s32.totalorder %s21, 1
      %p191 = por %p189, %p190
      %p192 = scmp.ne.s32.totalorder %s181, %s182
      %p193 = scmp.eq.s32.totalorder %s21, 0
      %p194 = por %p192, %p193
      %p195 = scmp.ne.s32.totalorder %s181, %s182
      %p196 = scmp.eq.s32.totalorder %s22, 1
      %p197 = por %p195, %p196
      %p199 = scmp.ne.s32.totalorder %s182, %s198
      %p200 = scmp.eq.s32.totalorder %s22, 0
      %p201 = por %p199, %p200
      %p202 = scmp.le.s32.totalorder 1, %s16
      %p203 = scmp.lt.s32.totalorder %s16, 3
      %p204 = pnand %p202, %p203
      %p205 = pneg %p204
      // Predicated region
      $region9: #{net_forward.1} parent=5 // pred_check
        _
      $region10: #{net_forward.1} parent=5 // pred_check_branch
        %207 = sbr.rel (%p204) target = $region12
      $region11: #{net_forward.1} parent=5 // pred_region
        %s208 = ssub.s32 %s16, 1
        // Predicated region
        $region13: #{net_forward.1} parent=11 // pred_check
          %p209 = pneg %p63
        $region14: #{net_forward.1} parent=11 // pred_check_branch
          %211 = sbr.rel (%p209) target = $region16
        $region15: #{net_forward.1} parent=11 // pred_region
          _
        $region16: #{net_forward.1} parent=11 // pred_fallthru
          _
        // Predicated region
        $region17: #{net_forward.1} parent=11 // pred_check
          %p212 = pneg %p84
        $region18: #{net_forward.1} parent=11 // pred_check_branch
          %214 = sbr.rel (%p212) target = $region20
        $region19: #{net_forward.1} parent=11 // pred_region
          _
        $region20: #{net_forward.1} parent=11 // pred_fallthru
          _
        // Predicated region
        $region21: #{net_forward.1} parent=11 // pred_check
          %p215 = pneg %p105
        $region22: #{net_forward.1} parent=11 // pred_check_branch
          %217 = sbr.rel (%p215) target = $region24
        $region23: #{net_forward.1} parent=11 // pred_region
          _
        $region24: #{net_forward.1} parent=11 // pred_fallthru
          _
        // Predicated region
        $region25: #{net_forward.1} parent=11 // pred_check
          %p218 = pneg %p126
        $region26: #{net_forward.1} parent=11 // pred_check_branch
          %220 = sbr.rel (%p218) target = $region28
        $region27: #{net_forward.1} parent=11 // pred_region
          _
        $region28: #{net_forward.1} parent=11 // pred_fallthru
          _
        // Predicated region
        $region29: #{net_forward.1} parent=11 // pred_check
          %p221 = pneg %p147
        $region30: #{net_forward.1} parent=11 // pred_check_branch
          %223 = sbr.rel (%p221) target = $region32
        $region31: #{net_forward.1} parent=11 // pred_region
          _
        $region32: #{net_forward.1} parent=11 // pred_fallthru
          _
        // Predicated region
        $region33: #{net_forward.1} parent=11 // pred_check
          %p224 = pneg %p168
        $region34: #{net_forward.1} parent=11 // pred_check_branch
          %226 = sbr.rel (%p224) target = $region36
        $region35: #{net_forward.1} parent=11 // pred_region
          _
        $region36: #{net_forward.1} parent=11 // pred_fallthru
          _
      $region12: #{net_forward.1} parent=5 // pred_fallthru
        _
      %p227 = scmp.lt.s32.totalorder %s16, 2
      // Predicated region
      $region37: #{net_forward.1} parent=5 // pred_check
        %p228 = pneg %p227
      $region38: #{net_forward.1} parent=5 // pred_check_branch
        %230 = sbr.rel (%p228) target = $region40
      $region39: #{net_forward.1} parent=5 // pred_region
        // Predicated region
        $region41: #{net_forward.1} parent=39 // pred_check
          %p231 = pneg %p36
        $region42: #{net_forward.1} parent=39 // pred_check_branch
          %233 = sbr.rel (%p231) target = $region44
        $region43: #{net_forward.1} parent=39 // pred_region
          %p234 = scmp.lt.s32.totalorder %s16, 1
          %s235 = scalar_select %p234, %s16, 1
          %s236 = smul.addr %s235, 8
          %s237 = smul.addr %s236, 8
          %s238 = scalar_lea.vmem %s0, %s237
        $region44: #{net_forward.1} parent=39 // pred_fallthru
          _
      $region40: #{net_forward.1} parent=5 // pred_fallthru
        _
      %p239 = scmp.le.s32.totalorder 1, %s16
      %p240 = scmp.lt.s32.totalorder %s16, 3
      %p241 = pnand %p239, %p240
      %p242 = pneg %p241
      // Predicated region
      $region45: #{net_forward.1} parent=5 // pred_check
        _
      $region46: #{net_forward.1} parent=5 // pred_check_branch
        %244 = sbr.rel (%p241) target = $region48
      $region47: #{net_forward.1} parent=5 // pred_region
        %s245 = ssub.s32 %s16, 1
        %p246 = scmp.lt.s32.totalorder %s21, 1
        %s247 = scalar_select %p246, %s21, 1
        %s248 = smul.addr %s247, 8
        %s249 = smul.addr %s248, 8
        %s250 = scalar_lea.vmem %s0, %s249
        %p251 = pneg %p42
        %p252 = pneg %p39
        %p253 = pneg %p63
        %p254 = pneg %p60
        %p255 = pneg %p84
        %p256 = pneg %p81
        %p257 = pneg %p105
        %p258 = pneg %p102
        %p259 = pneg %p126
        %p260 = pneg %p123
        %p261 = pneg %p147
        %p262 = pneg %p144
        %p263 = pneg %p168
        %p264 = pneg %p165
        %p265 = pneg %p194
        %p266 = pneg %p191
        %s267 = sand.u32 %s181, 1
        %s268 = scalar_lea.sflag [#allocation3], %s267
        %s269 = sand.u32 %s181, 1
        %s270 = smul.addr %s269, 8
        %s271 = scalar_lea.vmem [#allocation2], %s270
        %p272 = scmp.lt.s32.totalorder %s21, 1
        %s273 = scalar_select %p272, %s21, 1
        %s274 = smul.addr %s273, 8
        %s275 = smul.addr %s274, 8
        %s276 = scalar_lea.vmem %s0, %s275
        %v277 = vld [vmem:[%s276] sm:$0xff]
        %v278 = vld [vmem:[%s276 + $0x8] sm:$0xff]
        %v279 = vld [vmem:[%s276 + $0x10] sm:$0xff]
        %v280 = vld [vmem:[%s276 + $0x18] sm:$0xff]
        %v281 = vld [vmem:[%s276 + $0x20] sm:$0xff]
        %v282 = vld [vmem:[%s276 + $0x28] sm:$0xff]
        %v283 = vld [vmem:[%s276 + $0x30] sm:$0xff]
        %v284 = vld [vmem:[%s276 + $0x38] sm:$0xff]
        %v285 = vmul.f32 %v277, 0.5
        %v286 = vmul.f32 %v278, 0.5
        %v287 = vmul.f32 %v279, 0.5
        %v288 = vmul.f32 %v280, 0.5
        %v289 = vmul.f32 %v281, 0.5
        %v290 = vmul.f32 %v282, 0.5
        %v291 = vmul.f32 %v283, 0.5
        %v292 = vmul.f32 %v284, 0.5
        %v293 = vand.u32 2147483647, %v285
        %vm294 = vcmp.le.f32.partialorder %v293, 0.7853982
        %vm295 = vcmp.lt.s32.totalorder %v285, 0
        %v296 = vand.u32 %v285, 2139095040
        %v297 = vshrl.u32 %v296, 23
        %v298 = vsub.s32 %v297, 127
        %v299 = vand.u32 2147483647, %v285
        %v300 = vand.u32 %v299, 8388607
        %v301 = vor.u32 %v300, 8388608
        %v302 = vsub.s32 0, %v301
        %v303 = vadd.s32 %v298, 1
        %vm304 = vcmp.gt.s32.totalorder %v303, 0
        %v305 = vsel %vm304, %v303, 0
        %v306 = vshrl.u32 %v305, 5
        %v307 = vand.u32 %v305, 31
        %v308 = vsub.s32 32, %v307
        %v309 = vshrl.u32 683565275, %v308
        %v310 = vshll.u32 683565275, %v307
        %v311 = vshrl.u32 2475754826, %v308
        %v312 = vor.u32 %v310, %v311
        %v313 = vshll.u32 2475754826, %v307
        %v314 = vshrl.u32 2131351028, %v308
        %v315 = vor.u32 %v313, %v314
        %v316 = vshll.u32 2131351028, %v307
        %v317 = vshrl.u32 2102212464, %v308
        %v318 = vor.u32 %v316, %v317
        %v319 = vshll.u32 2102212464, %v307
        %v320 = vshrl.u32 920167782, %v308
        %v321 = vor.u32 %v319, %v320
        %v322 = vshll.u32 920167782, %v307
        %v323 = vshrl.u32 1326507024, %v308
        %v324 = vor.u32 %v322, %v323
        %vm325 = vcmp.lt.s32.totalorder %v306, 1
        %vm326 = vcmp.lt.s32.totalorder %v306, 2
        %vm327 = vcmp.lt.s32.totalorder %v306, 3
        %vm328 = vcmp.lt.s32.totalorder %v306, 4
        %v329 = vsel %vm325, %v309, %v312
        %v330 = vsel %vm328, %v318, 2102212464
        %v331 = vsel %vm327, %v315, %v330
        %v332 = vsel %vm326, %v329, %v331
        %v333 = vsel %vm325, %v312, %v315
        %v334 = vsel %vm328, %v321, 920167782
        %v335 = vsel %vm327, %v318, %v334
        %v336 = vsel %vm326, %v333, %v335
        %v337 = vsel %vm325, %v315, %v318
        %v338 = vsel %vm328, %v324, 1326507024
        %v339 = vsel %vm327, %v321, %v338
        %v340 = vsel %vm326, %v337, %v339
        %v341 = vshll.u32 %v301, 8
        %v342 = vmul.u32.u64.compose %v341, %v340
        %v343 = vextract.low.u32 %v342
        %v344 = vextract.high.u32 %v342
        %v345 = vmul.u32.u64.compose %v341, %v336
        %v346 = vextract.low.u32 %v345
        %v347 = vextract.high.u32 %v345
        %v348 = vmul.u32 %v341, %v332
        %v349 = vadd.s32 %v344, %v346
        %vm350 = vc.u32 %v344, %v346
        %v351 = vadd.s32 %v347, 1
        %v352 = vsel %vm350, %v351, %v347
        %v353 = vadd.s32 %v348, %v352
        %v354 = vadd.s32 %v353, 536870912
        %v355 = vshrl.u32 %v354, 30
        %v356 = vshll.u32 %v355, 30
        %v357 = vsub.s32 %v353, %v356
        %vm358 = vcmp.lt.s32.totalorder %v357, 0
        %v359 = vsub.s32 0, %v357
        %v360 = vsel %vm358, %v359, %v357
        %v361 = vclz %v360
        %v362 = vsub.s32 %v361, 2
        %vm363 = vcmp.gt.s32.totalorder 0, %v362
        %v364 = vsel %vm363, 0, %v362
        %v365 = vsub.s32 32, %v364
        %v366 = vshll.u32 %v357, %v364
        %v367 = vshrl.u32 %v349, %v365
        %v368 = vor.u32 %v366, %v367
        %v369 = vsub.s32 4294967266, %v364
        %v370 = vadd.s32 %v369, 127
        %v371 = vshll.u32 %v370, 23
        %v372 = vor.u32 4788187, %v371
        %v373 = vand.u32 2147483647, %v372
        %v375 = vcvt.s32.f32 %v368
        %v376 = vmul.f32 %v375, %v373
        %v377 = vxor.u32 %v376, 2147483648
        %v378 = vsel %vm295, %v377, %v376
        %v379 = vsub.s32 4, %v355
        %v380 = vsel %vm295, %v379, %v355
        %v381 = vsel %vm294, %v285, %v378
        %v382 = vsel %vm294, 0, %v380
        %v383 = vcosq.f32.pop %v381
        %v384 = vsinq.f32.pop %v381
        %vm385 = vweird.f32 %v285
        %v386 = vand.u32 %v382, 3
        %vm387 = vcmp.lt.s32.totalorder %v386, 2
        %vm388 = vcmp.eq.s32.totalorder %v386, 0
        %v389 = vxor.u32 %v384, 2147483648
        %v390 = vsel %vm388, %v383, %v389
        %vm391 = vcmp.eq.s32.totalorder %v386, 2
        %v392 = vxor.u32 %v383, 2147483648
        %v393 = vsel %vm391, %v392, %v384
        %v394 = vsel %vm387, %v390, %v393
        %v395 = vsel %vm385, nan, %v394
        %v396 = vand.u32 2147483647, %v286
        %vm397 = vcmp.le.f32.partialorder %v396, 0.7853982
        %vm398 = vcmp.lt.s32.totalorder %v286, 0
        %v399 = vand.u32 %v286, 2139095040
        %v400 = vshrl.u32 %v399, 23
        %v401 = vsub.s32 %v400, 127
        %v402 = vand.u32 2147483647, %v286
        %v403 = vand.u32 %v402, 8388607
        %v404 = vor.u32 %v403, 8388608
        %v405 = vsub.s32 0, %v404
        %v406 = vadd.s32 %v401, 1
        %vm407 = vcmp.gt.s32.totalorder %v406, 0
        %v408 = vsel %vm407, %v406, 0
        %v409 = vshrl.u32 %v408, 5
        %v410 = vand.u32 %v408, 31
        %v411 = vsub.s32 32, %v410
        %v412 = vshrl.u32 683565275, %v411
        %v413 = vshll.u32 683565275, %v410
        %v414 = vshrl.u32 2475754826, %v411
        %v415 = vor.u32 %v413, %v414
        %v416 = vshll.u32 2475754826, %v410
        %v417 = vshrl.u32 2131351028, %v411
        %v418 = vor.u32 %v416, %v417
        %v419 = vshll.u32 2131351028, %v410
        %v420 = vshrl.u32 2102212464, %v411
        %v421 = vor.u32 %v419, %v420
        %v422 = vshll.u32 2102212464, %v410
        %v423 = vshrl.u32 920167782, %v411
        %v424 = vor.u32 %v422, %v423
        %v425 = vshll.u32 920167782, %v410
        %v426 = vshrl.u32 1326507024, %v411
        %v427 = vor.u32 %v425, %v426
        %vm428 = vcmp.lt.s32.totalorder %v409, 1
        %vm429 = vcmp.lt.s32.totalorder %v409, 2
        %vm430 = vcmp.lt.s32.totalorder %v409, 3
        %vm431 = vcmp.lt.s32.totalorder %v409, 4
        %v432 = vsel %vm428, %v412, %v415
        %v433 = vsel %vm431, %v421, 2102212464
        %v434 = vsel %vm430, %v418, %v433
        %v435 = vsel %vm429, %v432, %v434
        %v436 = vsel %vm428, %v415, %v418
        %v437 = vsel %vm431, %v424, 920167782
        %v438 = vsel %vm430, %v421, %v437
        %v439 = vsel %vm429, %v436, %v438
        %v440 = vsel %vm428, %v418, %v421
        %v441 = vsel %vm431, %v427, 1326507024
        %v442 = vsel %vm430, %v424, %v441
        %v443 = vsel %vm429, %v440, %v442
        %v444 = vshll.u32 %v404, 8
        %v445 = vmul.u32.u64.compose %v444, %v443
        %v446 = vextract.low.u32 %v445
        %v447 = vextract.high.u32 %v445
        %v448 = vmul.u32.u64.compose %v444, %v439
        %v449 = vextract.low.u32 %v448
        %v450 = vextract.high.u32 %v448
        %v451 = vmul.u32 %v444, %v435
        %v452 = vadd.s32 %v447, %v449
        %vm453 = vc.u32 %v447, %v449
        %v454 = vadd.s32 %v450, 1
        %v455 = vsel %vm453, %v454, %v450
        %v456 = vadd.s32 %v451, %v455
        %v457 = vadd.s32 %v456, 536870912
        %v458 = vshrl.u32 %v457, 30
        %v459 = vshll.u32 %v458, 30
        %v460 = vsub.s32 %v456, %v459
        %vm461 = vcmp.lt.s32.totalorder %v460, 0
        %v462 = vsub.s32 0, %v460
        %v463 = vsel %vm461, %v462, %v460
        %v464 = vclz %v463
        %v465 = vsub.s32 %v464, 2
        %vm466 = vcmp.gt.s32.totalorder 0, %v465
        %v467 = vsel %vm466, 0, %v465
        %v468 = vsub.s32 32, %v467
        %v469 = vshll.u32 %v460, %v467
        %v470 = vshrl.u32 %v452, %v468
        %v471 = vor.u32 %v469, %v470
        %v472 = vsub.s32 4294967266, %v467
        %v473 = vadd.s32 %v472, 127
        %v474 = vshll.u32 %v473, 23
        %v475 = vor.u32 4788187, %v474
        %v476 = vand.u32 2147483647, %v475
        %v478 = vcvt.s32.f32 %v471
        %v479 = vmul.f32 %v478, %v476
        %v480 = vxor.u32 %v479, 2147483648
        %v481 = vsel %vm398, %v480, %v479
        %v482 = vsub.s32 4, %v458
        %v483 = vsel %vm398, %v482, %v458
        %v484 = vsel %vm397, %v286, %v481
        %v485 = vsel %vm397, 0, %v483
        %v486 = vcosq.f32.pop %v484
        %v487 = vsinq.f32.pop %v484
        %vm488 = vweird.f32 %v286
        %v489 = vand.u32 %v485, 3
        %vm490 = vcmp.lt.s32.totalorder %v489, 2
        %vm491 = vcmp.eq.s32.totalorder %v489, 0
        %v492 = vxor.u32 %v487, 2147483648
        %v493 = vsel %vm491, %v486, %v492
        %vm494 = vcmp.eq.s32.totalorder %v489, 2
        %v495 = vxor.u32 %v486, 2147483648
        %v496 = vsel %vm494, %v495, %v487
        %v497 = vsel %vm490, %v493, %v496
        %v498 = vsel %vm488, nan, %v497
        %v499 = vand.u32 2147483647, %v287
        %vm500 = vcmp.le.f32.partialorder %v499, 0.7853982
        %vm501 = vcmp.lt.s32.totalorder %v287, 0
        %v502 = vand.u32 %v287, 2139095040
        %v503 = vshrl.u32 %v502, 23
        %v504 = vsub.s32 %v503, 127
        %v505 = vand.u32 2147483647, %v287
        %v506 = vand.u32 %v505, 8388607
        %v507 = vor.u32 %v506, 8388608
        %v508 = vsub.s32 0, %v507
        %v509 = vadd.s32 %v504, 1
        %vm510 = vcmp.gt.s32.totalorder %v509, 0
        %v511 = vsel %vm510, %v509, 0
        %v512 = vshrl.u32 %v511, 5
        %v513 = vand.u32 %v511, 31
        %v514 = vsub.s32 32, %v513
        %v515 = vshrl.u32 683565275, %v514
        %v516 = vshll.u32 683565275, %v513
        %v517 = vshrl.u32 2475754826, %v514
        %v518 = vor.u32 %v516, %v517
        %v519 = vshll.u32 2475754826, %v513
        %v520 = vshrl.u32 2131351028, %v514
        %v521 = vor.u32 %v519, %v520
        %v522 = vshll.u32 2131351028, %v513
        %v523 = vshrl.u32 2102212464, %v514
        %v524 = vor.u32 %v522, %v523
        %v525 = vshll.u32 2102212464, %v513
        %v526 = vshrl.u32 920167782, %v514
        %v527 = vor.u32 %v525, %v526
        %v528 = vshll.u32 920167782, %v513
        %v529 = vshrl.u32 1326507024, %v514
        %v530 = vor.u32 %v528, %v529
        %vm531 = vcmp.lt.s32.totalorder %v512, 1
        %vm532 = vcmp.lt.s32.totalorder %v512, 2
        %vm533 = vcmp.lt.s32.totalorder %v512, 3
        %vm534 = vcmp.lt.s32.totalorder %v512, 4
        %v535 = vsel %vm531, %v515, %v518
        %v536 = vsel %vm534, %v524, 2102212464
        %v537 = vsel %vm533, %v521, %v536
        %v538 = vsel %vm532, %v535, %v537
        %v539 = vsel %vm531, %v518, %v521
        %v540 = vsel %vm534, %v527, 920167782
        %v541 = vsel %vm533, %v524, %v540
        %v542 = vsel %vm532, %v539, %v541
        %v543 = vsel %vm531, %v521, %v524
        %v544 = vsel %vm534, %v530, 1326507024
        %v545 = vsel %vm533, %v527, %v544
        %v546 = vsel %vm532, %v543, %v545
        %v547 = vshll.u32 %v507, 8
        %v548 = vmul.u32.u64.compose %v547, %v546
        %v549 = vextract.low.u32 %v548
        %v550 = vextract.high.u32 %v548
        %v551 = vmul.u32.u64.compose %v547, %v542
        %v552 = vextract.low.u32 %v551
        %v553 = vextract.high.u32 %v551
        %v554 = vmul.u32 %v547, %v538
        %v555 = vadd.s32 %v550, %v552
        %vm556 = vc.u32 %v550, %v552
        %v557 = vadd.s32 %v553, 1
        %v558 = vsel %vm556, %v557, %v553
        %v559 = vadd.s32 %v554, %v558
        %v560 = vadd.s32 %v559, 536870912
        %v561 = vshrl.u32 %v560, 30
        %v562 = vshll.u32 %v561, 30
        %v563 = vsub.s32 %v559, %v562
        %vm564 = vcmp.lt.s32.totalorder %v563, 0
        %v565 = vsub.s32 0, %v563
        %v566 = vsel %vm564, %v565, %v563
        %v567 = vclz %v566
        %v568 = vsub.s32 %v567, 2
        %vm569 = vcmp.gt.s32.totalorder 0, %v568
        %v570 = vsel %vm569, 0, %v568
        %v571 = vsub.s32 32, %v570
        %v572 = vshll.u32 %v563, %v570
        %v573 = vshrl.u32 %v555, %v571
        %v574 = vor.u32 %v572, %v573
        %v575 = vsub.s32 4294967266, %v570
        %v576 = vadd.s32 %v575, 127
        %v577 = vshll.u32 %v576, 23
        %v578 = vor.u32 4788187, %v577
        %v579 = vand.u32 2147483647, %v578
        %v581 = vcvt.s32.f32 %v574
        %v582 = vmul.f32 %v581, %v579
        %v583 = vxor.u32 %v582, 2147483648
        %v584 = vsel %vm501, %v583, %v582
        %v585 = vsub.s32 4, %v561
        %v586 = vsel %vm501, %v585, %v561
        %v587 = vsel %vm500, %v287, %v584
        %v588 = vsel %vm500, 0, %v586
        %v589 = vcosq.f32.pop %v587
        %v590 = vsinq.f32.pop %v587
        %vm591 = vweird.f32 %v287
        %v592 = vand.u32 %v588, 3
        %vm593 = vcmp.lt.s32.totalorder %v592, 2
        %vm594 = vcmp.eq.s32.totalorder %v592, 0
        %v595 = vxor.u32 %v590, 2147483648
        %v596 = vsel %vm594, %v589, %v595
        %vm597 = vcmp.eq.s32.totalorder %v592, 2
        %v598 = vxor.u32 %v589, 2147483648
        %v599 = vsel %vm597, %v598, %v590
        %v600 = vsel %vm593, %v596, %v599
        %v601 = vsel %vm591, nan, %v600
        %v602 = vand.u32 2147483647, %v288
        %vm603 = vcmp.le.f32.partialorder %v602, 0.7853982
        %vm604 = vcmp.lt.s32.totalorder %v288, 0
        %v605 = vand.u32 %v288, 2139095040
        %v606 = vshrl.u32 %v605, 23
        %v607 = vsub.s32 %v606, 127
        %v608 = vand.u32 2147483647, %v288
        %v609 = vand.u32 %v608, 8388607
        %v610 = vor.u32 %v609, 8388608
        %v611 = vsub.s32 0, %v610
        %v612 = vadd.s32 %v607, 1
        %vm613 = vcmp.gt.s32.totalorder %v612, 0
        %v614 = vsel %vm613, %v612, 0
        %v615 = vshrl.u32 %v614, 5
        %v616 = vand.u32 %v614, 31
        %v617 = vsub.s32 32, %v616
        %v618 = vshrl.u32 683565275, %v617
        %v619 = vshll.u32 683565275, %v616
        %v620 = vshrl.u32 2475754826, %v617
        %v621 = vor.u32 %v619, %v620
        %v622 = vshll.u32 2475754826, %v616
        %v623 = vshrl.u32 2131351028, %v617
        %v624 = vor.u32 %v622, %v623
        %v625 = vshll.u32 2131351028, %v616
        %v626 = vshrl.u32 2102212464, %v617
        %v627 = vor.u32 %v625, %v626
        %v628 = vshll.u32 2102212464, %v616
        %v629 = vshrl.u32 920167782, %v617
        %v630 = vor.u32 %v628, %v629
        %v631 = vshll.u32 920167782, %v616
        %v632 = vshrl.u32 1326507024, %v617
        %v633 = vor.u32 %v631, %v632
        %vm634 = vcmp.lt.s32.totalorder %v615, 1
        %vm635 = vcmp.lt.s32.totalorder %v615, 2
        %vm636 = vcmp.lt.s32.totalorder %v615, 3
        %vm637 = vcmp.lt.s32.totalorder %v615, 4
        %v638 = vsel %vm634, %v618, %v621
        %v639 = vsel %vm637, %v627, 2102212464
        %v640 = vsel %vm636, %v624, %v639
        %v641 = vsel %vm635, %v638, %v640
        %v642 = vsel %vm634, %v621, %v624
        %v643 = vsel %vm637, %v630, 920167782
        %v644 = vsel %vm636, %v627, %v643
        %v645 = vsel %vm635, %v642, %v644
        %v646 = vsel %vm634, %v624, %v627
        %v647 = vsel %vm637, %v633, 1326507024
        %v648 = vsel %vm636, %v630, %v647
        %v649 = vsel %vm635, %v646, %v648
        %v650 = vshll.u32 %v610, 8
        %v651 = vmul.u32.u64.compose %v650, %v649
        %v652 = vextract.low.u32 %v651
        %v653 = vextract.high.u32 %v651
        %v654 = vmul.u32.u64.compose %v650, %v645
        %v655 = vextract.low.u32 %v654
        %v656 = vextract.high.u32 %v654
        %v657 = vmul.u32 %v650, %v641
        %v658 = vadd.s32 %v653, %v655
        %vm659 = vc.u32 %v653, %v655
        %v660 = vadd.s32 %v656, 1
        %v661 = vsel %vm659, %v660, %v656
        %v662 = vadd.s32 %v657, %v661
        %v663 = vadd.s32 %v662, 536870912
        %v664 = vshrl.u32 %v663, 30
        %v665 = vshll.u32 %v664, 30
        %v666 = vsub.s32 %v662, %v665
        %vm667 = vcmp.lt.s32.totalorder %v666, 0
        %v668 = vsub.s32 0, %v666
        %v669 = vsel %vm667, %v668, %v666
        %v670 = vclz %v669
        %v671 = vsub.s32 %v670, 2
        %vm672 = vcmp.gt.s32.totalorder 0, %v671
        %v673 = vsel %vm672, 0, %v671
        %v674 = vsub.s32 32, %v673
        %v675 = vshll.u32 %v666, %v673
        %v676 = vshrl.u32 %v658, %v674
        %v677 = vor.u32 %v675, %v676
        %v678 = vsub.s32 4294967266, %v673
        %v679 = vadd.s32 %v678, 127
        %v680 = vshll.u32 %v679, 23
        %v681 = vor.u32 4788187, %v680
        %v682 = vand.u32 2147483647, %v681
        %v684 = vcvt.s32.f32 %v677
        %v685 = vmul.f32 %v684, %v682
        %v686 = vxor.u32 %v685, 2147483648
        %v687 = vsel %vm604, %v686, %v685
        %v688 = vsub.s32 4, %v664
        %v689 = vsel %vm604, %v688, %v664
        %v690 = vsel %vm603, %v288, %v687
        %v691 = vsel %vm603, 0, %v689
        %v692 = vcosq.f32.pop %v690
        %v693 = vsinq.f32.pop %v690
        %vm694 = vweird.f32 %v288
        %v695 = vand.u32 %v691, 3
        %vm696 = vcmp.lt.s32.totalorder %v695, 2
        %vm697 = vcmp.eq.s32.totalorder %v695, 0
        %v698 = vxor.u32 %v693, 2147483648
        %v699 = vsel %vm697, %v692, %v698
        %vm700 = vcmp.eq.s32.totalorder %v695, 2
        %v701 = vxor.u32 %v692, 2147483648
        %v702 = vsel %vm700, %v701, %v693
        %v703 = vsel %vm696, %v699, %v702
        %v704 = vsel %vm694, nan, %v703
        %v705 = vand.u32 2147483647, %v289
        %vm706 = vcmp.le.f32.partialorder %v705, 0.7853982
        %vm707 = vcmp.lt.s32.totalorder %v289, 0
        %v708 = vand.u32 %v289, 2139095040
        %v709 = vshrl.u32 %v708, 23
        %v710 = vsub.s32 %v709, 127
        %v711 = vand.u32 2147483647, %v289
        %v712 = vand.u32 %v711, 8388607
        %v713 = vor.u32 %v712, 8388608
        %v714 = vsub.s32 0, %v713
        %v715 = vadd.s32 %v710, 1
        %vm716 = vcmp.gt.s32.totalorder %v715, 0
        %v717 = vsel %vm716, %v715, 0
        %v718 = vshrl.u32 %v717, 5
        %v719 = vand.u32 %v717, 31
        %v720 = vsub.s32 32, %v719
        %v721 = vshrl.u32 683565275, %v720
        %v722 = vshll.u32 683565275, %v719
        %v723 = vshrl.u32 2475754826, %v720
        %v724 = vor.u32 %v722, %v723
        %v725 = vshll.u32 2475754826, %v719
        %v726 = vshrl.u32 2131351028, %v720
        %v727 = vor.u32 %v725, %v726
        %v728 = vshll.u32 2131351028, %v719
        %v729 = vshrl.u32 2102212464, %v720
        %v730 = vor.u32 %v728, %v729
        %v731 = vshll.u32 2102212464, %v719
        %v732 = vshrl.u32 920167782, %v720
        %v733 = vor.u32 %v731, %v732
        %v734 = vshll.u32 920167782, %v719
        %v735 = vshrl.u32 1326507024, %v720
        %v736 = vor.u32 %v734, %v735
        %vm737 = vcmp.lt.s32.totalorder %v718, 1
        %vm738 = vcmp.lt.s32.totalorder %v718, 2
        %vm739 = vcmp.lt.s32.totalorder %v718, 3
        %vm740 = vcmp.lt.s32.totalorder %v718, 4
        %v741 = vsel %vm737, %v721, %v724
        %v742 = vsel %vm740, %v730, 2102212464
        %v743 = vsel %vm739, %v727, %v742
        %v744 = vsel %vm738, %v741, %v743
        %v745 = vsel %vm737, %v724, %v727
        %v746 = vsel %vm740, %v733, 920167782
        %v747 = vsel %vm739, %v730, %v746
        %v748 = vsel %vm738, %v745, %v747
        %v749 = vsel %vm737, %v727, %v730
        %v750 = vsel %vm740, %v736, 1326507024
        %v751 = vsel %vm739, %v733, %v750
        %v752 = vsel %vm738, %v749, %v751
        %v753 = vshll.u32 %v713, 8
        %v754 = vmul.u32.u64.compose %v753, %v752
        %v755 = vextract.low.u32 %v754
        %v756 = vextract.high.u32 %v754
        %v757 = vmul.u32.u64.compose %v753, %v748
        %v758 = vextract.low.u32 %v757
        %v759 = vextract.high.u32 %v757
        %v760 = vmul.u32 %v753, %v744
        %v761 = vadd.s32 %v756, %v758
        %vm762 = vc.u32 %v756, %v758
        %v763 = vadd.s32 %v759, 1
        %v764 = vsel %vm762, %v763, %v759
        %v765 = vadd.s32 %v760, %v764
        %v766 = vadd.s32 %v765, 536870912
        %v767 = vshrl.u32 %v766, 30
        %v768 = vshll.u32 %v767, 30
        %v769 = vsub.s32 %v765, %v768
        %vm770 = vcmp.lt.s32.totalorder %v769, 0
        %v771 = vsub.s32 0, %v769
        %v772 = vsel %vm770, %v771, %v769
        %v773 = vclz %v772
        %v774 = vsub.s32 %v773, 2
        %vm775 = vcmp.gt.s32.totalorder 0, %v774
        %v776 = vsel %vm775, 0, %v774
        %v777 = vsub.s32 32, %v776
        %v778 = vshll.u32 %v769, %v776
        %v779 = vshrl.u32 %v761, %v777
        %v780 = vor.u32 %v778, %v779
        %v781 = vsub.s32 4294967266, %v776
        %v782 = vadd.s32 %v781, 127
        %v783 = vshll.u32 %v782, 23
        %v784 = vor.u32 4788187, %v783
        %v785 = vand.u32 2147483647, %v784
        %v787 = vcvt.s32.f32 %v780
        %v788 = vmul.f32 %v787, %v785
        %v789 = vxor.u32 %v788, 2147483648
        %v790 = vsel %vm707, %v789, %v788
        %v791 = vsub.s32 4, %v767
        %v792 = vsel %vm707, %v791, %v767
        %v793 = vsel %vm706, %v289, %v790
        %v794 = vsel %vm706, 0, %v792
        %v795 = vcosq.f32.pop %v793
        %v796 = vsinq.f32.pop %v793
        %vm797 = vweird.f32 %v289
        %v798 = vand.u32 %v794, 3
        %vm799 = vcmp.lt.s32.totalorder %v798, 2
        %vm800 = vcmp.eq.s32.totalorder %v798, 0
        %v801 = vxor.u32 %v796, 2147483648
        %v802 = vsel %vm800, %v795, %v801
        %vm803 = vcmp.eq.s32.totalorder %v798, 2
        %v804 = vxor.u32 %v795, 2147483648
        %v805 = vsel %vm803, %v804, %v796
        %v806 = vsel %vm799, %v802, %v805
        %v807 = vsel %vm797, nan, %v806
        %v808 = vand.u32 2147483647, %v290
        %vm809 = vcmp.le.f32.partialorder %v808, 0.7853982
        %vm810 = vcmp.lt.s32.totalorder %v290, 0
        %v811 = vand.u32 %v290, 2139095040
        %v812 = vshrl.u32 %v811, 23
        %v813 = vsub.s32 %v812, 127
        %v814 = vand.u32 2147483647, %v290
        %v815 = vand.u32 %v814, 8388607
        %v816 = vor.u32 %v815, 8388608
        %v817 = vsub.s32 0, %v816
        %v818 = vadd.s32 %v813, 1
        %vm819 = vcmp.gt.s32.totalorder %v818, 0
        %v820 = vsel %vm819, %v818, 0
        %v821 = vshrl.u32 %v820, 5
        %v822 = vand.u32 %v820, 31
        %v823 = vsub.s32 32, %v822
        %v824 = vshrl.u32 683565275, %v823
        %v825 = vshll.u32 683565275, %v822
        %v826 = vshrl.u32 2475754826, %v823
        %v827 = vor.u32 %v825, %v826
        %v828 = vshll.u32 2475754826, %v822
        %v829 = vshrl.u32 2131351028, %v823
        %v830 = vor.u32 %v828, %v829
        %v831 = vshll.u32 2131351028, %v822
        %v832 = vshrl.u32 2102212464, %v823
        %v833 = vor.u32 %v831, %v832
        %v834 = vshll.u32 2102212464, %v822
        %v835 = vshrl.u32 920167782, %v823
        %v836 = vor.u32 %v834, %v835
        %v837 = vshll.u32 920167782, %v822
        %v838 = vshrl.u32 1326507024, %v823
        %v839 = vor.u32 %v837, %v838
        %vm840 = vcmp.lt.s32.totalorder %v821, 1
        %vm841 = vcmp.lt.s32.totalorder %v821, 2
        %vm842 = vcmp.lt.s32.totalorder %v821, 3
        %vm843 = vcmp.lt.s32.totalorder %v821, 4
        %v844 = vsel %vm840, %v824, %v827
        %v845 = vsel %vm843, %v833, 2102212464
        %v846 = vsel %vm842, %v830, %v845
        %v847 = vsel %vm841, %v844, %v846
        %v848 = vsel %vm840, %v827, %v830
        %v849 = vsel %vm843, %v836, 920167782
        %v850 = vsel %vm842, %v833, %v849
        %v851 = vsel %vm841, %v848, %v850
        %v852 = vsel %vm840, %v830, %v833
        %v853 = vsel %vm843, %v839, 1326507024
        %v854 = vsel %vm842, %v836, %v853
        %v855 = vsel %vm841, %v852, %v854
        %v856 = vshll.u32 %v816, 8
        %v857 = vmul.u32.u64.compose %v856, %v855
        %v858 = vextract.low.u32 %v857
        %v859 = vextract.high.u32 %v857
        %v860 = vmul.u32.u64.compose %v856, %v851
        %v861 = vextract.low.u32 %v860
        %v862 = vextract.high.u32 %v860
        %v863 = vmul.u32 %v856, %v847
        %v864 = vadd.s32 %v859, %v861
        %vm865 = vc.u32 %v859, %v861
        %v866 = vadd.s32 %v862, 1
        %v867 = vsel %vm865, %v866, %v862
        %v868 = vadd.s32 %v863, %v867
        %v869 = vadd.s32 %v868, 536870912
        %v870 = vshrl.u32 %v869, 30
        %v871 = vshll.u32 %v870, 30
        %v872 = vsub.s32 %v868, %v871
        %vm873 = vcmp.lt.s32.totalorder %v872, 0
        %v874 = vsub.s32 0, %v872
        %v875 = vsel %vm873, %v874, %v872
        %v876 = vclz %v875
        %v877 = vsub.s32 %v876, 2
        %vm878 = vcmp.gt.s32.totalorder 0, %v877
        %v879 = vsel %vm878, 0, %v877
        %v880 = vsub.s32 32, %v879
        %v881 = vshll.u32 %v872, %v879
        %v882 = vshrl.u32 %v864, %v880
        %v883 = vor.u32 %v881, %v882
        %v884 = vsub.s32 4294967266, %v879
        %v885 = vadd.s32 %v884, 127
        %v886 = vshll.u32 %v885, 23
        %v887 = vor.u32 4788187, %v886
        %v888 = vand.u32 2147483647, %v887
        %v890 = vcvt.s32.f32 %v883
        %v891 = vmul.f32 %v890, %v888
        %v892 = vxor.u32 %v891, 2147483648
        %v893 = vsel %vm810, %v892, %v891
        %v894 = vsub.s32 4, %v870
        %v895 = vsel %vm810, %v894, %v870
        %v896 = vsel %vm809, %v290, %v893
        %v897 = vsel %vm809, 0, %v895
        %v898 = vcosq.f32.pop %v896
        %v899 = vsinq.f32.pop %v896
        %vm900 = vweird.f32 %v290
        %v901 = vand.u32 %v897, 3
        %vm902 = vcmp.lt.s32.totalorder %v901, 2
        %vm903 = vcmp.eq.s32.totalorder %v901, 0
        %v904 = vxor.u32 %v899, 2147483648
        %v905 = vsel %vm903, %v898, %v904
        %vm906 = vcmp.eq.s32.totalorder %v901, 2
        %v907 = vxor.u32 %v898, 2147483648
        %v908 = vsel %vm906, %v907, %v899
        %v909 = vsel %vm902, %v905, %v908
        %v910 = vsel %vm900, nan, %v909
        %v911 = vand.u32 2147483647, %v291
        %vm912 = vcmp.le.f32.partialorder %v911, 0.7853982
        %vm913 = vcmp.lt.s32.totalorder %v291, 0
        %v914 = vand.u32 %v291, 2139095040
        %v915 = vshrl.u32 %v914, 23
        %v916 = vsub.s32 %v915, 127
        %v917 = vand.u32 2147483647, %v291
        %v918 = vand.u32 %v917, 8388607
        %v919 = vor.u32 %v918, 8388608
        %v920 = vsub.s32 0, %v919
        %v921 = vadd.s32 %v916, 1
        %vm922 = vcmp.gt.s32.totalorder %v921, 0
        %v923 = vsel %vm922, %v921, 0
        %v924 = vshrl.u32 %v923, 5
        %v925 = vand.u32 %v923, 31
        %v926 = vsub.s32 32, %v925
        %v927 = vshrl.u32 683565275, %v926
        %v928 = vshll.u32 683565275, %v925
        %v929 = vshrl.u32 2475754826, %v926
        %v930 = vor.u32 %v928, %v929
        %v931 = vshll.u32 2475754826, %v925
        %v932 = vshrl.u32 2131351028, %v926
        %v933 = vor.u32 %v931, %v932
        %v934 = vshll.u32 2131351028, %v925
        %v935 = vshrl.u32 2102212464, %v926
        %v936 = vor.u32 %v934, %v935
        %v937 = vshll.u32 2102212464, %v925
        %v938 = vshrl.u32 920167782, %v926
        %v939 = vor.u32 %v937, %v938
        %v940 = vshll.u32 920167782, %v925
        %v941 = vshrl.u32 1326507024, %v926
        %v942 = vor.u32 %v940, %v941
        %vm943 = vcmp.lt.s32.totalorder %v924, 1
        %vm944 = vcmp.lt.s32.totalorder %v924, 2
        %vm945 = vcmp.lt.s32.totalorder %v924, 3
        %vm946 = vcmp.lt.s32.totalorder %v924, 4
        %v947 = vsel %vm943, %v927, %v930
        %v948 = vsel %vm946, %v936, 2102212464
        %v949 = vsel %vm945, %v933, %v948
        %v950 = vsel %vm944, %v947, %v949
        %v951 = vsel %vm943, %v930, %v933
        %v952 = vsel %vm946, %v939, 920167782
        %v953 = vsel %vm945, %v936, %v952
        %v954 = vsel %vm944, %v951, %v953
        %v955 = vsel %vm943, %v933, %v936
        %v956 = vsel %vm946, %v942, 1326507024
        %v957 = vsel %vm945, %v939, %v956
        %v958 = vsel %vm944, %v955, %v957
        %v959 = vshll.u32 %v919, 8
        %v960 = vmul.u32.u64.compose %v959, %v958
        %v961 = vextract.low.u32 %v960
        %v962 = vextract.high.u32 %v960
        %v963 = vmul.u32.u64.compose %v959, %v954
        %v964 = vextract.low.u32 %v963
        %v965 = vextract.high.u32 %v963
        %v966 = vmul.u32 %v959, %v950
        %v967 = vadd.s32 %v962, %v964
        %vm968 = vc.u32 %v962, %v964
        %v969 = vadd.s32 %v965, 1
        %v970 = vsel %vm968, %v969, %v965
        %v971 = vadd.s32 %v966, %v970
        %v972 = vadd.s32 %v971, 536870912
        %v973 = vshrl.u32 %v972, 30
        %v974 = vshll.u32 %v973, 30
        %v975 = vsub.s32 %v971, %v974
        %vm976 = vcmp.lt.s32.totalorder %v975, 0
        %v977 = vsub.s32 0, %v975
        %v978 = vsel %vm976, %v977, %v975
        %v979 = vclz %v978
        %v980 = vsub.s32 %v979, 2
        %vm981 = vcmp.gt.s32.totalorder 0, %v980
        %v982 = vsel %vm981, 0, %v980
        %v983 = vsub.s32 32, %v982
        %v984 = vshll.u32 %v975, %v982
        %v985 = vshrl.u32 %v967, %v983
        %v986 = vor.u32 %v984, %v985
        %v987 = vsub.s32 4294967266, %v982
        %v988 = vadd.s32 %v987, 127
        %v989 = vshll.u32 %v988, 23
        %v990 = vor.u32 4788187, %v989
        %v991 = vand.u32 2147483647, %v990
        %v993 = vcvt.s32.f32 %v986
        %v994 = vmul.f32 %v993, %v991
        %v995 = vxor.u32 %v994, 2147483648
        %v996 = vsel %vm913, %v995, %v994
        %v997 = vsub.s32 4, %v973
        %v998 = vsel %vm913, %v997, %v973
        %v999 = vsel %vm912, %v291, %v996
        %v1000 = vsel %vm912, 0, %v998
        %v1001 = vcosq.f32.pop %v999
        %v1002 = vsinq.f32.pop %v999
        %vm1003 = vweird.f32 %v291
        %v1004 = vand.u32 %v1000, 3
        %vm1005 = vcmp.lt.s32.totalorder %v1004, 2
        %vm1006 = vcmp.eq.s32.totalorder %v1004, 0
        %v1007 = vxor.u32 %v1002, 2147483648
        %v1008 = vsel %vm1006, %v1001, %v1007
        %vm1009 = vcmp.eq.s32.totalorder %v1004, 2
        %v1010 = vxor.u32 %v1001, 2147483648
        %v1011 = vsel %vm1009, %v1010, %v1002
        %v1012 = vsel %vm1005, %v1008, %v1011
        %v1013 = vsel %vm1003, nan, %v1012
        %v1014 = vand.u32 2147483647, %v292
        %vm1015 = vcmp.le.f32.partialorder %v1014, 0.7853982
        %vm1016 = vcmp.lt.s32.totalorder %v292, 0
        %v1017 = vand.u32 %v292, 2139095040
        %v1018 = vshrl.u32 %v1017, 23
        %v1019 = vsub.s32 %v1018, 127
        %v1020 = vand.u32 2147483647, %v292
        %v1021 = vand.u32 %v1020, 8388607
        %v1022 = vor.u32 %v1021, 8388608
        %v1023 = vsub.s32 0, %v1022
        %v1024 = vadd.s32 %v1019, 1
        %vm1025 = vcmp.gt.s32.totalorder %v1024, 0
        %v1026 = vsel %vm1025, %v1024, 0
        %v1027 = vshrl.u32 %v1026, 5
        %v1028 = vand.u32 %v1026, 31
        %v1029 = vsub.s32 32, %v1028
        %v1030 = vshrl.u32 683565275, %v1029
        %v1031 = vshll.u32 683565275, %v1028
        %v1032 = vshrl.u32 2475754826, %v1029
        %v1033 = vor.u32 %v1031, %v1032
        %v1034 = vshll.u32 2475754826, %v1028
        %v1035 = vshrl.u32 2131351028, %v1029
        %v1036 = vor.u32 %v1034, %v1035
        %v1037 = vshll.u32 2131351028, %v1028
        %v1038 = vshrl.u32 2102212464, %v1029
        %v1039 = vor.u32 %v1037, %v1038
        %v1040 = vshll.u32 2102212464, %v1028
        %v1041 = vshrl.u32 920167782, %v1029
        %v1042 = vor.u32 %v1040, %v1041
        %v1043 = vshll.u32 920167782, %v1028
        %v1044 = vshrl.u32 1326507024, %v1029
        %v1045 = vor.u32 %v1043, %v1044
        %vm1046 = vcmp.lt.s32.totalorder %v1027, 1
        %vm1047 = vcmp.lt.s32.totalorder %v1027, 2
        %vm1048 = vcmp.lt.s32.totalorder %v1027, 3
        %vm1049 = vcmp.lt.s32.totalorder %v1027, 4
        %v1050 = vsel %vm1046, %v1030, %v1033
        %v1051 = vsel %vm1049, %v1039, 2102212464
        %v1052 = vsel %vm1048, %v1036, %v1051
        %v1053 = vsel %vm1047, %v1050, %v1052
        %v1054 = vsel %vm1046, %v1033, %v1036
        %v1055 = vsel %vm1049, %v1042, 920167782
        %v1056 = vsel %vm1048, %v1039, %v1055
        %v1057 = vsel %vm1047, %v1054, %v1056
        %v1058 = vsel %vm1046, %v1036, %v1039
        %v1059 = vsel %vm1049, %v1045, 1326507024
        %v1060 = vsel %vm1048, %v1042, %v1059
        %v1061 = vsel %vm1047, %v1058, %v1060
        %v1062 = vshll.u32 %v1022, 8
        %v1063 = vmul.u32.u64.compose %v1062, %v1061
        %v1064 = vextract.low.u32 %v1063
        %v1065 = vextract.high.u32 %v1063
        %v1066 = vmul.u32.u64.compose %v1062, %v1057
        %v1067 = vextract.low.u32 %v1066
        %v1068 = vextract.high.u32 %v1066
        %v1069 = vmul.u32 %v1062, %v1053
        %v1070 = vadd.s32 %v1065, %v1067
        %vm1071 = vc.u32 %v1065, %v1067
        %v1072 = vadd.s32 %v1068, 1
        %v1073 = vsel %vm1071, %v1072, %v1068
        %v1074 = vadd.s32 %v1069, %v1073
        %v1075 = vadd.s32 %v1074, 536870912
        %v1076 = vshrl.u32 %v1075, 30
        %v1077 = vshll.u32 %v1076, 30
        %v1078 = vsub.s32 %v1074, %v1077
        %vm1079 = vcmp.lt.s32.totalorder %v1078, 0
        %v1080 = vsub.s32 0, %v1078
        %v1081 = vsel %vm1079, %v1080, %v1078
        %v1082 = vclz %v1081
        %v1083 = vsub.s32 %v1082, 2
        %vm1084 = vcmp.gt.s32.totalorder 0, %v1083
        %v1085 = vsel %vm1084, 0, %v1083
        %v1086 = vsub.s32 32, %v1085
        %v1087 = vshll.u32 %v1078, %v1085
        %v1088 = vshrl.u32 %v1070, %v1086
        %v1089 = vor.u32 %v1087, %v1088
        %v1090 = vsub.s32 4294967266, %v1085
        %v1091 = vadd.s32 %v1090, 127
        %v1092 = vshll.u32 %v1091, 23
        %v1093 = vor.u32 4788187, %v1092
        %v1094 = vand.u32 2147483647, %v1093
        %v1096 = vcvt.s32.f32 %v1089
        %v1097 = vmul.f32 %v1096, %v1094
        %v1098 = vxor.u32 %v1097, 2147483648
        %v1099 = vsel %vm1016, %v1098, %v1097
        %v1100 = vsub.s32 4, %v1076
        %v1101 = vsel %vm1016, %v1100, %v1076
        %v1102 = vsel %vm1015, %v292, %v1099
        %v1103 = vsel %vm1015, 0, %v1101
        %v1104 = vcosq.f32.pop %v1102
        %v1105 = vsinq.f32.pop %v1102
        %vm1106 = vweird.f32 %v292
        %v1107 = vand.u32 %v1103, 3
        %vm1108 = vcmp.lt.s32.totalorder %v1107, 2
        %vm1109 = vcmp.eq.s32.totalorder %v1107, 0
        %v1110 = vxor.u32 %v1105, 2147483648
        %v1111 = vsel %vm1109, %v1104, %v1110
        %vm1112 = vcmp.eq.s32.totalorder %v1107, 2
        %v1113 = vxor.u32 %v1104, 2147483648
        %v1114 = vsel %vm1112, %v1113, %v1105
        %v1115 = vsel %vm1108, %v1111, %v1114
        %v1116 = vsel %vm1106, nan, %v1115
        %v1117 = vand.u32 2147483647, %v285
        %vm1118 = vcmp.le.f32.partialorder %v1117, 0.7853982
        %vm1119 = vcmp.lt.s32.totalorder %v285, 0
        %v1120 = vand.u32 %v285, 2139095040
        %v1121 = vshrl.u32 %v1120, 23
        %v1122 = vsub.s32 %v1121, 127
        %v1123 = vand.u32 2147483647, %v285
        %v1124 = vand.u32 %v1123, 8388607
        %v1125 = vor.u32 %v1124, 8388608
        %v1126 = vsub.s32 0, %v1125
        %v1127 = vadd.s32 %v1122, 1
        %vm1128 = vcmp.gt.s32.totalorder %v1127, 0
        %v1129 = vsel %vm1128, %v1127, 0
        %v1130 = vshrl.u32 %v1129, 5
        %v1131 = vand.u32 %v1129, 31
        %v1132 = vsub.s32 32, %v1131
        %v1133 = vshrl.u32 683565275, %v1132
        %v1134 = vshll.u32 683565275, %v1131
        %v1135 = vshrl.u32 2475754826, %v1132
        %v1136 = vor.u32 %v1134, %v1135
        %v1137 = vshll.u32 2475754826, %v1131
        %v1138 = vshrl.u32 2131351028, %v1132
        %v1139 = vor.u32 %v1137, %v1138
        %v1140 = vshll.u32 2131351028, %v1131
        %v1141 = vshrl.u32 2102212464, %v1132
        %v1142 = vor.u32 %v1140, %v1141
        %v1143 = vshll.u32 2102212464, %v1131
        %v1144 = vshrl.u32 920167782, %v1132
        %v1145 = vor.u32 %v1143, %v1144
        %v1146 = vshll.u32 920167782, %v1131
        %v1147 = vshrl.u32 1326507024, %v1132
        %v1148 = vor.u32 %v1146, %v1147
        %vm1149 = vcmp.lt.s32.totalorder %v1130, 1
        %vm1150 = vcmp.lt.s32.totalorder %v1130, 2
        %vm1151 = vcmp.lt.s32.totalorder %v1130, 3
        %vm1152 = vcmp.lt.s32.totalorder %v1130, 4
        %v1153 = vsel %vm1149, %v1133, %v1136
        %v1154 = vsel %vm1152, %v1142, 2102212464
        %v1155 = vsel %vm1151, %v1139, %v1154
        %v1156 = vsel %vm1150, %v1153, %v1155
        %v1157 = vsel %vm1149, %v1136, %v1139
        %v1158 = vsel %vm1152, %v1145, 920167782
        %v1159 = vsel %vm1151, %v1142, %v1158
        %v1160 = vsel %vm1150, %v1157, %v1159
        %v1161 = vsel %vm1149, %v1139, %v1142
        %v1162 = vsel %vm1152, %v1148, 1326507024
        %v1163 = vsel %vm1151, %v1145, %v1162
        %v1164 = vsel %vm1150, %v1161, %v1163
        %v1165 = vshll.u32 %v1125, 8
        %v1166 = vmul.u32.u64.compose %v1165, %v1164
        %v1167 = vextract.low.u32 %v1166
        %v1168 = vextract.high.u32 %v1166
        %v1169 = vmul.u32.u64.compose %v1165, %v1160
        %v1170 = vextract.low.u32 %v1169
        %v1171 = vextract.high.u32 %v1169
        %v1172 = vmul.u32 %v1165, %v1156
        %v1173 = vadd.s32 %v1168, %v1170
        %vm1174 = vc.u32 %v1168, %v1170
        %v1175 = vadd.s32 %v1171, 1
        %v1176 = vsel %vm1174, %v1175, %v1171
        %v1177 = vadd.s32 %v1172, %v1176
        %v1178 = vadd.s32 %v1177, 536870912
        %v1179 = vshrl.u32 %v1178, 30
        %v1180 = vshll.u32 %v1179, 30
        %v1181 = vsub.s32 %v1177, %v1180
        %vm1182 = vcmp.lt.s32.totalorder %v1181, 0
        %v1183 = vsub.s32 0, %v1181
        %v1184 = vsel %vm1182, %v1183, %v1181
        %v1185 = vclz %v1184
        %v1186 = vsub.s32 %v1185, 2
        %vm1187 = vcmp.gt.s32.totalorder 0, %v1186
        %v1188 = vsel %vm1187, 0, %v1186
        %v1189 = vsub.s32 32, %v1188
        %v1190 = vshll.u32 %v1181, %v1188
        %v1191 = vshrl.u32 %v1173, %v1189
        %v1192 = vor.u32 %v1190, %v1191
        %v1193 = vsub.s32 4294967266, %v1188
        %v1194 = vadd.s32 %v1193, 127
        %v1195 = vshll.u32 %v1194, 23
        %v1196 = vor.u32 4788187, %v1195
        %v1197 = vand.u32 2147483647, %v1196
        %v1199 = vcvt.s32.f32 %v1192
        %v1200 = vmul.f32 %v1199, %v1197
        %v1201 = vxor.u32 %v1200, 2147483648
        %v1202 = vsel %vm1119, %v1201, %v1200
        %v1203 = vsub.s32 4, %v1179
        %v1204 = vsel %vm1119, %v1203, %v1179
        %v1205 = vsel %vm1118, %v285, %v1202
        %v1206 = vsel %vm1118, 0, %v1204
        %v1207 = vcosq.f32.pop %v1205
        %v1208 = vsinq.f32.pop %v1205
        %vm1209 = vweird.f32 %v285
        %v1210 = vadd.s32 %v1206, 3
        %v1211 = vand.u32 %v1210, 3
        %vm1212 = vcmp.lt.s32.totalorder %v1211, 2
        %vm1213 = vcmp.eq.s32.totalorder %v1211, 0
        %v1214 = vxor.u32 %v1208, 2147483648
        %v1215 = vsel %vm1213, %v1207, %v1214
        %vm1216 = vcmp.eq.s32.totalorder %v1211, 2
        %v1217 = vxor.u32 %v1207, 2147483648
        %v1218 = vsel %vm1216, %v1217, %v1208
        %v1219 = vsel %vm1212, %v1215, %v1218
        %v1220 = vsel %vm1209, nan, %v1219
        %v1221 = vand.u32 2147483647, %v286
        %vm1222 = vcmp.le.f32.partialorder %v1221, 0.7853982
        %vm1223 = vcmp.lt.s32.totalorder %v286, 0
        %v1224 = vand.u32 %v286, 2139095040
        %v1225 = vshrl.u32 %v1224, 23
        %v1226 = vsub.s32 %v1225, 127
        %v1227 = vand.u32 2147483647, %v286
        %v1228 = vand.u32 %v1227, 8388607
        %v1229 = vor.u32 %v1228, 8388608
        %v1230 = vsub.s32 0, %v1229
        %v1231 = vadd.s32 %v1226, 1
        %vm1232 = vcmp.gt.s32.totalorder %v1231, 0
        %v1233 = vsel %vm1232, %v1231, 0
        %v1234 = vshrl.u32 %v1233, 5
        %v1235 = vand.u32 %v1233, 31
        %v1236 = vsub.s32 32, %v1235
        %v1237 = vshrl.u32 683565275, %v1236
        %v1238 = vshll.u32 683565275, %v1235
        %v1239 = vshrl.u32 2475754826, %v1236
        %v1240 = vor.u32 %v1238, %v1239
        %v1241 = vshll.u32 2475754826, %v1235
        %v1242 = vshrl.u32 2131351028, %v1236
        %v1243 = vor.u32 %v1241, %v1242
        %v1244 = vshll.u32 2131351028, %v1235
        %v1245 = vshrl.u32 2102212464, %v1236
        %v1246 = vor.u32 %v1244, %v1245
        %v1247 = vshll.u32 2102212464, %v1235
        %v1248 = vshrl.u32 920167782, %v1236
        %v1249 = vor.u32 %v1247, %v1248
        %v1250 = vshll.u32 920167782, %v1235
        %v1251 = vshrl.u32 1326507024, %v1236
        %v1252 = vor.u32 %v1250, %v1251
        %vm1253 = vcmp.lt.s32.totalorder %v1234, 1
        %vm1254 = vcmp.lt.s32.totalorder %v1234, 2
        %vm1255 = vcmp.lt.s32.totalorder %v1234, 3
        %vm1256 = vcmp.lt.s32.totalorder %v1234, 4
        %v1257 = vsel %vm1253, %v1237, %v1240
        %v1258 = vsel %vm1256, %v1246, 2102212464
        %v1259 = vsel %vm1255, %v1243, %v1258
        %v1260 = vsel %vm1254, %v1257, %v1259
        %v1261 = vsel %vm1253, %v1240, %v1243
        %v1262 = vsel %vm1256, %v1249, 920167782
        %v1263 = vsel %vm1255, %v1246, %v1262
        %v1264 = vsel %vm1254, %v1261, %v1263
        %v1265 = vsel %vm1253, %v1243, %v1246
        %v1266 = vsel %vm1256, %v1252, 1326507024
        %v1267 = vsel %vm1255, %v1249, %v1266
        %v1268 = vsel %vm1254, %v1265, %v1267
        %v1269 = vshll.u32 %v1229, 8
        %v1270 = vmul.u32.u64.compose %v1269, %v1268
        %v1271 = vextract.low.u32 %v1270
        %v1272 = vextract.high.u32 %v1270
        %v1273 = vmul.u32.u64.compose %v1269, %v1264
        %v1274 = vextract.low.u32 %v1273
        %v1275 = vextract.high.u32 %v1273
        %v1276 = vmul.u32 %v1269, %v1260
        %v1277 = vadd.s32 %v1272, %v1274
        %vm1278 = vc.u32 %v1272, %v1274
        %v1279 = vadd.s32 %v1275, 1
        %v1280 = vsel %vm1278, %v1279, %v1275
        %v1281 = vadd.s32 %v1276, %v1280
        %v1282 = vadd.s32 %v1281, 536870912
        %v1283 = vshrl.u32 %v1282, 30
        %v1284 = vshll.u32 %v1283, 30
        %v1285 = vsub.s32 %v1281, %v1284
        %vm1286 = vcmp.lt.s32.totalorder %v1285, 0
        %v1287 = vsub.s32 0, %v1285
        %v1288 = vsel %vm1286, %v1287, %v1285
        %v1289 = vclz %v1288
        %v1290 = vsub.s32 %v1289, 2
        %vm1291 = vcmp.gt.s32.totalorder 0, %v1290
        %v1292 = vsel %vm1291, 0, %v1290
        %v1293 = vsub.s32 32, %v1292
        %v1294 = vshll.u32 %v1285, %v1292
        %v1295 = vshrl.u32 %v1277, %v1293
        %v1296 = vor.u32 %v1294, %v1295
        %v1297 = vsub.s32 4294967266, %v1292
        %v1298 = vadd.s32 %v1297, 127
        %v1299 = vshll.u32 %v1298, 23
        %v1300 = vor.u32 4788187, %v1299
        %v1301 = vand.u32 2147483647, %v1300
        %v1303 = vcvt.s32.f32 %v1296
        %v1304 = vmul.f32 %v1303, %v1301
        %v1305 = vxor.u32 %v1304, 2147483648
        %v1306 = vsel %vm1223, %v1305, %v1304
        %v1307 = vsub.s32 4, %v1283
        %v1308 = vsel %vm1223, %v1307, %v1283
        %v1309 = vsel %vm1222, %v286, %v1306
        %v1310 = vsel %vm1222, 0, %v1308
        %v1311 = vcosq.f32.pop %v1309
        %v1312 = vsinq.f32.pop %v1309
        %vm1313 = vweird.f32 %v286
        %v1314 = vadd.s32 %v1310, 3
        %v1315 = vand.u32 %v1314, 3
        %vm1316 = vcmp.lt.s32.totalorder %v1315, 2
        %vm1317 = vcmp.eq.s32.totalorder %v1315, 0
        %v1318 = vxor.u32 %v1312, 2147483648
        %v1319 = vsel %vm1317, %v1311, %v1318
        %vm1320 = vcmp.eq.s32.totalorder %v1315, 2
        %v1321 = vxor.u32 %v1311, 2147483648
        %v1322 = vsel %vm1320, %v1321, %v1312
        %v1323 = vsel %vm1316, %v1319, %v1322
        %v1324 = vsel %vm1313, nan, %v1323
        %v1325 = vand.u32 2147483647, %v287
        %vm1326 = vcmp.le.f32.partialorder %v1325, 0.7853982
        %vm1327 = vcmp.lt.s32.totalorder %v287, 0
        %v1328 = vand.u32 %v287, 2139095040
        %v1329 = vshrl.u32 %v1328, 23
        %v1330 = vsub.s32 %v1329, 127
        %v1331 = vand.u32 2147483647, %v287
        %v1332 = vand.u32 %v1331, 8388607
        %v1333 = vor.u32 %v1332, 8388608
        %v1334 = vsub.s32 0, %v1333
        %v1335 = vadd.s32 %v1330, 1
        %vm1336 = vcmp.gt.s32.totalorder %v1335, 0
        %v1337 = vsel %vm1336, %v1335, 0
        %v1338 = vshrl.u32 %v1337, 5
        %v1339 = vand.u32 %v1337, 31
        %v1340 = vsub.s32 32, %v1339
        %v1341 = vshrl.u32 683565275, %v1340
        %v1342 = vshll.u32 683565275, %v1339
        %v1343 = vshrl.u32 2475754826, %v1340
        %v1344 = vor.u32 %v1342, %v1343
        %v1345 = vshll.u32 2475754826, %v1339
        %v1346 = vshrl.u32 2131351028, %v1340
        %v1347 = vor.u32 %v1345, %v1346
        %v1348 = vshll.u32 2131351028, %v1339
        %v1349 = vshrl.u32 2102212464, %v1340
        %v1350 = vor.u32 %v1348, %v1349
        %v1351 = vshll.u32 2102212464, %v1339
        %v1352 = vshrl.u32 920167782, %v1340
        %v1353 = vor.u32 %v1351, %v1352
        %v1354 = vshll.u32 920167782, %v1339
        %v1355 = vshrl.u32 1326507024, %v1340
        %v1356 = vor.u32 %v1354, %v1355
        %vm1357 = vcmp.lt.s32.totalorder %v1338, 1
        %vm1358 = vcmp.lt.s32.totalorder %v1338, 2
        %vm1359 = vcmp.lt.s32.totalorder %v1338, 3
        %vm1360 = vcmp.lt.s32.totalorder %v1338, 4
        %v1361 = vsel %vm1357, %v1341, %v1344
        %v1362 = vsel %vm1360, %v1350, 2102212464
        %v1363 = vsel %vm1359, %v1347, %v1362
        %v1364 = vsel %vm1358, %v1361, %v1363
        %v1365 = vsel %vm1357, %v1344, %v1347
        %v1366 = vsel %vm1360, %v1353, 920167782
        %v1367 = vsel %vm1359, %v1350, %v1366
        %v1368 = vsel %vm1358, %v1365, %v1367
        %v1369 = vsel %vm1357, %v1347, %v1350
        %v1370 = vsel %vm1360, %v1356, 1326507024
        %v1371 = vsel %vm1359, %v1353, %v1370
        %v1372 = vsel %vm1358, %v1369, %v1371
        %v1373 = vshll.u32 %v1333, 8
        %v1374 = vmul.u32.u64.compose %v1373, %v1372
        %v1375 = vextract.low.u32 %v1374
        %v1376 = vextract.high.u32 %v1374
        %v1377 = vmul.u32.u64.compose %v1373, %v1368
        %v1378 = vextract.low.u32 %v1377
        %v1379 = vextract.high.u32 %v1377
        %v1380 = vmul.u32 %v1373, %v1364
        %v1381 = vadd.s32 %v1376, %v1378
        %vm1382 = vc.u32 %v1376, %v1378
        %v1383 = vadd.s32 %v1379, 1
        %v1384 = vsel %vm1382, %v1383, %v1379
        %v1385 = vadd.s32 %v1380, %v1384
        %v1386 = vadd.s32 %v1385, 536870912
        %v1387 = vshrl.u32 %v1386, 30
        %v1388 = vshll.u32 %v1387, 30
        %v1389 = vsub.s32 %v1385, %v1388
        %vm1390 = vcmp.lt.s32.totalorder %v1389, 0
        %v1391 = vsub.s32 0, %v1389
        %v1392 = vsel %vm1390, %v1391, %v1389
        %v1393 = vclz %v1392
        %v1394 = vsub.s32 %v1393, 2
        %vm1395 = vcmp.gt.s32.totalorder 0, %v1394
        %v1396 = vsel %vm1395, 0, %v1394
        %v1397 = vsub.s32 32, %v1396
        %v1398 = vshll.u32 %v1389, %v1396
        %v1399 = vshrl.u32 %v1381, %v1397
        %v1400 = vor.u32 %v1398, %v1399
        %v1401 = vsub.s32 4294967266, %v1396
        %v1402 = vadd.s32 %v1401, 127
        %v1403 = vshll.u32 %v1402, 23
        %v1404 = vor.u32 4788187, %v1403
        %v1405 = vand.u32 2147483647, %v1404
        %v1407 = vcvt.s32.f32 %v1400
        %v1408 = vmul.f32 %v1407, %v1405
        %v1409 = vxor.u32 %v1408, 2147483648
        %v1410 = vsel %vm1327, %v1409, %v1408
        %v1411 = vsub.s32 4, %v1387
        %v1412 = vsel %vm1327, %v1411, %v1387
        %v1413 = vsel %vm1326, %v287, %v1410
        %v1414 = vsel %vm1326, 0, %v1412
        %v1415 = vcosq.f32.pop %v1413
        %v1416 = vsinq.f32.pop %v1413
        %vm1417 = vweird.f32 %v287
        %v1418 = vadd.s32 %v1414, 3
        %v1419 = vand.u32 %v1418, 3
        %vm1420 = vcmp.lt.s32.totalorder %v1419, 2
        %vm1421 = vcmp.eq.s32.totalorder %v1419, 0
        %v1422 = vxor.u32 %v1416, 2147483648
        %v1423 = vsel %vm1421, %v1415, %v1422
        %vm1424 = vcmp.eq.s32.totalorder %v1419, 2
        %v1425 = vxor.u32 %v1415, 2147483648
        %v1426 = vsel %vm1424, %v1425, %v1416
        %v1427 = vsel %vm1420, %v1423, %v1426
        %v1428 = vsel %vm1417, nan, %v1427
        %v1429 = vand.u32 2147483647, %v288
        %vm1430 = vcmp.le.f32.partialorder %v1429, 0.7853982
        %vm1431 = vcmp.lt.s32.totalorder %v288, 0
        %v1432 = vand.u32 %v288, 2139095040
        %v1433 = vshrl.u32 %v1432, 23
        %v1434 = vsub.s32 %v1433, 127
        %v1435 = vand.u32 2147483647, %v288
        %v1436 = vand.u32 %v1435, 8388607
        %v1437 = vor.u32 %v1436, 8388608
        %v1438 = vsub.s32 0, %v1437
        %v1439 = vadd.s32 %v1434, 1
        %vm1440 = vcmp.gt.s32.totalorder %v1439, 0
        %v1441 = vsel %vm1440, %v1439, 0
        %v1442 = vshrl.u32 %v1441, 5
        %v1443 = vand.u32 %v1441, 31
        %v1444 = vsub.s32 32, %v1443
        %v1445 = vshrl.u32 683565275, %v1444
        %v1446 = vshll.u32 683565275, %v1443
        %v1447 = vshrl.u32 2475754826, %v1444
        %v1448 = vor.u32 %v1446, %v1447
        %v1449 = vshll.u32 2475754826, %v1443
        %v1450 = vshrl.u32 2131351028, %v1444
        %v1451 = vor.u32 %v1449, %v1450
        %v1452 = vshll.u32 2131351028, %v1443
        %v1453 = vshrl.u32 2102212464, %v1444
        %v1454 = vor.u32 %v1452, %v1453
        %v1455 = vshll.u32 2102212464, %v1443
        %v1456 = vshrl.u32 920167782, %v1444
        %v1457 = vor.u32 %v1455, %v1456
        %v1458 = vshll.u32 920167782, %v1443
        %v1459 = vshrl.u32 1326507024, %v1444
        %v1460 = vor.u32 %v1458, %v1459
        %vm1461 = vcmp.lt.s32.totalorder %v1442, 1
        %vm1462 = vcmp.lt.s32.totalorder %v1442, 2
        %vm1463 = vcmp.lt.s32.totalorder %v1442, 3
        %vm1464 = vcmp.lt.s32.totalorder %v1442, 4
        %v1465 = vsel %vm1461, %v1445, %v1448
        %v1466 = vsel %vm1464, %v1454, 2102212464
        %v1467 = vsel %vm1463, %v1451, %v1466
        %v1468 = vsel %vm1462, %v1465, %v1467
        %v1469 = vsel %vm1461, %v1448, %v1451
        %v1470 = vsel %vm1464, %v1457, 920167782
        %v1471 = vsel %vm1463, %v1454, %v1470
        %v1472 = vsel %vm1462, %v1469, %v1471
        %v1473 = vsel %vm1461, %v1451, %v1454
        %v1474 = vsel %vm1464, %v1460, 1326507024
        %v1475 = vsel %vm1463, %v1457, %v1474
        %v1476 = vsel %vm1462, %v1473, %v1475
        %v1477 = vshll.u32 %v1437, 8
        %v1478 = vmul.u32.u64.compose %v1477, %v1476
        %v1479 = vextract.low.u32 %v1478
        %v1480 = vextract.high.u32 %v1478
        %v1481 = vmul.u32.u64.compose %v1477, %v1472
        %v1482 = vextract.low.u32 %v1481
        %v1483 = vextract.high.u32 %v1481
        %v1484 = vmul.u32 %v1477, %v1468
        %v1485 = vadd.s32 %v1480, %v1482
        %vm1486 = vc.u32 %v1480, %v1482
        %v1487 = vadd.s32 %v1483, 1
        %v1488 = vsel %vm1486, %v1487, %v1483
        %v1489 = vadd.s32 %v1484, %v1488
        %v1490 = vadd.s32 %v1489, 536870912
        %v1491 = vshrl.u32 %v1490, 30
        %v1492 = vshll.u32 %v1491, 30
        %v1493 = vsub.s32 %v1489, %v1492
        %vm1494 = vcmp.lt.s32.totalorder %v1493, 0
        %v1495 = vsub.s32 0, %v1493
        %v1496 = vsel %vm1494, %v1495, %v1493
        %v1497 = vclz %v1496
        %v1498 = vsub.s32 %v1497, 2
        %vm1499 = vcmp.gt.s32.totalorder 0, %v1498
        %v1500 = vsel %vm1499, 0, %v1498
        %v1501 = vsub.s32 32, %v1500
        %v1502 = vshll.u32 %v1493, %v1500
        %v1503 = vshrl.u32 %v1485, %v1501
        %v1504 = vor.u32 %v1502, %v1503
        %v1505 = vsub.s32 4294967266, %v1500
        %v1506 = vadd.s32 %v1505, 127
        %v1507 = vshll.u32 %v1506, 23
        %v1508 = vor.u32 4788187, %v1507
        %v1509 = vand.u32 2147483647, %v1508
        %v1511 = vcvt.s32.f32 %v1504
        %v1512 = vmul.f32 %v1511, %v1509
        %v1513 = vxor.u32 %v1512, 2147483648
        %v1514 = vsel %vm1431, %v1513, %v1512
        %v1515 = vsub.s32 4, %v1491
        %v1516 = vsel %vm1431, %v1515, %v1491
        %v1517 = vsel %vm1430, %v288, %v1514
        %v1518 = vsel %vm1430, 0, %v1516
        %v1519 = vcosq.f32.pop %v1517
        %v1520 = vsinq.f32.pop %v1517
        %vm1521 = vweird.f32 %v288
        %v1522 = vadd.s32 %v1518, 3
        %v1523 = vand.u32 %v1522, 3
        %vm1524 = vcmp.lt.s32.totalorder %v1523, 2
        %vm1525 = vcmp.eq.s32.totalorder %v1523, 0
        %v1526 = vxor.u32 %v1520, 2147483648
        %v1527 = vsel %vm1525, %v1519, %v1526
        %vm1528 = vcmp.eq.s32.totalorder %v1523, 2
        %v1529 = vxor.u32 %v1519, 2147483648
        %v1530 = vsel %vm1528, %v1529, %v1520
        %v1531 = vsel %vm1524, %v1527, %v1530
        %v1532 = vsel %vm1521, nan, %v1531
        %v1533 = vand.u32 2147483647, %v289
        %vm1534 = vcmp.le.f32.partialorder %v1533, 0.7853982
        %vm1535 = vcmp.lt.s32.totalorder %v289, 0
        %v1536 = vand.u32 %v289, 2139095040
        %v1537 = vshrl.u32 %v1536, 23
        %v1538 = vsub.s32 %v1537, 127
        %v1539 = vand.u32 2147483647, %v289
        %v1540 = vand.u32 %v1539, 8388607
        %v1541 = vor.u32 %v1540, 8388608
        %v1542 = vsub.s32 0, %v1541
        %v1543 = vadd.s32 %v1538, 1
        %vm1544 = vcmp.gt.s32.totalorder %v1543, 0
        %v1545 = vsel %vm1544, %v1543, 0
        %v1546 = vshrl.u32 %v1545, 5
        %v1547 = vand.u32 %v1545, 31
        %v1548 = vsub.s32 32, %v1547
        %v1549 = vshrl.u32 683565275, %v1548
        %v1550 = vshll.u32 683565275, %v1547
        %v1551 = vshrl.u32 2475754826, %v1548
        %v1552 = vor.u32 %v1550, %v1551
        %v1553 = vshll.u32 2475754826, %v1547
        %v1554 = vshrl.u32 2131351028, %v1548
        %v1555 = vor.u32 %v1553, %v1554
        %v1556 = vshll.u32 2131351028, %v1547
        %v1557 = vshrl.u32 2102212464, %v1548
        %v1558 = vor.u32 %v1556, %v1557
        %v1559 = vshll.u32 2102212464, %v1547
        %v1560 = vshrl.u32 920167782, %v1548
        %v1561 = vor.u32 %v1559, %v1560
        %v1562 = vshll.u32 920167782, %v1547
        %v1563 = vshrl.u32 1326507024, %v1548
        %v1564 = vor.u32 %v1562, %v1563
        %vm1565 = vcmp.lt.s32.totalorder %v1546, 1
        %vm1566 = vcmp.lt.s32.totalorder %v1546, 2
        %vm1567 = vcmp.lt.s32.totalorder %v1546, 3
        %vm1568 = vcmp.lt.s32.totalorder %v1546, 4
        %v1569 = vsel %vm1565, %v1549, %v1552
        %v1570 = vsel %vm1568, %v1558, 2102212464
        %v1571 = vsel %vm1567, %v1555, %v1570
        %v1572 = vsel %vm1566, %v1569, %v1571
        %v1573 = vsel %vm1565, %v1552, %v1555
        %v1574 = vsel %vm1568, %v1561, 920167782
        %v1575 = vsel %vm1567, %v1558, %v1574
        %v1576 = vsel %vm1566, %v1573, %v1575
        %v1577 = vsel %vm1565, %v1555, %v1558
        %v1578 = vsel %vm1568, %v1564, 1326507024
        %v1579 = vsel %vm1567, %v1561, %v1578
        %v1580 = vsel %vm1566, %v1577, %v1579
        %v1581 = vshll.u32 %v1541, 8
        %v1582 = vmul.u32.u64.compose %v1581, %v1580
        %v1583 = vextract.low.u32 %v1582
        %v1584 = vextract.high.u32 %v1582
        %v1585 = vmul.u32.u64.compose %v1581, %v1576
        %v1586 = vextract.low.u32 %v1585
        %v1587 = vextract.high.u32 %v1585
        %v1588 = vmul.u32 %v1581, %v1572
        %v1589 = vadd.s32 %v1584, %v1586
        %vm1590 = vc.u32 %v1584, %v1586
        %v1591 = vadd.s32 %v1587, 1
        %v1592 = vsel %vm1590, %v1591, %v1587
        %v1593 = vadd.s32 %v1588, %v1592
        %v1594 = vadd.s32 %v1593, 536870912
        %v1595 = vshrl.u32 %v1594, 30
        %v1596 = vshll.u32 %v1595, 30
        %v1597 = vsub.s32 %v1593, %v1596
        %vm1598 = vcmp.lt.s32.totalorder %v1597, 0
        %v1599 = vsub.s32 0, %v1597
        %v1600 = vsel %vm1598, %v1599, %v1597
        %v1601 = vclz %v1600
        %v1602 = vsub.s32 %v1601, 2
        %vm1603 = vcmp.gt.s32.totalorder 0, %v1602
        %v1604 = vsel %vm1603, 0, %v1602
        %v1605 = vsub.s32 32, %v1604
        %v1606 = vshll.u32 %v1597, %v1604
        %v1607 = vshrl.u32 %v1589, %v1605
        %v1608 = vor.u32 %v1606, %v1607
        %v1609 = vsub.s32 4294967266, %v1604
        %v1610 = vadd.s32 %v1609, 127
        %v1611 = vshll.u32 %v1610, 23
        %v1612 = vor.u32 4788187, %v1611
        %v1613 = vand.u32 2147483647, %v1612
        %v1615 = vcvt.s32.f32 %v1608
        %v1616 = vmul.f32 %v1615, %v1613
        %v1617 = vxor.u32 %v1616, 2147483648
        %v1618 = vsel %vm1535, %v1617, %v1616
        %v1619 = vsub.s32 4, %v1595
        %v1620 = vsel %vm1535, %v1619, %v1595
        %v1621 = vsel %vm1534, %v289, %v1618
        %v1622 = vsel %vm1534, 0, %v1620
        %v1623 = vcosq.f32.pop %v1621
        %v1624 = vsinq.f32.pop %v1621
        %vm1625 = vweird.f32 %v289
        %v1626 = vadd.s32 %v1622, 3
        %v1627 = vand.u32 %v1626, 3
        %vm1628 = vcmp.lt.s32.totalorder %v1627, 2
        %vm1629 = vcmp.eq.s32.totalorder %v1627, 0
        %v1630 = vxor.u32 %v1624, 2147483648
        %v1631 = vsel %vm1629, %v1623, %v1630
        %vm1632 = vcmp.eq.s32.totalorder %v1627, 2
        %v1633 = vxor.u32 %v1623, 2147483648
        %v1634 = vsel %vm1632, %v1633, %v1624
        %v1635 = vsel %vm1628, %v1631, %v1634
        %v1636 = vsel %vm1625, nan, %v1635
        %v1637 = vand.u32 2147483647, %v290
        %vm1638 = vcmp.le.f32.partialorder %v1637, 0.7853982
        %vm1639 = vcmp.lt.s32.totalorder %v290, 0
        %v1640 = vand.u32 %v290, 2139095040
        %v1641 = vshrl.u32 %v1640, 23
        %v1642 = vsub.s32 %v1641, 127
        %v1643 = vand.u32 2147483647, %v290
        %v1644 = vand.u32 %v1643, 8388607
        %v1645 = vor.u32 %v1644, 8388608
        %v1646 = vsub.s32 0, %v1645
        %v1647 = vadd.s32 %v1642, 1
        %vm1648 = vcmp.gt.s32.totalorder %v1647, 0
        %v1649 = vsel %vm1648, %v1647, 0
        %v1650 = vshrl.u32 %v1649, 5
        %v1651 = vand.u32 %v1649, 31
        %v1652 = vsub.s32 32, %v1651
        %v1653 = vshrl.u32 683565275, %v1652
        %v1654 = vshll.u32 683565275, %v1651
        %v1655 = vshrl.u32 2475754826, %v1652
        %v1656 = vor.u32 %v1654, %v1655
        %v1657 = vshll.u32 2475754826, %v1651
        %v1658 = vshrl.u32 2131351028, %v1652
        %v1659 = vor.u32 %v1657, %v1658
        %v1660 = vshll.u32 2131351028, %v1651
        %v1661 = vshrl.u32 2102212464, %v1652
        %v1662 = vor.u32 %v1660, %v1661
        %v1663 = vshll.u32 2102212464, %v1651
        %v1664 = vshrl.u32 920167782, %v1652
        %v1665 = vor.u32 %v1663, %v1664
        %v1666 = vshll.u32 920167782, %v1651
        %v1667 = vshrl.u32 1326507024, %v1652
        %v1668 = vor.u32 %v1666, %v1667
        %vm1669 = vcmp.lt.s32.totalorder %v1650, 1
        %vm1670 = vcmp.lt.s32.totalorder %v1650, 2
        %vm1671 = vcmp.lt.s32.totalorder %v1650, 3
        %vm1672 = vcmp.lt.s32.totalorder %v1650, 4
        %v1673 = vsel %vm1669, %v1653, %v1656
        %v1674 = vsel %vm1672, %v1662, 2102212464
        %v1675 = vsel %vm1671, %v1659, %v1674
        %v1676 = vsel %vm1670, %v1673, %v1675
        %v1677 = vsel %vm1669, %v1656, %v1659
        %v1678 = vsel %vm1672, %v1665, 920167782
        %v1679 = vsel %vm1671, %v1662, %v1678
        %v1680 = vsel %vm1670, %v1677, %v1679
        %v1681 = vsel %vm1669, %v1659, %v1662
        %v1682 = vsel %vm1672, %v1668, 1326507024
        %v1683 = vsel %vm1671, %v1665, %v1682
        %v1684 = vsel %vm1670, %v1681, %v1683
        %v1685 = vshll.u32 %v1645, 8
        %v1686 = vmul.u32.u64.compose %v1685, %v1684
        %v1687 = vextract.low.u32 %v1686
        %v1688 = vextract.high.u32 %v1686
        %v1689 = vmul.u32.u64.compose %v1685, %v1680
        %v1690 = vextract.low.u32 %v1689
        %v1691 = vextract.high.u32 %v1689
        %v1692 = vmul.u32 %v1685, %v1676
        %v1693 = vadd.s32 %v1688, %v1690
        %vm1694 = vc.u32 %v1688, %v1690
        %v1695 = vadd.s32 %v1691, 1
        %v1696 = vsel %vm1694, %v1695, %v1691
        %v1697 = vadd.s32 %v1692, %v1696
        %v1698 = vadd.s32 %v1697, 536870912
        %v1699 = vshrl.u32 %v1698, 30
        %v1700 = vshll.u32 %v1699, 30
        %v1701 = vsub.s32 %v1697, %v1700
        %vm1702 = vcmp.lt.s32.totalorder %v1701, 0
        %v1703 = vsub.s32 0, %v1701
        %v1704 = vsel %vm1702, %v1703, %v1701
        %v1705 = vclz %v1704
        %v1706 = vsub.s32 %v1705, 2
        %vm1707 = vcmp.gt.s32.totalorder 0, %v1706
        %v1708 = vsel %vm1707, 0, %v1706
        %v1709 = vsub.s32 32, %v1708
        %v1710 = vshll.u32 %v1701, %v1708
        %v1711 = vshrl.u32 %v1693, %v1709
        %v1712 = vor.u32 %v1710, %v1711
        %v1713 = vsub.s32 4294967266, %v1708
        %v1714 = vadd.s32 %v1713, 127
        %v1715 = vshll.u32 %v1714, 23
        %v1716 = vor.u32 4788187, %v1715
        %v1717 = vand.u32 2147483647, %v1716
        %v1719 = vcvt.s32.f32 %v1712
        %v1720 = vmul.f32 %v1719, %v1717
        %v1721 = vxor.u32 %v1720, 2147483648
        %v1722 = vsel %vm1639, %v1721, %v1720
        %v1723 = vsub.s32 4, %v1699
        %v1724 = vsel %vm1639, %v1723, %v1699
        %v1725 = vsel %vm1638, %v290, %v1722
        %v1726 = vsel %vm1638, 0, %v1724
        %v1727 = vcosq.f32.pop %v1725
        %v1728 = vsinq.f32.pop %v1725
        %vm1729 = vweird.f32 %v290
        %v1730 = vadd.s32 %v1726, 3
        %v1731 = vand.u32 %v1730, 3
        %vm1732 = vcmp.lt.s32.totalorder %v1731, 2
        %vm1733 = vcmp.eq.s32.totalorder %v1731, 0
        %v1734 = vxor.u32 %v1728, 2147483648
        %v1735 = vsel %vm1733, %v1727, %v1734
        %vm1736 = vcmp.eq.s32.totalorder %v1731, 2
        %v1737 = vxor.u32 %v1727, 2147483648
        %v1738 = vsel %vm1736, %v1737, %v1728
        %v1739 = vsel %vm1732, %v1735, %v1738
        %v1740 = vsel %vm1729, nan, %v1739
        %v1741 = vand.u32 2147483647, %v291
        %vm1742 = vcmp.le.f32.partialorder %v1741, 0.7853982
        %vm1743 = vcmp.lt.s32.totalorder %v291, 0
        %v1744 = vand.u32 %v291, 2139095040
        %v1745 = vshrl.u32 %v1744, 23
        %v1746 = vsub.s32 %v1745, 127
        %v1747 = vand.u32 2147483647, %v291
        %v1748 = vand.u32 %v1747, 8388607
        %v1749 = vor.u32 %v1748, 8388608
        %v1750 = vsub.s32 0, %v1749
        %v1751 = vadd.s32 %v1746, 1
        %vm1752 = vcmp.gt.s32.totalorder %v1751, 0
        %v1753 = vsel %vm1752, %v1751, 0
        %v1754 = vshrl.u32 %v1753, 5
        %v1755 = vand.u32 %v1753, 31
        %v1756 = vsub.s32 32, %v1755
        %v1757 = vshrl.u32 683565275, %v1756
        %v1758 = vshll.u32 683565275, %v1755
        %v1759 = vshrl.u32 2475754826, %v1756
        %v1760 = vor.u32 %v1758, %v1759
        %v1761 = vshll.u32 2475754826, %v1755
        %v1762 = vshrl.u32 2131351028, %v1756
        %v1763 = vor.u32 %v1761, %v1762
        %v1764 = vshll.u32 2131351028, %v1755
        %v1765 = vshrl.u32 2102212464, %v1756
        %v1766 = vor.u32 %v1764, %v1765
        %v1767 = vshll.u32 2102212464, %v1755
        %v1768 = vshrl.u32 920167782, %v1756
        %v1769 = vor.u32 %v1767, %v1768
        %v1770 = vshll.u32 920167782, %v1755
        %v1771 = vshrl.u32 1326507024, %v1756
        %v1772 = vor.u32 %v1770, %v1771
        %vm1773 = vcmp.lt.s32.totalorder %v1754, 1
        %vm1774 = vcmp.lt.s32.totalorder %v1754, 2
        %vm1775 = vcmp.lt.s32.totalorder %v1754, 3
        %vm1776 = vcmp.lt.s32.totalorder %v1754, 4
        %v1777 = vsel %vm1773, %v1757, %v1760
        %v1778 = vsel %vm1776, %v1766, 2102212464
        %v1779 = vsel %vm1775, %v1763, %v1778
        %v1780 = vsel %vm1774, %v1777, %v1779
        %v1781 = vsel %vm1773, %v1760, %v1763
        %v1782 = vsel %vm1776, %v1769, 920167782
        %v1783 = vsel %vm1775, %v1766, %v1782
        %v1784 = vsel %vm1774, %v1781, %v1783
        %v1785 = vsel %vm1773, %v1763, %v1766
        %v1786 = vsel %vm1776, %v1772, 1326507024
        %v1787 = vsel %vm1775, %v1769, %v1786
        %v1788 = vsel %vm1774, %v1785, %v1787
        %v1789 = vshll.u32 %v1749, 8
        %v1790 = vmul.u32.u64.compose %v1789, %v1788
        %v1791 = vextract.low.u32 %v1790
        %v1792 = vextract.high.u32 %v1790
        %v1793 = vmul.u32.u64.compose %v1789, %v1784
        %v1794 = vextract.low.u32 %v1793
        %v1795 = vextract.high.u32 %v1793
        %v1796 = vmul.u32 %v1789, %v1780
        %v1797 = vadd.s32 %v1792, %v1794
        %vm1798 = vc.u32 %v1792, %v1794
        %v1799 = vadd.s32 %v1795, 1
        %v1800 = vsel %vm1798, %v1799, %v1795
        %v1801 = vadd.s32 %v1796, %v1800
        %v1802 = vadd.s32 %v1801, 536870912
        %v1803 = vshrl.u32 %v1802, 30
        %v1804 = vshll.u32 %v1803, 30
        %v1805 = vsub.s32 %v1801, %v1804
        %vm1806 = vcmp.lt.s32.totalorder %v1805, 0
        %v1807 = vsub.s32 0, %v1805
        %v1808 = vsel %vm1806, %v1807, %v1805
        %v1809 = vclz %v1808
        %v1810 = vsub.s32 %v1809, 2
        %vm1811 = vcmp.gt.s32.totalorder 0, %v1810
        %v1812 = vsel %vm1811, 0, %v1810
        %v1813 = vsub.s32 32, %v1812
        %v1814 = vshll.u32 %v1805, %v1812
        %v1815 = vshrl.u32 %v1797, %v1813
        %v1816 = vor.u32 %v1814, %v1815
        %v1817 = vsub.s32 4294967266, %v1812
        %v1818 = vadd.s32 %v1817, 127
        %v1819 = vshll.u32 %v1818, 23
        %v1820 = vor.u32 4788187, %v1819
        %v1821 = vand.u32 2147483647, %v1820
        %v1823 = vcvt.s32.f32 %v1816
        %v1824 = vmul.f32 %v1823, %v1821
        %v1825 = vxor.u32 %v1824, 2147483648
        %v1826 = vsel %vm1743, %v1825, %v1824
        %v1827 = vsub.s32 4, %v1803
        %v1828 = vsel %vm1743, %v1827, %v1803
        %v1829 = vsel %vm1742, %v291, %v1826
        %v1830 = vsel %vm1742, 0, %v1828
        %v1831 = vcosq.f32.pop %v1829
        %v1832 = vsinq.f32.pop %v1829
        %vm1833 = vweird.f32 %v291
        %v1834 = vadd.s32 %v1830, 3
        %v1835 = vand.u32 %v1834, 3
        %vm1836 = vcmp.lt.s32.totalorder %v1835, 2
        %vm1837 = vcmp.eq.s32.totalorder %v1835, 0
        %v1838 = vxor.u32 %v1832, 2147483648
        %v1839 = vsel %vm1837, %v1831, %v1838
        %vm1840 = vcmp.eq.s32.totalorder %v1835, 2
        %v1841 = vxor.u32 %v1831, 2147483648
        %v1842 = vsel %vm1840, %v1841, %v1832
        %v1843 = vsel %vm1836, %v1839, %v1842
        %v1844 = vsel %vm1833, nan, %v1843
        %v1845 = vand.u32 2147483647, %v292
        %vm1846 = vcmp.le.f32.partialorder %v1845, 0.7853982
        %vm1847 = vcmp.lt.s32.totalorder %v292, 0
        %v1848 = vand.u32 %v292, 2139095040
        %v1849 = vshrl.u32 %v1848, 23
        %v1850 = vsub.s32 %v1849, 127
        %v1851 = vand.u32 2147483647, %v292
        %v1852 = vand.u32 %v1851, 8388607
        %v1853 = vor.u32 %v1852, 8388608
        %v1854 = vsub.s32 0, %v1853
        %v1855 = vadd.s32 %v1850, 1
        %vm1856 = vcmp.gt.s32.totalorder %v1855, 0
        %v1857 = vsel %vm1856, %v1855, 0
        %v1858 = vshrl.u32 %v1857, 5
        %v1859 = vand.u32 %v1857, 31
        %v1860 = vsub.s32 32, %v1859
        %v1861 = vshrl.u32 683565275, %v1860
        %v1862 = vshll.u32 683565275, %v1859
        %v1863 = vshrl.u32 2475754826, %v1860
        %v1864 = vor.u32 %v1862, %v1863
        %v1865 = vshll.u32 2475754826, %v1859
        %v1866 = vshrl.u32 2131351028, %v1860
        %v1867 = vor.u32 %v1865, %v1866
        %v1868 = vshll.u32 2131351028, %v1859
        %v1869 = vshrl.u32 2102212464, %v1860
        %v1870 = vor.u32 %v1868, %v1869
        %v1871 = vshll.u32 2102212464, %v1859
        %v1872 = vshrl.u32 920167782, %v1860
        %v1873 = vor.u32 %v1871, %v1872
        %v1874 = vshll.u32 920167782, %v1859
        %v1875 = vshrl.u32 1326507024, %v1860
        %v1876 = vor.u32 %v1874, %v1875
        %vm1877 = vcmp.lt.s32.totalorder %v1858, 1
        %vm1878 = vcmp.lt.s32.totalorder %v1858, 2
        %vm1879 = vcmp.lt.s32.totalorder %v1858, 3
        %vm1880 = vcmp.lt.s32.totalorder %v1858, 4
        %v1881 = vsel %vm1877, %v1861, %v1864
        %v1882 = vsel %vm1880, %v1870, 2102212464
        %v1883 = vsel %vm1879, %v1867, %v1882
        %v1884 = vsel %vm1878, %v1881, %v1883
        %v1885 = vsel %vm1877, %v1864, %v1867
        %v1886 = vsel %vm1880, %v1873, 920167782
        %v1887 = vsel %vm1879, %v1870, %v1886
        %v1888 = vsel %vm1878, %v1885, %v1887
        %v1889 = vsel %vm1877, %v1867, %v1870
        %v1890 = vsel %vm1880, %v1876, 1326507024
        %v1891 = vsel %vm1879, %v1873, %v1890
        %v1892 = vsel %vm1878, %v1889, %v1891
        %v1893 = vshll.u32 %v1853, 8
        %v1894 = vmul.u32.u64.compose %v1893, %v1892
        %v1895 = vextract.low.u32 %v1894
        %v1896 = vextract.high.u32 %v1894
        %v1897 = vmul.u32.u64.compose %v1893, %v1888
        %v1898 = vextract.low.u32 %v1897
        %v1899 = vextract.high.u32 %v1897
        %v1900 = vmul.u32 %v1893, %v1884
        %v1901 = vadd.s32 %v1896, %v1898
        %vm1902 = vc.u32 %v1896, %v1898
        %v1903 = vadd.s32 %v1899, 1
        %v1904 = vsel %vm1902, %v1903, %v1899
        %v1905 = vadd.s32 %v1900, %v1904
        %v1906 = vadd.s32 %v1905, 536870912
        %v1907 = vshrl.u32 %v1906, 30
        %v1908 = vshll.u32 %v1907, 30
        %v1909 = vsub.s32 %v1905, %v1908
        %vm1910 = vcmp.lt.s32.totalorder %v1909, 0
        %v1911 = vsub.s32 0, %v1909
        %v1912 = vsel %vm1910, %v1911, %v1909
        %v1913 = vclz %v1912
        %v1914 = vsub.s32 %v1913, 2
        %vm1915 = vcmp.gt.s32.totalorder 0, %v1914
        %v1916 = vsel %vm1915, 0, %v1914
        %v1917 = vsub.s32 32, %v1916
        %v1918 = vshll.u32 %v1909, %v1916
        %v1919 = vshrl.u32 %v1901, %v1917
        %v1920 = vor.u32 %v1918, %v1919
        %v1921 = vsub.s32 4294967266, %v1916
        %v1922 = vadd.s32 %v1921, 127
        %v1923 = vshll.u32 %v1922, 23
        %v1924 = vor.u32 4788187, %v1923
        %v1925 = vand.u32 2147483647, %v1924
        %v1927 = vcvt.s32.f32 %v1920
        %v1928 = vmul.f32 %v1927, %v1925
        %v1929 = vxor.u32 %v1928, 2147483648
        %v1930 = vsel %vm1847, %v1929, %v1928
        %v1931 = vsub.s32 4, %v1907
        %v1932 = vsel %vm1847, %v1931, %v1907
        %v1933 = vsel %vm1846, %v292, %v1930
        %v1934 = vsel %vm1846, 0, %v1932
        %v1935 = vcosq.f32.pop %v1933
        %v1936 = vsinq.f32.pop %v1933
        %vm1937 = vweird.f32 %v292
        %v1938 = vadd.s32 %v1934, 3
        %v1939 = vand.u32 %v1938, 3
        %vm1940 = vcmp.lt.s32.totalorder %v1939, 2
        %vm1941 = vcmp.eq.s32.totalorder %v1939, 0
        %v1942 = vxor.u32 %v1936, 2147483648
        %v1943 = vsel %vm1941, %v1935, %v1942
        %vm1944 = vcmp.eq.s32.totalorder %v1939, 2
        %v1945 = vxor.u32 %v1935, 2147483648
        %v1946 = vsel %vm1944, %v1945, %v1936
        %v1947 = vsel %vm1940, %v1943, %v1946
        %v1948 = vsel %vm1937, nan, %v1947
        %v1949 = vlaneseq
        %v1950 = vshrl.u32 %v1949, 7
        %v1951 = vadd.s32 %v1950, 8
        %v1952 = vadd.s32 %v1950, 16
        %v1953 = vadd.s32 %v1950, 24
        %v1954 = vadd.s32 %v1950, 32
        %v1955 = vadd.s32 %v1950, 40
        %v1956 = vadd.s32 %v1950, 48
        %v1957 = vadd.s32 %v1950, 56
        %v1958 = vadd.s32 %v1950, 64
        %v1959 = vadd.s32 %v1950, 72
        %v1960 = vadd.s32 %v1950, 80
        %v1961 = vadd.s32 %v1950, 88
        %v1962 = vadd.s32 %v1950, 96
        %v1963 = vadd.s32 %v1950, 104
        %v1964 = vadd.s32 %v1950, 112
        %v1965 = vadd.s32 %v1950, 120
        %v1966 = vlaneseq
        %v1967 = vand.u32 %v1966, 127
        %v1968 = vshra.s32 %v1950, 4
        %v1969 = vshra.s32 %v1951, 4
        %v1970 = vshra.s32 %v1952, 4
        %v1971 = vshra.s32 %v1953, 4
        %v1972 = vshra.s32 %v1954, 4
        %v1973 = vshra.s32 %v1955, 4
        %v1974 = vshra.s32 %v1956, 4
        %v1975 = vshra.s32 %v1957, 4
        %v1976 = vshra.s32 %v1958, 4
        %v1977 = vshra.s32 %v1959, 4
        %v1978 = vshra.s32 %v1960, 4
        %v1979 = vshra.s32 %v1961, 4
        %v1980 = vshra.s32 %v1962, 4
        %v1981 = vshra.s32 %v1963, 4
        %v1982 = vshra.s32 %v1964, 4
        %v1983 = vshra.s32 %v1965, 4
        %vm1984 = vcmp.eq.s32.totalorder %v1968, %v1967
        %vm1985 = vcmp.eq.s32.totalorder %v1969, %v1967
        %vm1986 = vcmp.eq.s32.totalorder %v1970, %v1967
        %vm1987 = vcmp.eq.s32.totalorder %v1971, %v1967
        %vm1988 = vcmp.eq.s32.totalorder %v1972, %v1967
        %vm1989 = vcmp.eq.s32.totalorder %v1973, %v1967
        %vm1990 = vcmp.eq.s32.totalorder %v1974, %v1967
        %vm1991 = vcmp.eq.s32.totalorder %v1975, %v1967
        %vm1992 = vcmp.eq.s32.totalorder %v1976, %v1967
        %vm1993 = vcmp.eq.s32.totalorder %v1977, %v1967
        %vm1994 = vcmp.eq.s32.totalorder %v1978, %v1967
        %vm1995 = vcmp.eq.s32.totalorder %v1979, %v1967
        %vm1996 = vcmp.eq.s32.totalorder %v1980, %v1967
        %vm1997 = vcmp.eq.s32.totalorder %v1981, %v1967
        %vm1998 = vcmp.eq.s32.totalorder %v1982, %v1967
        %vm1999 = vcmp.eq.s32.totalorder %v1983, %v1967
        %v2000 = vsel %vm1984, 1, 0
        %v2001 = vsel %vm1985, 1, 0
        %v2002 = vsel %vm1986, 1, 0
        %v2003 = vsel %vm1987, 1, 0
        %v2004 = vsel %vm1988, 1, 0
        %v2005 = vsel %vm1989, 1, 0
        %v2006 = vsel %vm1990, 1, 0
        %v2007 = vsel %vm1991, 1, 0
        %v2008 = vsel %vm1992, 1, 0
        %v2009 = vsel %vm1993, 1, 0
        %v2010 = vsel %vm1994, 1, 0
        %v2011 = vsel %vm1995, 1, 0
        %v2012 = vsel %vm1996, 1, 0
        %v2013 = vsel %vm1997, 1, 0
        %v2014 = vsel %vm1998, 1, 0
        %v2015 = vsel %vm1999, 1, 0
        %v2016 = vcvt.s32.f32 %v2000
        %v2017 = vcvt.s32.f32 %v2001
        %v2018 = vcvt.s32.f32 %v2002
        %v2019 = vcvt.s32.f32 %v2003
        %v2020 = vcvt.s32.f32 %v2004
        %v2021 = vcvt.s32.f32 %v2005
        %v2022 = vcvt.s32.f32 %v2006
        %v2023 = vcvt.s32.f32 %v2007
        %v2024 = vcvt.s32.f32 %v2008
        %v2025 = vcvt.s32.f32 %v2009
        %v2026 = vcvt.s32.f32 %v2010
        %v2027 = vcvt.s32.f32 %v2011
        %v2028 = vcvt.s32.f32 %v2012
        %v2029 = vcvt.s32.f32 %v2013
        %v2030 = vcvt.s32.f32 %v2014
        %v2031 = vcvt.s32.f32 %v2015
        %vm2032 = vcmask 64512
        %v2034 = vsel %vm2032, %v2016, 0
        %v2037 = vsel %vm2032, %v2017, 0
        %v2040 = vsel %vm2032, %v2018, 0
        %v2043 = vsel %vm2032, %v2019, 0
        %v2046 = vsel %vm2032, %v2020, 0
        %v2049 = vsel %vm2032, %v2021, 0
        %v2052 = vsel %vm2032, %v2022, 0
        %v2055 = vsel %vm2032, %v2023, 0
        %v2058 = vsel %vm2032, %v2024, 0
        %v2061 = vsel %vm2032, %v2025, 0
        %v2064 = vsel %vm2032, %v2026, 0
        %v2067 = vsel %vm2032, %v2027, 0
        %v2070 = vsel %vm2032, %v2028, 0
        %v2073 = vsel %vm2032, %v2029, 0
        %v2076 = vsel %vm2032, %v2030, 0
        %v2079 = vsel %vm2032, %v2031, 0
        %2081 = vmatprep.subr.mxu0 %v498
        %2082 = vmatpush1.msra.mxu0 %v395
        %2083 = vmatprep.subr.mxu0 0.0
        %2084 = vmatpush1.msra.mxu0 0.0
        %2085 = vmatprep.subr.mxu0 0.0
        %2086 = vmatpush1.msra.mxu0 0.0
        %2087 = vmatprep.subr.mxu0 0.0
        %2088 = vmatpush1.msra.mxu0 0.0
        %2089 = vmatprep.subr.mxu0 0.0
        %2090 = vmatpush1.msra.mxu0 0.0
        %2091 = vmatprep.subr.mxu0 0.0
        %2092 = vmatpush1.msra.mxu0 0.0
        %2093 = vmatprep.subr.mxu0 0.0
        %2094 = vmatpush1.msra.mxu0 0.0
        %2095 = vmatprep.subr.mxu0 0.0
        %2096 = vmatpush1.msra.mxu0 0.0
        %2097 = vmatprep.subr.mxu0 0.0
        %2098 = vmatpush1.msra.mxu0 0.0
        %2099 = vmatprep.subr.mxu0 0.0
        %2100 = vmatpush1.msra.mxu0 0.0
        %2101 = vmatprep.subr.mxu0 0.0
        %2102 = vmatpush1.msra.mxu0 0.0
        %2103 = vmatprep.subr.mxu0 0.0
        %2104 = vmatpush1.msra.mxu0 0.0
        %2105 = vmatprep.subr.mxu0 0.0
        %2106 = vmatpush1.msra.mxu0 0.0
        %2107 = vmatprep.subr.mxu0 0.0
        %2108 = vmatpush1.msra.mxu0 0.0
        %2109 = vmatprep.subr.mxu0 0.0
        %2110 = vmatpush1.msra.mxu0 0.0
        %2111 = vmatprep.subr.mxu0 0.0
        %2112 = vmatpush1.msra.mxu0 0.0
        %2113 = vmatprep.subr.mxu0 0.0
        %2114 = vmatpush1.msra.mxu0 0.0
        %2115 = vmatprep.subr.mxu0 0.0
        %2116 = vmatpush1.msra.mxu0 0.0
        %2117 = vmatprep.subr.mxu0 0.0
        %2118 = vmatpush1.msra.mxu0 0.0
        %2119 = vmatprep.subr.mxu0 0.0
        %2120 = vmatpush1.msra.mxu0 0.0
        %2121 = vmatprep.subr.mxu0 0.0
        %2122 = vmatpush1.msra.mxu0 0.0
        %2123 = vmatprep.subr.mxu0 0.0
        %2124 = vmatpush1.msra.mxu0 0.0
        %2125 = vmatprep.subr.mxu0 0.0
        %2126 = vmatpush1.msra.mxu0 0.0
        %2127 = vmatprep.subr.mxu0 0.0
        %2128 = vmatpush1.msra.mxu0 0.0
        %2129 = vmatprep.subr.mxu0 0.0
        %2130 = vmatpush1.msra.mxu0 0.0
        %2131 = vmatprep.subr.mxu0 0.0
        %2132 = vmatpush1.msra.mxu0 0.0
        %2133 = vmatprep.subr.mxu0 0.0
        %2134 = vmatpush1.msra.mxu0 0.0
        %2135 = vmatprep.subr.mxu0 0.0
        %2136 = vmatpush1.msra.mxu0 0.0
        %2137 = vmatprep.subr.mxu0 0.0
        %2138 = vmatpush1.msra.mxu0 0.0
        %2139 = vmatprep.subr.mxu0 0.0
        %2140 = vmatpush1.msra.mxu0 0.0
        %2141 = vmatprep.subr.mxu0 0.0
        %2142 = vmatpush1.msra.mxu0 0.0
        %2143 = vmatprep.subr.mxu0 0.0
        %2144 = vmatpush1.msra.mxu0 0.0
        %2145 = vmatprep.mubr.f32.mxu0 0.0
        %2146 = vmatmul.mubr.f32.gmra.mrb[0].mxu0 %v2034
        %v2147 = vpop.f32.mrb[0].mxu0
        %v2148 = vadd.f32 0.0, %v2147
        %v2149 = vpop.f32.mrb[0].mxu0
        %v2150 = vadd.f32 0.0, %v2149
        %2151 = vmatprep.mubr.f32.mxu0 0.0
        %2152 = vmatmul.mubr.f32.gmra.mrb[0].mxu0 %v2037
        %v2153 = vpop.f32.mrb[0].mxu0
        %v2154 = vadd.f32 0.0, %v2153
        %v2155 = vpop.f32.mrb[0].mxu0
        %v2156 = vadd.f32 0.0, %v2155
        %2157 = vmatprep.mubr.f32.mxu0 0.0
        %2158 = vmatmul.mubr.f32.gmra.mrb[0].mxu0 %v2040
        %v2159 = vpop.f32.mrb[0].mxu0
        %v2160 = vadd.f32 0.0, %v2159
        %v2161 = vpop.f32.mrb[0].mxu0
        %v2162 = vadd.f32 0.0, %v2161
        %2163 = vmatprep.mubr.f32.mxu0 0.0
        %2164 = vmatmul.mubr.f32.gmra.mrb[0].mxu0 %v2043
        %v2165 = vpop.f32.mrb[0].mxu0
        %v2166 = vadd.f32 0.0, %v2165
        %v2167 = vpop.f32.mrb[0].mxu0
        %v2168 = vadd.f32 0.0, %v2167
        %2169 = vmatprep.mubr.f32.mxu0 0.0
        %2170 = vmatmul.mubr.f32.gmra.mrb[0].mxu0 %v2046
        %v2171 = vpop.f32.mrb[0].mxu0
        %v2172 = vadd.f32 0.0, %v2171
        %v2173 = vpop.f32.mrb[0].mxu0
        %v2174 = vadd.f32 0.0, %v2173
        %2175 = vmatprep.mubr.f32.mxu0 0.0
        %2176 = vmatmul.mubr.f32.gmra.mrb[0].mxu0 %v2049
        %v2177 = vpop.f32.mrb[0].mxu0
        %v2178 = vadd.f32 0.0, %v2177
        %v2179 = vpop.f32.mrb[0].mxu0
        %v2180 = vadd.f32 0.0, %v2179
        %2181 = vmatprep.mubr.f32.mxu0 0.0
        %2182 = vmatmul.mubr.f32.gmra.mrb[0].mxu0 %v2052
        %v2183 = vpop.f32.mrb[0].mxu0
        %v2184 = vadd.f32 0.0, %v2183
        %v2185 = vpop.f32.mrb[0].mxu0
        %v2186 = vadd.f32 0.0, %v2185
        %2187 = vmatprep.mubr.f32.mxu0 0.0
        %2188 = vmatmul.mubr.f32.gmra.mrb[0].mxu0 %v2055
        %v2189 = vpop.f32.mrb[0].mxu0
        %v2190 = vadd.f32 0.0, %v2189
        %v2191 = vpop.f32.mrb[0].mxu0
        %v2192 = vadd.f32 0.0, %v2191
        %2193 = vmatprep.mubr.f32.mxu0 0.0
        %2194 = vmatmul.mubr.f32.gmra.mrb[0].mxu0 %v2058
        %v2195 = vpop.f32.mrb[0].mxu0
        %v2196 = vadd.f32 0.0, %v2195
        %v2197 = vpop.f32.mrb[0].mxu0
        %v2198 = vadd.f32 0.0, %v2197
        %2199 = vmatprep.mubr.f32.mxu0 0.0
        %2200 = vmatmul.mubr.f32.gmra.mrb[0].mxu0 %v2061
        %v2201 = vpop.f32.mrb[0].mxu0
        %v2202 = vadd.f32 0.0, %v2201
        %v2203 = vpop.f32.mrb[0].mxu0
        %v2204 = vadd.f32 0.0, %v2203
        %2205 = vmatprep.mubr.f32.mxu0 0.0
        %2206 = vmatmul.mubr.f32.gmra.mrb[0].mxu0 %v2064
        %v2207 = vpop.f32.mrb[0].mxu0
        %v2208 = vadd.f32 0.0, %v2207
        %v2209 = vpop.f32.mrb[0].mxu0
        %v2210 = vadd.f32 0.0, %v2209
        %2211 = vmatprep.mubr.f32.mxu0 0.0
        %2212 = vmatmul.mubr.f32.gmra.mrb[0].mxu0 %v2067
        %v2213 = vpop.f32.mrb[0].mxu0
        %v2214 = vadd.f32 0.0, %v2213
        %v2215 = vpop.f32.mrb[0].mxu0
        %v2216 = vadd.f32 0.0, %v2215
        %2217 = vmatprep.mubr.f32.mxu0 0.0
        %2218 = vmatmul.mubr.f32.gmra.mrb[0].mxu0 %v2070
        %v2219 = vpop.f32.mrb[0].mxu0
        %v2220 = vadd.f32 0.0, %v2219
        %v2221 = vpop.f32.mrb[0].mxu0
        %v2222 = vadd.f32 0.0, %v2221
        %2223 = vmatprep.mubr.f32.mxu0 0.0
        %2224 = vmatmul.mubr.f32.gmra.mrb[0].mxu0 %v2073
        %v2225 = vpop.f32.mrb[0].mxu0
        %v2226 = vadd.f32 0.0, %v2225
        %v2227 = vpop.f32.mrb[0].mxu0
        %v2228 = vadd.f32 0.0, %v2227
        %2229 = vmatprep.mubr.f32.mxu0 0.0
        %2230 = vmatmul.mubr.f32.gmra.mrb[0].mxu0 %v2076
        %v2231 = vpop.f32.mrb[0].mxu0
        %v2232 = vadd.f32 0.0, %v2231
        %v2233 = vpop.f32.mrb[0].mxu0
        %v2234 = vadd.f32 0.0, %v2233
        %2235 = vmatprep.mubr.f32.mxu0 0.0
        %2236 = vmatmul.mubr.f32.gmra.mrb[0].mxu0 %v2079
        %v2237 = vpop.f32.mrb[0].mxu0
        %v2238 = vadd.f32 0.0, %v2237
        %v2239 = vpop.f32.mrb[0].mxu0
        %v2240 = vadd.f32 0.0, %v2239
        %2241 = vdwg.mxu0
        %2242 = vmatprep.subr.mxu0 %v704
        %2243 = vmatpush1.msra.mxu0 %v601
        %2244 = vmatprep.subr.mxu0 0.0
        %2245 = vmatpush1.msra.mxu0 0.0
        %2246 = vmatprep.subr.mxu0 0.0
        %2247 = vmatpush1.msra.mxu0 0.0
        %2248 = vmatprep.subr.mxu0 0.0
        %2249 = vmatpush1.msra.mxu0 0.0
        %2250 = vmatprep.subr.mxu0 0.0
        %2251 = vmatpush1.msra.mxu0 0.0
        %2252 = vmatprep.subr.mxu0 0.0
        %2253 = vmatpush1.msra.mxu0 0.0
        %2254 = vmatprep.subr.mxu0 0.0
        %2255 = vmatpush1.msra.mxu0 0.0
        %2256 = vmatprep.subr.mxu0 0.0
        %2257 = vmatpush1.msra.mxu0 0.0
        %2258 = vmatprep.subr.mxu0 0.0
        %2259 = vmatpush1.msra.mxu0 0.0
        %2260 = vmatprep.subr.mxu0 0.0
        %2261 = vmatpush1.msra.mxu0 0.0
        %2262 = vmatprep.subr.mxu0 0.0
        %2263 = vmatpush1.msra.mxu0 0.0
        %2264 = vmatprep.subr.mxu0 0.0
        %2265 = vmatpush1.msra.mxu0 0.0
        %2266 = vmatprep.subr.mxu0 0.0
        %2267 = vmatpush1.msra.mxu0 0.0
        %2268 = vmatprep.subr.mxu0 0.0
        %2269 = vmatpush1.msra.mxu0 0.0
        %2270 = vmatprep.subr.mxu0 0.0
        %2271 = vmatpush1.msra.mxu0 0.0
        %2272 = vmatprep.subr.mxu0 0.0
        %2273 = vmatpush1.msra.mxu0 0.0
        %2274 = vmatprep.subr.mxu0 0.0
        %2275 = vmatpush1.msra.mxu0 0.0
        %2276 = vmatprep.subr.mxu0 0.0
        %2277 = vmatpush1.msra.mxu0 0.0
        %2278 = vmatprep.subr.mxu0 0.0
        %2279 = vmatpush1.msra.mxu0 0.0
        %2280 = vmatprep.subr.mxu0 0.0
        %2281 = vmatpush1.msra.mxu0 0.0
        %2282 = vmatprep.subr.mxu0 0.0
        %2283 = vmatpush1.msra.mxu0 0.0
        %2284 = vmatprep.subr.mxu0 0.0
        %2285 = vmatpush1.msra.mxu0 0.0
        %2286 = vmatprep.subr.mxu0 0.0
        %2287 = vmatpush1.msra.mxu0 0.0
        %2288 = vmatprep.subr.mxu0 0.0
        %2289 = vmatpush1.msra.mxu0 0.0
        %2290 = vmatprep.subr.mxu0 0.0
        %2291 = vmatpush1.msra.mxu0 0.0
        %2292 = vmatprep.subr.mxu0 0.0
        %2293 = vmatpush1.msra.mxu0 0.0
        %2294 = vmatprep.subr.mxu0 0.0
        %2295 = vmatpush1.msra.mxu0 0.0
        %2296 = vmatprep.subr.mxu0 0.0
        %2297 = vmatpush1.msra.mxu0 0.0
        %2298 = vmatprep.subr.mxu0 0.0
        %2299 = vmatpush1.msra.mxu0 0.0
        %2300 = vmatprep.subr.mxu0 0.0
        %2301 = vmatpush1.msra.mxu0 0.0
        %2302 = vmatprep.subr.mxu0 0.0
        %2303 = vmatpush1.msra.mxu0 0.0
        %2304 = vmatprep.subr.mxu0 0.0
        %2305 = vmatpush1.msra.mxu0 0.0
        %2306 = vmatprep.mubr.f32.mxu0 0.0
        %2307 = vmatmul.mubr.f32.gmra.mrb[0].mxu0 %v2034
        %v2308 = vpop.f32.mrb[0].mxu0
        %v2309 = vadd.f32 0.0, %v2308
        %v2310 = vpop.f32.mrb[0].mxu0
        %v2311 = vadd.f32 0.0, %v2310
        %2312 = vmatprep.mubr.f32.mxu0 0.0
        %2313 = vmatmul.mubr.f32.gmra.mrb[0].mxu0 %v2037
        %v2314 = vpop.f32.mrb[0].mxu0
        %v2315 = vadd.f32 0.0, %v2314
        %v2316 = vpop.f32.mrb[0].mxu0
        %v2317 = vadd.f32 0.0, %v2316
        %2318 = vmatprep.mubr.f32.mxu0 0.0
        %2319 = vmatmul.mubr.f32.gmra.mrb[0].mxu0 %v2040
        %v2320 = vpop.f32.mrb[0].mxu0
        %v2321 = vadd.f32 0.0, %v2320
        %v2322 = vpop.f32.mrb[0].mxu0
        %v2323 = vadd.f32 0.0, %v2322
        %2324 = vmatprep.mubr.f32.mxu0 0.0
        %2325 = vmatmul.mubr.f32.gmra.mrb[0].mxu0 %v2043
        %v2326 = vpop.f32.mrb[0].mxu0
        %v2327 = vadd.f32 0.0, %v2326
        %v2328 = vpop.f32.mrb[0].mxu0
        %v2329 = vadd.f32 0.0, %v2328
        %2330 = vmatprep.mubr.f32.mxu0 0.0
        %2331 = vmatmul.mubr.f32.gmra.mrb[0].mxu0 %v2046
        %v2332 = vpop.f32.mrb[0].mxu0
        %v2333 = vadd.f32 0.0, %v2332
        %v2334 = vpop.f32.mrb[0].mxu0
        %v2335 = vadd.f32 0.0, %v2334
        %2336 = vmatprep.mubr.f32.mxu0 0.0
        %2337 = vmatmul.mubr.f32.gmra.mrb[0].mxu0 %v2049
        %v2338 = vpop.f32.mrb[0].mxu0
        %v2339 = vadd.f32 0.0, %v2338
        %v2340 = vpop.f32.mrb[0].mxu0
        %v2341 = vadd.f32 0.0, %v2340
        %2342 = vmatprep.mubr.f32.mxu0 0.0
        %2343 = vmatmul.mubr.f32.gmra.mrb[0].mxu0 %v2052
        %v2344 = vpop.f32.mrb[0].mxu0
        %v2345 = vadd.f32 0.0, %v2344
        %v2346 = vpop.f32.mrb[0].mxu0
        %v2347 = vadd.f32 0.0, %v2346
        %2348 = vmatprep.mubr.f32.mxu0 0.0
        %2349 = vmatmul.mubr.f32.gmra.mrb[0].mxu0 %v2055
        %v2350 = vpop.f32.mrb[0].mxu0
        %v2351 = vadd.f32 0.0, %v2350
        %v2352 = vpop.f32.mrb[0].mxu0
        %v2353 = vadd.f32 0.0, %v2352
        %2354 = vmatprep.mubr.f32.mxu0 0.0
        %2355 = vmatmul.mubr.f32.gmra.mrb[0].mxu0 %v2058
        %v2356 = vpop.f32.mrb[0].mxu0
        %v2357 = vadd.f32 0.0, %v2356
        %v2358 = vpop.f32.mrb[0].mxu0
        %v2359 = vadd.f32 0.0, %v2358
        %2360 = vmatprep.mubr.f32.mxu0 0.0
        %2361 = vmatmul.mubr.f32.gmra.mrb[0].mxu0 %v2061
        %v2362 = vpop.f32.mrb[0].mxu0
        %v2363 = vadd.f32 0.0, %v2362
        %v2364 = vpop.f32.mrb[0].mxu0
        %v2365 = vadd.f32 0.0, %v2364
        %2366 = vmatprep.mubr.f32.mxu0 0.0
        %2367 = vmatmul.mubr.f32.gmra.mrb[0].mxu0 %v2064
        %v2368 = vpop.f32.mrb[0].mxu0
        %v2369 = vadd.f32 0.0, %v2368
        %v2370 = vpop.f32.mrb[0].mxu0
        %v2371 = vadd.f32 0.0, %v2370
        %2372 = vmatprep.mubr.f32.mxu0 0.0
        %2373 = vmatmul.mubr.f32.gmra.mrb[0].mxu0 %v2067
        %v2374 = vpop.f32.mrb[0].mxu0
        %v2375 = vadd.f32 0.0, %v2374
        %v2376 = vpop.f32.mrb[0].mxu0
        %v2377 = vadd.f32 0.0, %v2376
        %2378 = vmatprep.mubr.f32.mxu0 0.0
        %2379 = vmatmul.mubr.f32.gmra.mrb[0].mxu0 %v2070
        %v2380 = vpop.f32.mrb[0].mxu0
        %v2381 = vadd.f32 0.0, %v2380
        %v2382 = vpop.f32.mrb[0].mxu0
        %v2383 = vadd.f32 0.0, %v2382
        %2384 = vmatprep.mubr.f32.mxu0 0.0
        %2385 = vmatmul.mubr.f32.gmra.mrb[0].mxu0 %v2073
        %v2386 = vpop.f32.mrb[0].mxu0
        %v2387 = vadd.f32 0.0, %v2386
        %v2388 = vpop.f32.mrb[0].mxu0
        %v2389 = vadd.f32 0.0, %v2388
        %2390 = vmatprep.mubr.f32.mxu0 0.0
        %2391 = vmatmul.mubr.f32.gmra.mrb[0].mxu0 %v2076
        %v2392 = vpop.f32.mrb[0].mxu0
        %v2393 = vadd.f32 0.0, %v2392
        %v2394 = vpop.f32.mrb[0].mxu0
        %v2395 = vadd.f32 0.0, %v2394
        %2396 = vmatprep.mubr.f32.mxu0 0.0
        %2397 = vmatmul.mubr.f32.gmra.mrb[0].mxu0 %v2079
        %v2398 = vpop.f32.mrb[0].mxu0
        %v2399 = vadd.f32 0.0, %v2398
        %v2400 = vpop.f32.mrb[0].mxu0
        %v2401 = vadd.f32 0.0, %v2400
        %2402 = vdwg.mxu0
        %2403 = vmatprep.subr.mxu0 %v910
        %2404 = vmatpush1.msra.mxu0 %v807
        %2405 = vmatprep.subr.mxu0 0.0
        %2406 = vmatpush1.msra.mxu0 0.0
        %2407 = vmatprep.subr.mxu0 0.0
        %2408 = vmatpush1.msra.mxu0 0.0
        %2409 = vmatprep.subr.mxu0 0.0
        %2410 = vmatpush1.msra.mxu0 0.0
        %2411 = vmatprep.subr.mxu0 0.0
        %2412 = vmatpush1.msra.mxu0 0.0
        %2413 = vmatprep.subr.mxu0 0.0
        %2414 = vmatpush1.msra.mxu0 0.0
        %2415 = vmatprep.subr.mxu0 0.0
        %2416 = vmatpush1.msra.mxu0 0.0
        %2417 = vmatprep.subr.mxu0 0.0
        %2418 = vmatpush1.msra.mxu0 0.0
        %2419 = vmatprep.subr.mxu0 0.0
        %2420 = vmatpush1.msra.mxu0 0.0
        %2421 = vmatprep.subr.mxu0 0.0
        %2422 = vmatpush1.msra.mxu0 0.0
        %2423 = vmatprep.subr.mxu0 0.0
        %2424 = vmatpush1.msra.mxu0 0.0
        %2425 = vmatprep.subr.mxu0 0.0
        %2426 = vmatpush1.msra.mxu0 0.0
        %2427 = vmatprep.subr.mxu0 0.0
        %2428 = vmatpush1.msra.mxu0 0.0
        %2429 = vmatprep.subr.mxu0 0.0
        %2430 = vmatpush1.msra.mxu0 0.0
        %2431 = vmatprep.subr.mxu0 0.0
        %2432 = vmatpush1.msra.mxu0 0.0
        %2433 = vmatprep.subr.mxu0 0.0
        %2434 = vmatpush1.msra.mxu0 0.0
        %2435 = vmatprep.subr.mxu0 0.0
        %2436 = vmatpush1.msra.mxu0 0.0
        %2437 = vmatprep.subr.mxu0 0.0
        %2438 = vmatpush1.msra.mxu0 0.0
        %2439 = vmatprep.subr.mxu0 0.0
        %2440 = vmatpush1.msra.mxu0 0.0
        %2441 = vmatprep.subr.mxu0 0.0
        %2442 = vmatpush1.msra.mxu0 0.0
        %2443 = vmatprep.subr.mxu0 0.0
        %2444 = vmatpush1.msra.mxu0 0.0
        %2445 = vmatprep.subr.mxu0 0.0
        %2446 = vmatpush1.msra.mxu0 0.0
        %2447 = vmatprep.subr.mxu0 0.0
        %2448 = vmatpush1.msra.mxu0 0.0
        %2449 = vmatprep.subr.mxu0 0.0
        %2450 = vmatpush1.msra.mxu0 0.0
        %2451 = vmatprep.subr.mxu0 0.0
        %2452 = vmatpush1.msra.mxu0 0.0
        %2453 = vmatprep.subr.mxu0 0.0
        %2454 = vmatpush1.msra.mxu0 0.0
        %2455 = vmatprep.subr.mxu0 0.0
        %2456 = vmatpush1.msra.mxu0 0.0
        %2457 = vmatprep.subr.mxu0 0.0
        %2458 = vmatpush1.msra.mxu0 0.0
        %2459 = vmatprep.subr.mxu0 0.0
        %2460 = vmatpush1.msra.mxu0 0.0
        %2461 = vmatprep.subr.mxu0 0.0
        %2462 = vmatpush1.msra.mxu0 0.0
        %2463 = vmatprep.subr.mxu0 0.0
        %2464 = vmatpush1.msra.mxu0 0.0
        %2465 = vmatprep.subr.mxu0 0.0
        %2466 = vmatpush1.msra.mxu0 0.0
        %2467 = vmatprep.mubr.f32.mxu0 0.0
        %2468 = vmatmul.mubr.f32.gmra.mrb[0].mxu0 %v2034
        %v2469 = vpop.f32.mrb[0].mxu0
        %v2470 = vadd.f32 0.0, %v2469
        %v2471 = vpop.f32.mrb[0].mxu0
        %v2472 = vadd.f32 0.0, %v2471
        %2473 = vmatprep.mubr.f32.mxu0 0.0
        %2474 = vmatmul.mubr.f32.gmra.mrb[0].mxu0 %v2037
        %v2475 = vpop.f32.mrb[0].mxu0
        %v2476 = vadd.f32 0.0, %v2475
        %v2477 = vpop.f32.mrb[0].mxu0
        %v2478 = vadd.f32 0.0, %v2477
        %2479 = vmatprep.mubr.f32.mxu0 0.0
        %2480 = vmatmul.mubr.f32.gmra.mrb[0].mxu0 %v2040
        %v2481 = vpop.f32.mrb[0].mxu0
        %v2482 = vadd.f32 0.0, %v2481
        %v2483 = vpop.f32.mrb[0].mxu0
        %v2484 = vadd.f32 0.0, %v2483
        %2485 = vmatprep.mubr.f32.mxu0 0.0
        %2486 = vmatmul.mubr.f32.gmra.mrb[0].mxu0 %v2043
        %v2487 = vpop.f32.mrb[0].mxu0
        %v2488 = vadd.f32 0.0, %v2487
        %v2489 = vpop.f32.mrb[0].mxu0
        %v2490 = vadd.f32 0.0, %v2489
        %2491 = vmatprep.mubr.f32.mxu0 0.0
        %2492 = vmatmul.mubr.f32.gmra.mrb[0].mxu0 %v2046
        %v2493 = vpop.f32.mrb[0].mxu0
        %v2494 = vadd.f32 0.0, %v2493
        %v2495 = vpop.f32.mrb[0].mxu0
        %v2496 = vadd.f32 0.0, %v2495
        %2497 = vmatprep.mubr.f32.mxu0 0.0
        %2498 = vmatmul.mubr.f32.gmra.mrb[0].mxu0 %v2049
        %v2499 = vpop.f32.mrb[0].mxu0
        %v2500 = vadd.f32 0.0, %v2499
        %v2501 = vpop.f32.mrb[0].mxu0
        %v2502 = vadd.f32 0.0, %v2501
        %2503 = vmatprep.mubr.f32.mxu0 0.0
        %2504 = vmatmul.mubr.f32.gmra.mrb[0].mxu0 %v2052
        %v2505 = vpop.f32.mrb[0].mxu0
        %v2506 = vadd.f32 0.0, %v2505
        %v2507 = vpop.f32.mrb[0].mxu0
        %v2508 = vadd.f32 0.0, %v2507
        %2509 = vmatprep.mubr.f32.mxu0 0.0
        %2510 = vmatmul.mubr.f32.gmra.mrb[0].mxu0 %v2055
        %v2511 = vpop.f32.mrb[0].mxu0
        %v2512 = vadd.f32 0.0, %v2511
        %v2513 = vpop.f32.mrb[0].mxu0
        %v2514 = vadd.f32 0.0, %v2513
        %2515 = vmatprep.mubr.f32.mxu0 0.0
        %2516 = vmatmul.mubr.f32.gmra.mrb[0].mxu0 %v2058
        %v2517 = vpop.f32.mrb[0].mxu0
        %v2518 = vadd.f32 0.0, %v2517
        %v2519 = vpop.f32.mrb[0].mxu0
        %v2520 = vadd.f32 0.0, %v2519
        %2521 = vmatprep.mubr.f32.mxu0 0.0
        %2522 = vmatmul.mubr.f32.gmra.mrb[0].mxu0 %v2061
        %v2523 = vpop.f32.mrb[0].mxu0
        %v2524 = vadd.f32 0.0, %v2523
        %v2525 = vpop.f32.mrb[0].mxu0
        %v2526 = vadd.f32 0.0, %v2525
        %2527 = vmatprep.mubr.f32.mxu0 0.0
        %2528 = vmatmul.mubr.f32.gmra.mrb[0].mxu0 %v2064
        %v2529 = vpop.f32.mrb[0].mxu0
        %v2530 = vadd.f32 0.0, %v2529
        %v2531 = vpop.f32.mrb[0].mxu0
        %v2532 = vadd.f32 0.0, %v2531
        %2533 = vmatprep.mubr.f32.mxu0 0.0
        %2534 = vmatmul.mubr.f32.gmra.mrb[0].mxu0 %v2067
        %v2535 = vpop.f32.mrb[0].mxu0
        %v2536 = vadd.f32 0.0, %v2535
        %v2537 = vpop.f32.mrb[0].mxu0
        %v2538 = vadd.f32 0.0, %v2537
        %2539 = vmatprep.mubr.f32.mxu0 0.0
        %2540 = vmatmul.mubr.f32.gmra.mrb[0].mxu0 %v2070
        %v2541 = vpop.f32.mrb[0].mxu0
        %v2542 = vadd.f32 0.0, %v2541
        %v2543 = vpop.f32.mrb[0].mxu0
        %v2544 = vadd.f32 0.0, %v2543
        %2545 = vmatprep.mubr.f32.mxu0 0.0
        %2546 = vmatmul.mubr.f32.gmra.mrb[0].mxu0 %v2073
        %v2547 = vpop.f32.mrb[0].mxu0
        %v2548 = vadd.f32 0.0, %v2547
        %v2549 = vpop.f32.mrb[0].mxu0
        %v2550 = vadd.f32 0.0, %v2549
        %2551 = vmatprep.mubr.f32.mxu0 0.0
        %2552 = vmatmul.mubr.f32.gmra.mrb[0].mxu0 %v2076
        %v2553 = vpop.f32.mrb[0].mxu0
        %v2554 = vadd.f32 0.0, %v2553
        %v2555 = vpop.f32.mrb[0].mxu0
        %v2556 = vadd.f32 0.0, %v2555
        %2557 = vmatprep.mubr.f32.mxu0 0.0
        %2558 = vmatmul.mubr.f32.gmra.mrb[0].mxu0 %v2079
        %v2559 = vpop.f32.mrb[0].mxu0
        %v2560 = vadd.f32 0.0, %v2559
        %v2561 = vpop.f32.mrb[0].mxu0
        %v2562 = vadd.f32 0.0, %v2561
        %2563 = vdwg.mxu0
        %2564 = vmatprep.subr.mxu0 %v1116
        %2565 = vmatpush1.msra.mxu0 %v1013
        %2566 = vmatprep.subr.mxu0 0.0
        %2567 = vmatpush1.msra.mxu0 0.0
        %2568 = vmatprep.subr.mxu0 0.0
        %2569 = vmatpush1.msra.mxu0 0.0
        %2570 = vmatprep.subr.mxu0 0.0
        %2571 = vmatpush1.msra.mxu0 0.0
        %2572 = vmatprep.subr.mxu0 0.0
        %2573 = vmatpush1.msra.mxu0 0.0
        %2574 = vmatprep.subr.mxu0 0.0
        %2575 = vmatpush1.msra.mxu0 0.0
        %2576 = vmatprep.subr.mxu0 0.0
        %2577 = vmatpush1.msra.mxu0 0.0
        %2578 = vmatprep.subr.mxu0 0.0
        %2579 = vmatpush1.msra.mxu0 0.0
        %2580 = vmatprep.subr.mxu0 0.0
        %2581 = vmatpush1.msra.mxu0 0.0
        %2582 = vmatprep.subr.mxu0 0.0
        %2583 = vmatpush1.msra.mxu0 0.0
        %2584 = vmatprep.subr.mxu0 0.0
        %2585 = vmatpush1.msra.mxu0 0.0
        %2586 = vmatprep.subr.mxu0 0.0
        %2587 = vmatpush1.msra.mxu0 0.0
        %2588 = vmatprep.subr.mxu0 0.0
        %2589 = vmatpush1.msra.mxu0 0.0
        %2590 = vmatprep.subr.mxu0 0.0
        %2591 = vmatpush1.msra.mxu0 0.0
        %2592 = vmatprep.subr.mxu0 0.0
        %2593 = vmatpush1.msra.mxu0 0.0
        %2594 = vmatprep.subr.mxu0 0.0
        %2595 = vmatpush1.msra.mxu0 0.0
        %2596 = vmatprep.subr.mxu0 0.0
        %2597 = vmatpush1.msra.mxu0 0.0
        %2598 = vmatprep.subr.mxu0 0.0
        %2599 = vmatpush1.msra.mxu0 0.0
        %2600 = vmatprep.subr.mxu0 0.0
        %2601 = vmatpush1.msra.mxu0 0.0
        %2602 = vmatprep.subr.mxu0 0.0
        %2603 = vmatpush1.msra.mxu0 0.0
        %2604 = vmatprep.subr.mxu0 0.0
        %2605 = vmatpush1.msra.mxu0 0.0
        %2606 = vmatprep.subr.mxu0 0.0
        %2607 = vmatpush1.msra.mxu0 0.0
        %2608 = vmatprep.subr.mxu0 0.0
        %2609 = vmatpush1.msra.mxu0 0.0
        %2610 = vmatprep.subr.mxu0 0.0
        %2611 = vmatpush1.msra.mxu0 0.0
        %2612 = vmatprep.subr.mxu0 0.0
        %2613 = vmatpush1.msra.mxu0 0.0
        %2614 = vmatprep.subr.mxu0 0.0
        %2615 = vmatpush1.msra.mxu0 0.0
        %2616 = vmatprep.subr.mxu0 0.0
        %2617 = vmatpush1.msra.mxu0 0.0
        %2618 = vmatprep.subr.mxu0 0.0
        %2619 = vmatpush1.msra.mxu0 0.0
        %2620 = vmatprep.subr.mxu0 0.0
        %2621 = vmatpush1.msra.mxu0 0.0
        %2622 = vmatprep.subr.mxu0 0.0
        %2623 = vmatpush1.msra.mxu0 0.0
        %2624 = vmatprep.subr.mxu0 0.0
        %2625 = vmatpush1.msra.mxu0 0.0
        %2626 = vmatprep.subr.mxu0 0.0
        %2627 = vmatpush1.msra.mxu0 0.0
        %2628 = vmatprep.mubr.f32.mxu0 0.0
        %2629 = vmatmul.mubr.f32.gmra.mrb[0].mxu0 %v2034
        %v2630 = vpop.f32.mrb[0].mxu0
        %v2631 = vadd.f32 0.0, %v2630
        %v2632 = vpop.f32.mrb[0].mxu0
        %v2633 = vadd.f32 0.0, %v2632
        %2634 = vmatprep.mubr.f32.mxu0 0.0
        %2635 = vmatmul.mubr.f32.gmra.mrb[0].mxu0 %v2037
        %v2636 = vpop.f32.mrb[0].mxu0
        %v2637 = vadd.f32 0.0, %v2636
        %v2638 = vpop.f32.mrb[0].mxu0
        %v2639 = vadd.f32 0.0, %v2638
        %2640 = vmatprep.mubr.f32.mxu0 0.0
        %2641 = vmatmul.mubr.f32.gmra.mrb[0].mxu0 %v2040
        %v2642 = vpop.f32.mrb[0].mxu0
        %v2643 = vadd.f32 0.0, %v2642
        %v2644 = vpop.f32.mrb[0].mxu0
        %v2645 = vadd.f32 0.0, %v2644
        %2646 = vmatprep.mubr.f32.mxu0 0.0
        %2647 = vmatmul.mubr.f32.gmra.mrb[0].mxu0 %v2043
        %v2648 = vpop.f32.mrb[0].mxu0
        %v2649 = vadd.f32 0.0, %v2648
        %v2650 = vpop.f32.mrb[0].mxu0
        %v2651 = vadd.f32 0.0, %v2650
        %2652 = vmatprep.mubr.f32.mxu0 0.0
        %2653 = vmatmul.mubr.f32.gmra.mrb[0].mxu0 %v2046
        %v2654 = vpop.f32.mrb[0].mxu0
        %v2655 = vadd.f32 0.0, %v2654
        %v2656 = vpop.f32.mrb[0].mxu0
        %v2657 = vadd.f32 0.0, %v2656
        %2658 = vmatprep.mubr.f32.mxu0 0.0
        %2659 = vmatmul.mubr.f32.gmra.mrb[0].mxu0 %v2049
        %v2660 = vpop.f32.mrb[0].mxu0
        %v2661 = vadd.f32 0.0, %v2660
        %v2662 = vpop.f32.mrb[0].mxu0
        %v2663 = vadd.f32 0.0, %v2662
        %2664 = vmatprep.mubr.f32.mxu0 0.0
        %2665 = vmatmul.mubr.f32.gmra.mrb[0].mxu0 %v2052
        %v2666 = vpop.f32.mrb[0].mxu0
        %v2667 = vadd.f32 0.0, %v2666
        %v2668 = vpop.f32.mrb[0].mxu0
        %v2669 = vadd.f32 0.0, %v2668
        %2670 = vmatprep.mubr.f32.mxu0 0.0
        %2671 = vmatmul.mubr.f32.gmra.mrb[0].mxu0 %v2055
        %v2672 = vpop.f32.mrb[0].mxu0
        %v2673 = vadd.f32 0.0, %v2672
        %v2674 = vpop.f32.mrb[0].mxu0
        %v2675 = vadd.f32 0.0, %v2674
        %2676 = vmatprep.mubr.f32.mxu0 0.0
        %2677 = vmatmul.mubr.f32.gmra.mrb[0].mxu0 %v2058
        %v2678 = vpop.f32.mrb[0].mxu0
        %v2679 = vadd.f32 0.0, %v2678
        %v2680 = vpop.f32.mrb[0].mxu0
        %v2681 = vadd.f32 0.0, %v2680
        %2682 = vmatprep.mubr.f32.mxu0 0.0
        %2683 = vmatmul.mubr.f32.gmra.mrb[0].mxu0 %v2061
        %v2684 = vpop.f32.mrb[0].mxu0
        %v2685 = vadd.f32 0.0, %v2684
        %v2686 = vpop.f32.mrb[0].mxu0
        %v2687 = vadd.f32 0.0, %v2686
        %2688 = vmatprep.mubr.f32.mxu0 0.0
        %2689 = vmatmul.mubr.f32.gmra.mrb[0].mxu0 %v2064
        %v2690 = vpop.f32.mrb[0].mxu0
        %v2691 = vadd.f32 0.0, %v2690
        %v2692 = vpop.f32.mrb[0].mxu0
        %v2693 = vadd.f32 0.0, %v2692
        %2694 = vmatprep.mubr.f32.mxu0 0.0
        %2695 = vmatmul.mubr.f32.gmra.mrb[0].mxu0 %v2067
        %v2696 = vpop.f32.mrb[0].mxu0
        %v2697 = vadd.f32 0.0, %v2696
        %v2698 = vpop.f32.mrb[0].mxu0
        %v2699 = vadd.f32 0.0, %v2698
        %2700 = vmatprep.mubr.f32.mxu0 0.0
        %2701 = vmatmul.mubr.f32.gmra.mrb[0].mxu0 %v2070
        %v2702 = vpop.f32.mrb[0].mxu0
        %v2703 = vadd.f32 0.0, %v2702
        %v2704 = vpop.f32.mrb[0].mxu0
        %v2705 = vadd.f32 0.0, %v2704
        %2706 = vmatprep.mubr.f32.mxu0 0.0
        %2707 = vmatmul.mubr.f32.gmra.mrb[0].mxu0 %v2073
        %v2708 = vpop.f32.mrb[0].mxu0
        %v2709 = vadd.f32 0.0, %v2708
        %v2710 = vpop.f32.mrb[0].mxu0
        %v2711 = vadd.f32 0.0, %v2710
        %2712 = vmatprep.mubr.f32.mxu0 0.0
        %2713 = vmatmul.mubr.f32.gmra.mrb[0].mxu0 %v2076
        %v2714 = vpop.f32.mrb[0].mxu0
        %v2715 = vadd.f32 0.0, %v2714
        %v2716 = vpop.f32.mrb[0].mxu0
        %v2717 = vadd.f32 0.0, %v2716
        %2718 = vmatprep.mubr.f32.mxu0 0.0
        %2719 = vmatmul.mubr.f32.gmra.mrb[0].mxu0 %v2079
        %v2720 = vpop.f32.mrb[0].mxu0
        %v2721 = vadd.f32 0.0, %v2720
        %v2722 = vpop.f32.mrb[0].mxu0
        %v2723 = vadd.f32 0.0, %v2722
        %2724 = vdwg.mxu0
        %2725 = vmatprep.subr.mxu0 %v1324
        %2726 = vmatpush1.msra.mxu0 %v1220
        %2727 = vmatprep.subr.mxu0 0.0
        %2728 = vmatpush1.msra.mxu0 0.0
        %2729 = vmatprep.subr.mxu0 0.0
        %2730 = vmatpush1.msra.mxu0 0.0
        %2731 = vmatprep.subr.mxu0 0.0
        %2732 = vmatpush1.msra.mxu0 0.0
        %2733 = vmatprep.subr.mxu0 0.0
        %2734 = vmatpush1.msra.mxu0 0.0
        %2735 = vmatprep.subr.mxu0 0.0
        %2736 = vmatpush1.msra.mxu0 0.0
        %2737 = vmatprep.subr.mxu0 0.0
        %2738 = vmatpush1.msra.mxu0 0.0
        %2739 = vmatprep.subr.mxu0 0.0
        %2740 = vmatpush1.msra.mxu0 0.0
        %2741 = vmatprep.subr.mxu0 0.0
        %2742 = vmatpush1.msra.mxu0 0.0
        %2743 = vmatprep.subr.mxu0 0.0
        %2744 = vmatpush1.msra.mxu0 0.0
        %2745 = vmatprep.subr.mxu0 0.0
        %2746 = vmatpush1.msra.mxu0 0.0
        %2747 = vmatprep.subr.mxu0 0.0
        %2748 = vmatpush1.msra.mxu0 0.0
        %2749 = vmatprep.subr.mxu0 0.0
        %2750 = vmatpush1.msra.mxu0 0.0
        %2751 = vmatprep.subr.mxu0 0.0
        %2752 = vmatpush1.msra.mxu0 0.0
        %2753 = vmatprep.subr.mxu0 0.0
        %2754 = vmatpush1.msra.mxu0 0.0
        %2755 = vmatprep.subr.mxu0 0.0
        %2756 = vmatpush1.msra.mxu0 0.0
        %2757 = vmatprep.subr.mxu0 0.0
        %2758 = vmatpush1.msra.mxu0 0.0
        %2759 = vmatprep.subr.mxu0 0.0
        %2760 = vmatpush1.msra.mxu0 0.0
        %2761 = vmatprep.subr.mxu0 0.0
        %2762 = vmatpush1.msra.mxu0 0.0
        %2763 = vmatprep.subr.mxu0 0.0
        %2764 = vmatpush1.msra.mxu0 0.0
        %2765 = vmatprep.subr.mxu0 0.0
        %2766 = vmatpush1.msra.mxu0 0.0
        %2767 = vmatprep.subr.mxu0 0.0
        %2768 = vmatpush1.msra.mxu0 0.0
        %2769 = vmatprep.subr.mxu0 0.0
        %2770 = vmatpush1.msra.mxu0 0.0
        %2771 = vmatprep.subr.mxu0 0.0
        %2772 = vmatpush1.msra.mxu0 0.0
        %2773 = vmatprep.subr.mxu0 0.0
        %2774 = vmatpush1.msra.mxu0 0.0
        %2775 = vmatprep.subr.mxu0 0.0
        %2776 = vmatpush1.msra.mxu0 0.0
        %2777 = vmatprep.subr.mxu0 0.0
        %2778 = vmatpush1.msra.mxu0 0.0
        %2779 = vmatprep.subr.mxu0 0.0
        %2780 = vmatpush1.msra.mxu0 0.0
        %2781 = vmatprep.subr.mxu0 0.0
        %2782 = vmatpush1.msra.mxu0 0.0
        %2783 = vmatprep.subr.mxu0 0.0
        %2784 = vmatpush1.msra.mxu0 0.0
        %2785 = vmatprep.subr.mxu0 0.0
        %2786 = vmatpush1.msra.mxu0 0.0
        %2787 = vmatprep.subr.mxu0 0.0
        %2788 = vmatpush1.msra.mxu0 0.0
        %2789 = vmatprep.mubr.f32.mxu0 0.0
        %2790 = vmatmul.mubr.f32.gmra.mrb[0].mxu0 %v2034
        %v2791 = vpop.f32.mrb[0].mxu0
        %v2792 = vadd.f32 0.0, %v2791
        %v2793 = vpop.f32.mrb[0].mxu0
        %v2794 = vadd.f32 0.0, %v2793
        %2795 = vmatprep.mubr.f32.mxu0 0.0
        %2796 = vmatmul.mubr.f32.gmra.mrb[0].mxu0 %v2037
        %v2797 = vpop.f32.mrb[0].mxu0
        %v2798 = vadd.f32 0.0, %v2797
        %v2799 = vpop.f32.mrb[0].mxu0
        %v2800 = vadd.f32 0.0, %v2799
        %2801 = vmatprep.mubr.f32.mxu0 0.0
        %2802 = vmatmul.mubr.f32.gmra.mrb[0].mxu0 %v2040
        %v2803 = vpop.f32.mrb[0].mxu0
        %v2804 = vadd.f32 0.0, %v2803
        %v2805 = vpop.f32.mrb[0].mxu0
        %v2806 = vadd.f32 0.0, %v2805
        %2807 = vmatprep.mubr.f32.mxu0 0.0
        %2808 = vmatmul.mubr.f32.gmra.mrb[0].mxu0 %v2043
        %v2809 = vpop.f32.mrb[0].mxu0
        %v2810 = vadd.f32 0.0, %v2809
        %v2811 = vpop.f32.mrb[0].mxu0
        %v2812 = vadd.f32 0.0, %v2811
        %2813 = vmatprep.mubr.f32.mxu0 0.0
        %2814 = vmatmul.mubr.f32.gmra.mrb[0].mxu0 %v2046
        %v2815 = vpop.f32.mrb[0].mxu0
        %v2816 = vadd.f32 0.0, %v2815
        %v2817 = vpop.f32.mrb[0].mxu0
        %v2818 = vadd.f32 0.0, %v2817
        %2819 = vmatprep.mubr.f32.mxu0 0.0
        %2820 = vmatmul.mubr.f32.gmra.mrb[0].mxu0 %v2049
        %v2821 = vpop.f32.mrb[0].mxu0
        %v2822 = vadd.f32 0.0, %v2821
        %v2823 = vpop.f32.mrb[0].mxu0
        %v2824 = vadd.f32 0.0, %v2823
        %2825 = vmatprep.mubr.f32.mxu0 0.0
        %2826 = vmatmul.mubr.f32.gmra.mrb[0].mxu0 %v2052
        %v2827 = vpop.f32.mrb[0].mxu0
        %v2828 = vadd.f32 0.0, %v2827
        %v2829 = vpop.f32.mrb[0].mxu0
        %v2830 = vadd.f32 0.0, %v2829
        %2831 = vmatprep.mubr.f32.mxu0 0.0
        %2832 = vmatmul.mubr.f32.gmra.mrb[0].mxu0 %v2055
        %v2833 = vpop.f32.mrb[0].mxu0
        %v2834 = vadd.f32 0.0, %v2833
        %v2835 = vpop.f32.mrb[0].mxu0
        %v2836 = vadd.f32 0.0, %v2835
        %2837 = vmatprep.mubr.f32.mxu0 0.0
        %2838 = vmatmul.mubr.f32.gmra.mrb[0].mxu0 %v2058
        %v2839 = vpop.f32.mrb[0].mxu0
        %v2840 = vadd.f32 0.0, %v2839
        %v2841 = vpop.f32.mrb[0].mxu0
        %v2842 = vadd.f32 0.0, %v2841
        %2843 = vmatprep.mubr.f32.mxu0 0.0
        %2844 = vmatmul.mubr.f32.gmra.mrb[0].mxu0 %v2061
        %v2845 = vpop.f32.mrb[0].mxu0
        %v2846 = vadd.f32 0.0, %v2845
        %v2847 = vpop.f32.mrb[0].mxu0
        %v2848 = vadd.f32 0.0, %v2847
        %2849 = vmatprep.mubr.f32.mxu0 0.0
        %2850 = vmatmul.mubr.f32.gmra.mrb[0].mxu0 %v2064
        %v2851 = vpop.f32.mrb[0].mxu0
        %v2852 = vadd.f32 0.0, %v2851
        %v2853 = vpop.f32.mrb[0].mxu0
        %v2854 = vadd.f32 0.0, %v2853
        %2855 = vmatprep.mubr.f32.mxu0 0.0
        %2856 = vmatmul.mubr.f32.gmra.mrb[0].mxu0 %v2067
        %v2857 = vpop.f32.mrb[0].mxu0
        %v2858 = vadd.f32 0.0, %v2857
        %v2859 = vpop.f32.mrb[0].mxu0
        %v2860 = vadd.f32 0.0, %v2859
        %2861 = vmatprep.mubr.f32.mxu0 0.0
        %2862 = vmatmul.mubr.f32.gmra.mrb[0].mxu0 %v2070
        %v2863 = vpop.f32.mrb[0].mxu0
        %v2864 = vadd.f32 0.0, %v2863
        %v2865 = vpop.f32.mrb[0].mxu0
        %v2866 = vadd.f32 0.0, %v2865
        %2867 = vmatprep.mubr.f32.mxu0 0.0
        %2868 = vmatmul.mubr.f32.gmra.mrb[0].mxu0 %v2073
        %v2869 = vpop.f32.mrb[0].mxu0
        %v2870 = vadd.f32 0.0, %v2869
        %v2871 = vpop.f32.mrb[0].mxu0
        %v2872 = vadd.f32 0.0, %v2871
        %2873 = vmatprep.mubr.f32.mxu0 0.0
        %2874 = vmatmul.mubr.f32.gmra.mrb[0].mxu0 %v2076
        %v2875 = vpop.f32.mrb[0].mxu0
        %v2876 = vadd.f32 0.0, %v2875
        %v2877 = vpop.f32.mrb[0].mxu0
        %v2878 = vadd.f32 0.0, %v2877
        %2879 = vmatprep.mubr.f32.mxu0 0.0
        %2880 = vmatmul.mubr.f32.gmra.mrb[0].mxu0 %v2079
        %v2881 = vpop.f32.mrb[0].mxu0
        %v2882 = vadd.f32 0.0, %v2881
        %v2883 = vpop.f32.mrb[0].mxu0
        %v2884 = vadd.f32 0.0, %v2883
        %2885 = vdwg.mxu0
        %2886 = vmatprep.subr.mxu0 %v1532
        %2887 = vmatpush1.msra.mxu0 %v1428
        %2888 = vmatprep.subr.mxu0 0.0
        %2889 = vmatpush1.msra.mxu0 0.0
        %2890 = vmatprep.subr.mxu0 0.0
        %2891 = vmatpush1.msra.mxu0 0.0
        %2892 = vmatprep.subr.mxu0 0.0
        %2893 = vmatpush1.msra.mxu0 0.0
        %2894 = vmatprep.subr.mxu0 0.0
        %2895 = vmatpush1.msra.mxu0 0.0
        %2896 = vmatprep.subr.mxu0 0.0
        %2897 = vmatpush1.msra.mxu0 0.0
        %2898 = vmatprep.subr.mxu0 0.0
        %2899 = vmatpush1.msra.mxu0 0.0
        %2900 = vmatprep.subr.mxu0 0.0
        %2901 = vmatpush1.msra.mxu0 0.0
        %2902 = vmatprep.subr.mxu0 0.0
        %2903 = vmatpush1.msra.mxu0 0.0
        %2904 = vmatprep.subr.mxu0 0.0
        %2905 = vmatpush1.msra.mxu0 0.0
        %2906 = vmatprep.subr.mxu0 0.0
        %2907 = vmatpush1.msra.mxu0 0.0
        %2908 = vmatprep.subr.mxu0 0.0
        %2909 = vmatpush1.msra.mxu0 0.0
        %2910 = vmatprep.subr.mxu0 0.0
        %2911 = vmatpush1.msra.mxu0 0.0
        %2912 = vmatprep.subr.mxu0 0.0
        %2913 = vmatpush1.msra.mxu0 0.0
        %2914 = vmatprep.subr.mxu0 0.0
        %2915 = vmatpush1.msra.mxu0 0.0
        %2916 = vmatprep.subr.mxu0 0.0
        %2917 = vmatpush1.msra.mxu0 0.0
        %2918 = vmatprep.subr.mxu0 0.0
        %2919 = vmatpush1.msra.mxu0 0.0
        %2920 = vmatprep.subr.mxu0 0.0
        %2921 = vmatpush1.msra.mxu0 0.0
        %2922 = vmatprep.subr.mxu0 0.0
        %2923 = vmatpush1.msra.mxu0 0.0
        %2924 = vmatprep.subr.mxu0 0.0
        %2925 = vmatpush1.msra.mxu0 0.0
        %2926 = vmatprep.subr.mxu0 0.0
        %2927 = vmatpush1.msra.mxu0 0.0
        %2928 = vmatprep.subr.mxu0 0.0
        %2929 = vmatpush1.msra.mxu0 0.0
        %2930 = vmatprep.subr.mxu0 0.0
        %2931 = vmatpush1.msra.mxu0 0.0
        %2932 = vmatprep.subr.mxu0 0.0
        %2933 = vmatpush1.msra.mxu0 0.0
        %2934 = vmatprep.subr.mxu0 0.0
        %2935 = vmatpush1.msra.mxu0 0.0
        %2936 = vmatprep.subr.mxu0 0.0
        %2937 = vmatpush1.msra.mxu0 0.0
        %2938 = vmatprep.subr.mxu0 0.0
        %2939 = vmatpush1.msra.mxu0 0.0
        %2940 = vmatprep.subr.mxu0 0.0
        %2941 = vmatpush1.msra.mxu0 0.0
        %2942 = vmatprep.subr.mxu0 0.0
        %2943 = vmatpush1.msra.mxu0 0.0
        %2944 = vmatprep.subr.mxu0 0.0
        %2945 = vmatpush1.msra.mxu0 0.0
        %2946 = vmatprep.subr.mxu0 0.0
        %2947 = vmatpush1.msra.mxu0 0.0
        %2948 = vmatprep.subr.mxu0 0.0
        %2949 = vmatpush1.msra.mxu0 0.0
        %2950 = vmatprep.mubr.f32.mxu0 0.0
        %2951 = vmatmul.mubr.f32.gmra.mrb[0].mxu0 %v2034
        %v2952 = vpop.f32.mrb[0].mxu0
        %v2953 = vadd.f32 0.0, %v2952
        %v2954 = vpop.f32.mrb[0].mxu0
        %v2955 = vadd.f32 0.0, %v2954
        %2956 = vmatprep.mubr.f32.mxu0 0.0
        %2957 = vmatmul.mubr.f32.gmra.mrb[0].mxu0 %v2037
        %v2958 = vpop.f32.mrb[0].mxu0
        %v2959 = vadd.f32 0.0, %v2958
        %v2960 = vpop.f32.mrb[0].mxu0
        %v2961 = vadd.f32 0.0, %v2960
        %2962 = vmatprep.mubr.f32.mxu0 0.0
        %2963 = vmatmul.mubr.f32.gmra.mrb[0].mxu0 %v2040
        %v2964 = vpop.f32.mrb[0].mxu0
        %v2965 = vadd.f32 0.0, %v2964
        %v2966 = vpop.f32.mrb[0].mxu0
        %v2967 = vadd.f32 0.0, %v2966
        %2968 = vmatprep.mubr.f32.mxu0 0.0
        %2969 = vmatmul.mubr.f32.gmra.mrb[0].mxu0 %v2043
        %v2970 = vpop.f32.mrb[0].mxu0
        %v2971 = vadd.f32 0.0, %v2970
        %v2972 = vpop.f32.mrb[0].mxu0
        %v2973 = vadd.f32 0.0, %v2972
        %2974 = vmatprep.mubr.f32.mxu0 0.0
        %2975 = vmatmul.mubr.f32.gmra.mrb[0].mxu0 %v2046
        %v2976 = vpop.f32.mrb[0].mxu0
        %v2977 = vadd.f32 0.0, %v2976
        %v2978 = vpop.f32.mrb[0].mxu0
        %v2979 = vadd.f32 0.0, %v2978
        %2980 = vmatprep.mubr.f32.mxu0 0.0
        %2981 = vmatmul.mubr.f32.gmra.mrb[0].mxu0 %v2049
        %v2982 = vpop.f32.mrb[0].mxu0
        %v2983 = vadd.f32 0.0, %v2982
        %v2984 = vpop.f32.mrb[0].mxu0
        %v2985 = vadd.f32 0.0, %v2984
        %2986 = vmatprep.mubr.f32.mxu0 0.0
        %2987 = vmatmul.mubr.f32.gmra.mrb[0].mxu0 %v2052
        %v2988 = vpop.f32.mrb[0].mxu0
        %v2989 = vadd.f32 0.0, %v2988
        %v2990 = vpop.f32.mrb[0].mxu0
        %v2991 = vadd.f32 0.0, %v2990
        %2992 = vmatprep.mubr.f32.mxu0 0.0
        %2993 = vmatmul.mubr.f32.gmra.mrb[0].mxu0 %v2055
        %v2994 = vpop.f32.mrb[0].mxu0
        %v2995 = vadd.f32 0.0, %v2994
        %v2996 = vpop.f32.mrb[0].mxu0
        %v2997 = vadd.f32 0.0, %v2996
        %2998 = vmatprep.mubr.f32.mxu0 0.0
        %2999 = vmatmul.mubr.f32.gmra.mrb[0].mxu0 %v2058
        %v3000 = vpop.f32.mrb[0].mxu0
        %v3001 = vadd.f32 0.0, %v3000
        %v3002 = vpop.f32.mrb[0].mxu0
        %v3003 = vadd.f32 0.0, %v3002
        %3004 = vmatprep.mubr.f32.mxu0 0.0
        %3005 = vmatmul.mubr.f32.gmra.mrb[0].mxu0 %v2061
        %v3006 = vpop.f32.mrb[0].mxu0
        %v3007 = vadd.f32 0.0, %v3006
        %v3008 = vpop.f32.mrb[0].mxu0
        %v3009 = vadd.f32 0.0, %v3008
        %3010 = vmatprep.mubr.f32.mxu0 0.0
        %3011 = vmatmul.mubr.f32.gmra.mrb[0].mxu0 %v2064
        %v3012 = vpop.f32.mrb[0].mxu0
        %v3013 = vadd.f32 0.0, %v3012
        %v3014 = vpop.f32.mrb[0].mxu0
        %v3015 = vadd.f32 0.0, %v3014
        %3016 = vmatprep.mubr.f32.mxu0 0.0
        %3017 = vmatmul.mubr.f32.gmra.mrb[0].mxu0 %v2067
        %v3018 = vpop.f32.mrb[0].mxu0
        %v3019 = vadd.f32 0.0, %v3018
        %v3020 = vpop.f32.mrb[0].mxu0
        %v3021 = vadd.f32 0.0, %v3020
        %3022 = vmatprep.mubr.f32.mxu0 0.0
        %3023 = vmatmul.mubr.f32.gmra.mrb[0].mxu0 %v2070
        %v3024 = vpop.f32.mrb[0].mxu0
        %v3025 = vadd.f32 0.0, %v3024
        %v3026 = vpop.f32.mrb[0].mxu0
        %v3027 = vadd.f32 0.0, %v3026
        %3028 = vmatprep.mubr.f32.mxu0 0.0
        %3029 = vmatmul.mubr.f32.gmra.mrb[0].mxu0 %v2073
        %v3030 = vpop.f32.mrb[0].mxu0
        %v3031 = vadd.f32 0.0, %v3030
        %v3032 = vpop.f32.mrb[0].mxu0
        %v3033 = vadd.f32 0.0, %v3032
        %3034 = vmatprep.mubr.f32.mxu0 0.0
        %3035 = vmatmul.mubr.f32.gmra.mrb[0].mxu0 %v2076
        %v3036 = vpop.f32.mrb[0].mxu0
        %v3037 = vadd.f32 0.0, %v3036
        %v3038 = vpop.f32.mrb[0].mxu0
        %v3039 = vadd.f32 0.0, %v3038
        %3040 = vmatprep.mubr.f32.mxu0 0.0
        %3041 = vmatmul.mubr.f32.gmra.mrb[0].mxu0 %v2079
        %v3042 = vpop.f32.mrb[0].mxu0
        %v3043 = vadd.f32 0.0, %v3042
        %v3044 = vpop.f32.mrb[0].mxu0
        %v3045 = vadd.f32 0.0, %v3044
        %3046 = vdwg.mxu0
        %3047 = vmatprep.subr.mxu0 %v1740
        %3048 = vmatpush1.msra.mxu0 %v1636
        %3049 = vmatprep.subr.mxu0 0.0
        %3050 = vmatpush1.msra.mxu0 0.0
        %3051 = vmatprep.subr.mxu0 0.0
        %3052 = vmatpush1.msra.mxu0 0.0
        %3053 = vmatprep.subr.mxu0 0.0
        %3054 = vmatpush1.msra.mxu0 0.0
        %3055 = vmatprep.subr.mxu0 0.0
        %3056 = vmatpush1.msra.mxu0 0.0
        %3057 = vmatprep.subr.mxu0 0.0
        %3058 = vmatpush1.msra.mxu0 0.0
        %3059 = vmatprep.subr.mxu0 0.0
        %3060 = vmatpush1.msra.mxu0 0.0
        %3061 = vmatprep.subr.mxu0 0.0
        %3062 = vmatpush1.msra.mxu0 0.0
        %3063 = vmatprep.subr.mxu0 0.0
        %3064 = vmatpush1.msra.mxu0 0.0
        %3065 = vmatprep.subr.mxu0 0.0
        %3066 = vmatpush1.msra.mxu0 0.0
        %3067 = vmatprep.subr.mxu0 0.0
        %3068 = vmatpush1.msra.mxu0 0.0
        %3069 = vmatprep.subr.mxu0 0.0
        %3070 = vmatpush1.msra.mxu0 0.0
        %3071 = vmatprep.subr.mxu0 0.0
        %3072 = vmatpush1.msra.mxu0 0.0
        %3073 = vmatprep.subr.mxu0 0.0
        %3074 = vmatpush1.msra.mxu0 0.0
        %3075 = vmatprep.subr.mxu0 0.0
        %3076 = vmatpush1.msra.mxu0 0.0
        %3077 = vmatprep.subr.mxu0 0.0
        %3078 = vmatpush1.msra.mxu0 0.0
        %3079 = vmatprep.subr.mxu0 0.0
        %3080 = vmatpush1.msra.mxu0 0.0
        %3081 = vmatprep.subr.mxu0 0.0
        %3082 = vmatpush1.msra.mxu0 0.0
        %3083 = vmatprep.subr.mxu0 0.0
        %3084 = vmatpush1.msra.mxu0 0.0
        %3085 = vmatprep.subr.mxu0 0.0
        %3086 = vmatpush1.msra.mxu0 0.0
        %3087 = vmatprep.subr.mxu0 0.0
        %3088 = vmatpush1.msra.mxu0 0.0
        %3089 = vmatprep.subr.mxu0 0.0
        %3090 = vmatpush1.msra.mxu0 0.0
        %3091 = vmatprep.subr.mxu0 0.0
        %3092 = vmatpush1.msra.mxu0 0.0
        %3093 = vmatprep.subr.mxu0 0.0
        %3094 = vmatpush1.msra.mxu0 0.0
        %3095 = vmatprep.subr.mxu0 0.0
        %3096 = vmatpush1.msra.mxu0 0.0
        %3097 = vmatprep.subr.mxu0 0.0
        %3098 = vmatpush1.msra.mxu0 0.0
        %3099 = vmatprep.subr.mxu0 0.0
        %3100 = vmatpush1.msra.mxu0 0.0
        %3101 = vmatprep.subr.mxu0 0.0
        %3102 = vmatpush1.msra.mxu0 0.0
        %3103 = vmatprep.subr.mxu0 0.0
        %3104 = vmatpush1.msra.mxu0 0.0
        %3105 = vmatprep.subr.mxu0 0.0
        %3106 = vmatpush1.msra.mxu0 0.0
        %3107 = vmatprep.subr.mxu0 0.0
        %3108 = vmatpush1.msra.mxu0 0.0
        %3109 = vmatprep.subr.mxu0 0.0
        %3110 = vmatpush1.msra.mxu0 0.0
        %3111 = vmatprep.mubr.f32.mxu0 0.0
        %3112 = vmatmul.mubr.f32.gmra.mrb[0].mxu0 %v2034
        %v3113 = vpop.f32.mrb[0].mxu0
        %v3114 = vadd.f32 0.0, %v3113
        %v3115 = vpop.f32.mrb[0].mxu0
        %v3116 = vadd.f32 0.0, %v3115
        %3117 = vmatprep.mubr.f32.mxu0 0.0
        %3118 = vmatmul.mubr.f32.gmra.mrb[0].mxu0 %v2037
        %v3119 = vpop.f32.mrb[0].mxu0
        %v3120 = vadd.f32 0.0, %v3119
        %v3121 = vpop.f32.mrb[0].mxu0
        %v3122 = vadd.f32 0.0, %v3121
        %3123 = vmatprep.mubr.f32.mxu0 0.0
        %3124 = vmatmul.mubr.f32.gmra.mrb[0].mxu0 %v2040
        %v3125 = vpop.f32.mrb[0].mxu0
        %v3126 = vadd.f32 0.0, %v3125
        %v3127 = vpop.f32.mrb[0].mxu0
        %v3128 = vadd.f32 0.0, %v3127
        %3129 = vmatprep.mubr.f32.mxu0 0.0
        %3130 = vmatmul.mubr.f32.gmra.mrb[0].mxu0 %v2043
        %v3131 = vpop.f32.mrb[0].mxu0
        %v3132 = vadd.f32 0.0, %v3131
        %v3133 = vpop.f32.mrb[0].mxu0
        %v3134 = vadd.f32 0.0, %v3133
        %3135 = vmatprep.mubr.f32.mxu0 0.0
        %3136 = vmatmul.mubr.f32.gmra.mrb[0].mxu0 %v2046
        %v3137 = vpop.f32.mrb[0].mxu0
        %v3138 = vadd.f32 0.0, %v3137
        %v3139 = vpop.f32.mrb[0].mxu0
        %v3140 = vadd.f32 0.0, %v3139
        %3141 = vmatprep.mubr.f32.mxu0 0.0
        %3142 = vmatmul.mubr.f32.gmra.mrb[0].mxu0 %v2049
        %v3143 = vpop.f32.mrb[0].mxu0
        %v3144 = vadd.f32 0.0, %v3143
        %v3145 = vpop.f32.mrb[0].mxu0
        %v3146 = vadd.f32 0.0, %v3145
        %3147 = vmatprep.mubr.f32.mxu0 0.0
        %3148 = vmatmul.mubr.f32.gmra.mrb[0].mxu0 %v2052
        %v3149 = vpop.f32.mrb[0].mxu0
        %v3150 = vadd.f32 0.0, %v3149
        %v3151 = vpop.f32.mrb[0].mxu0
        %v3152 = vadd.f32 0.0, %v3151
        %3153 = vmatprep.mubr.f32.mxu0 0.0
        %3154 = vmatmul.mubr.f32.gmra.mrb[0].mxu0 %v2055
        %v3155 = vpop.f32.mrb[0].mxu0
        %v3156 = vadd.f32 0.0, %v3155
        %v3157 = vpop.f32.mrb[0].mxu0
        %v3158 = vadd.f32 0.0, %v3157
        %3159 = vmatprep.mubr.f32.mxu0 0.0
        %3160 = vmatmul.mubr.f32.gmra.mrb[0].mxu0 %v2058
        %v3161 = vpop.f32.mrb[0].mxu0
        %v3162 = vadd.f32 0.0, %v3161
        %v3163 = vpop.f32.mrb[0].mxu0
        %v3164 = vadd.f32 0.0, %v3163
        %3165 = vmatprep.mubr.f32.mxu0 0.0
        %3166 = vmatmul.mubr.f32.gmra.mrb[0].mxu0 %v2061
        %v3167 = vpop.f32.mrb[0].mxu0
        %v3168 = vadd.f32 0.0, %v3167
        %v3169 = vpop.f32.mrb[0].mxu0
        %v3170 = vadd.f32 0.0, %v3169
        %3171 = vmatprep.mubr.f32.mxu0 0.0
        %3172 = vmatmul.mubr.f32.gmra.mrb[0].mxu0 %v2064
        %v3173 = vpop.f32.mrb[0].mxu0
        %v3174 = vadd.f32 0.0, %v3173
        %v3175 = vpop.f32.mrb[0].mxu0
        %v3176 = vadd.f32 0.0, %v3175
        %3177 = vmatprep.mubr.f32.mxu0 0.0
        %3178 = vmatmul.mubr.f32.gmra.mrb[0].mxu0 %v2067
        %v3179 = vpop.f32.mrb[0].mxu0
        %v3180 = vadd.f32 0.0, %v3179
        %v3181 = vpop.f32.mrb[0].mxu0
        %v3182 = vadd.f32 0.0, %v3181
        %3183 = vmatprep.mubr.f32.mxu0 0.0
        %3184 = vmatmul.mubr.f32.gmra.mrb[0].mxu0 %v2070
        %v3185 = vpop.f32.mrb[0].mxu0
        %v3186 = vadd.f32 0.0, %v3185
        %v3187 = vpop.f32.mrb[0].mxu0
        %v3188 = vadd.f32 0.0, %v3187
        %3189 = vmatprep.mubr.f32.mxu0 0.0
        %3190 = vmatmul.mubr.f32.gmra.mrb[0].mxu0 %v2073
        %v3191 = vpop.f32.mrb[0].mxu0
        %v3192 = vadd.f32 0.0, %v3191
        %v3193 = vpop.f32.mrb[0].mxu0
        %v3194 = vadd.f32 0.0, %v3193
        %3195 = vmatprep.mubr.f32.mxu0 0.0
        %3196 = vmatmul.mubr.f32.gmra.mrb[0].mxu0 %v2076
        %v3197 = vpop.f32.mrb[0].mxu0
        %v3198 = vadd.f32 0.0, %v3197
        %v3199 = vpop.f32.mrb[0].mxu0
        %v3200 = vadd.f32 0.0, %v3199
        %3201 = vmatprep.mubr.f32.mxu0 0.0
        %3202 = vmatmul.mubr.f32.gmra.mrb[0].mxu0 %v2079
        %v3203 = vpop.f32.mrb[0].mxu0
        %v3204 = vadd.f32 0.0, %v3203
        %v3205 = vpop.f32.mrb[0].mxu0
        %v3206 = vadd.f32 0.0, %v3205
        %3207 = vdwg.mxu0
        %3208 = vmatprep.subr.mxu0 %v1948
        %3209 = vmatpush1.msra.mxu0 %v1844
        %3210 = vmatprep.subr.mxu0 0.0
        %3211 = vmatpush1.msra.mxu0 0.0
        %3212 = vmatprep.subr.mxu0 0.0
        %3213 = vmatpush1.msra.mxu0 0.0
        %3214 = vmatprep.subr.mxu0 0.0
        %3215 = vmatpush1.msra.mxu0 0.0
        %3216 = vmatprep.subr.mxu0 0.0
        %3217 = vmatpush1.msra.mxu0 0.0
        %3218 = vmatprep.subr.mxu0 0.0
        %3219 = vmatpush1.msra.mxu0 0.0
        %3220 = vmatprep.subr.mxu0 0.0
        %3221 = vmatpush1.msra.mxu0 0.0
        %3222 = vmatprep.subr.mxu0 0.0
        %3223 = vmatpush1.msra.mxu0 0.0
        %3224 = vmatprep.subr.mxu0 0.0
        %3225 = vmatpush1.msra.mxu0 0.0
        %3226 = vmatprep.subr.mxu0 0.0
        %3227 = vmatpush1.msra.mxu0 0.0
        %3228 = vmatprep.subr.mxu0 0.0
        %3229 = vmatpush1.msra.mxu0 0.0
        %3230 = vmatprep.subr.mxu0 0.0
        %3231 = vmatpush1.msra.mxu0 0.0
        %3232 = vmatprep.subr.mxu0 0.0
        %3233 = vmatpush1.msra.mxu0 0.0
        %3234 = vmatprep.subr.mxu0 0.0
        %3235 = vmatpush1.msra.mxu0 0.0
        %3236 = vmatprep.subr.mxu0 0.0
        %3237 = vmatpush1.msra.mxu0 0.0
        %3238 = vmatprep.subr.mxu0 0.0
        %3239 = vmatpush1.msra.mxu0 0.0
        %3240 = vmatprep.subr.mxu0 0.0
        %3241 = vmatpush1.msra.mxu0 0.0
        %3242 = vmatprep.subr.mxu0 0.0
        %3243 = vmatpush1.msra.mxu0 0.0
        %3244 = vmatprep.subr.mxu0 0.0
        %3245 = vmatpush1.msra.mxu0 0.0
        %3246 = vmatprep.subr.mxu0 0.0
        %3247 = vmatpush1.msra.mxu0 0.0
        %3248 = vmatprep.subr.mxu0 0.0
        %3249 = vmatpush1.msra.mxu0 0.0
        %3250 = vmatprep.subr.mxu0 0.0
        %3251 = vmatpush1.msra.mxu0 0.0
        %3252 = vmatprep.subr.mxu0 0.0
        %3253 = vmatpush1.msra.mxu0 0.0
        %3254 = vmatprep.subr.mxu0 0.0
        %3255 = vmatpush1.msra.mxu0 0.0
        %3256 = vmatprep.subr.mxu0 0.0
        %3257 = vmatpush1.msra.mxu0 0.0
        %3258 = vmatprep.subr.mxu0 0.0
        %3259 = vmatpush1.msra.mxu0 0.0
        %3260 = vmatprep.subr.mxu0 0.0
        %3261 = vmatpush1.msra.mxu0 0.0
        %3262 = vmatprep.subr.mxu0 0.0
        %3263 = vmatpush1.msra.mxu0 0.0
        %3264 = vmatprep.subr.mxu0 0.0
        %3265 = vmatpush1.msra.mxu0 0.0
        %3266 = vmatprep.subr.mxu0 0.0
        %3267 = vmatpush1.msra.mxu0 0.0
        %3268 = vmatprep.subr.mxu0 0.0
        %3269 = vmatpush1.msra.mxu0 0.0
        %3270 = vmatprep.subr.mxu0 0.0
        %3271 = vmatpush1.msra.mxu0 0.0
        %3272 = vmatprep.mubr.f32.mxu0 0.0
        %3273 = vmatmul.mubr.f32.gmra.mrb[0].mxu0 %v2034
        %v3274 = vpop.f32.mrb[0].mxu0
        %v3275 = vadd.f32 0.0, %v3274
        %v3276 = vpop.f32.mrb[0].mxu0
        %v3277 = vadd.f32 0.0, %v3276
        %3278 = vmatprep.mubr.f32.mxu0 0.0
        %3279 = vmatmul.mubr.f32.gmra.mrb[0].mxu0 %v2037
        %v3280 = vpop.f32.mrb[0].mxu0
        %v3281 = vadd.f32 0.0, %v3280
        %v3282 = vpop.f32.mrb[0].mxu0
        %v3283 = vadd.f32 0.0, %v3282
        %3284 = vmatprep.mubr.f32.mxu0 0.0
        %3285 = vmatmul.mubr.f32.gmra.mrb[0].mxu0 %v2040
        %v3286 = vpop.f32.mrb[0].mxu0
        %v3287 = vadd.f32 0.0, %v3286
        %v3288 = vpop.f32.mrb[0].mxu0
        %v3289 = vadd.f32 0.0, %v3288
        %3290 = vmatprep.mubr.f32.mxu0 0.0
        %3291 = vmatmul.mubr.f32.gmra.mrb[0].mxu0 %v2043
        %v3292 = vpop.f32.mrb[0].mxu0
        %v3293 = vadd.f32 0.0, %v3292
        %v3294 = vpop.f32.mrb[0].mxu0
        %v3295 = vadd.f32 0.0, %v3294
        %3296 = vmatprep.mubr.f32.mxu0 0.0
        %3297 = vmatmul.mubr.f32.gmra.mrb[0].mxu0 %v2046
        %v3298 = vpop.f32.mrb[0].mxu0
        %v3299 = vadd.f32 0.0, %v3298
        %v3300 = vpop.f32.mrb[0].mxu0
        %v3301 = vadd.f32 0.0, %v3300
        %3302 = vmatprep.mubr.f32.mxu0 0.0
        %3303 = vmatmul.mubr.f32.gmra.mrb[0].mxu0 %v2049
        %v3304 = vpop.f32.mrb[0].mxu0
        %v3305 = vadd.f32 0.0, %v3304
        %v3306 = vpop.f32.mrb[0].mxu0
        %v3307 = vadd.f32 0.0, %v3306
        %3308 = vmatprep.mubr.f32.mxu0 0.0
        %3309 = vmatmul.mubr.f32.gmra.mrb[0].mxu0 %v2052
        %v3310 = vpop.f32.mrb[0].mxu0
        %v3311 = vadd.f32 0.0, %v3310
        %v3312 = vpop.f32.mrb[0].mxu0
        %v3313 = vadd.f32 0.0, %v3312
        %3314 = vmatprep.mubr.f32.mxu0 0.0
        %3315 = vmatmul.mubr.f32.gmra.mrb[0].mxu0 %v2055
        %v3316 = vpop.f32.mrb[0].mxu0
        %v3317 = vadd.f32 0.0, %v3316
        %v3318 = vpop.f32.mrb[0].mxu0
        %v3319 = vadd.f32 0.0, %v3318
        %3320 = vmatprep.mubr.f32.mxu0 0.0
        %3321 = vmatmul.mubr.f32.gmra.mrb[0].mxu0 %v2058
        %v3322 = vpop.f32.mrb[0].mxu0
        %v3323 = vadd.f32 0.0, %v3322
        %v3324 = vpop.f32.mrb[0].mxu0
        %v3325 = vadd.f32 0.0, %v3324
        %3326 = vmatprep.mubr.f32.mxu0 0.0
        %3327 = vmatmul.mubr.f32.gmra.mrb[0].mxu0 %v2061
        %v3328 = vpop.f32.mrb[0].mxu0
        %v3329 = vadd.f32 0.0, %v3328
        %v3330 = vpop.f32.mrb[0].mxu0
        %v3331 = vadd.f32 0.0, %v3330
        %3332 = vmatprep.mubr.f32.mxu0 0.0
        %3333 = vmatmul.mubr.f32.gmra.mrb[0].mxu0 %v2064
        %v3334 = vpop.f32.mrb[0].mxu0
        %v3335 = vadd.f32 0.0, %v3334
        %v3336 = vpop.f32.mrb[0].mxu0
        %v3337 = vadd.f32 0.0, %v3336
        %3338 = vmatprep.mubr.f32.mxu0 0.0
        %3339 = vmatmul.mubr.f32.gmra.mrb[0].mxu0 %v2067
        %v3340 = vpop.f32.mrb[0].mxu0
        %v3341 = vadd.f32 0.0, %v3340
        %v3342 = vpop.f32.mrb[0].mxu0
        %v3343 = vadd.f32 0.0, %v3342
        %3344 = vmatprep.mubr.f32.mxu0 0.0
        %3345 = vmatmul.mubr.f32.gmra.mrb[0].mxu0 %v2070
        %v3346 = vpop.f32.mrb[0].mxu0
        %v3347 = vadd.f32 0.0, %v3346
        %v3348 = vpop.f32.mrb[0].mxu0
        %v3349 = vadd.f32 0.0, %v3348
        %3350 = vmatprep.mubr.f32.mxu0 0.0
        %3351 = vmatmul.mubr.f32.gmra.mrb[0].mxu0 %v2073
        %v3352 = vpop.f32.mrb[0].mxu0
        %v3353 = vadd.f32 0.0, %v3352
        %v3354 = vpop.f32.mrb[0].mxu0
        %v3355 = vadd.f32 0.0, %v3354
        %3356 = vmatprep.mubr.f32.mxu0 0.0
        %3357 = vmatmul.mubr.f32.gmra.mrb[0].mxu0 %v2076
        %v3358 = vpop.f32.mrb[0].mxu0
        %v3359 = vadd.f32 0.0, %v3358
        %v3360 = vpop.f32.mrb[0].mxu0
        %v3361 = vadd.f32 0.0, %v3360
        %3362 = vmatprep.mubr.f32.mxu0 0.0
        %3363 = vmatmul.mubr.f32.gmra.mrb[0].mxu0 %v2079
        %v3364 = vpop.f32.mrb[0].mxu0
        %v3365 = vadd.f32 0.0, %v3364
        %v3366 = vpop.f32.mrb[0].mxu0
        %v3367 = vadd.f32 0.0, %v3366
        %3368 = vdwg.mxu0
        %v3369 = vshra.s32 %v1950, 3
        %v3370 = vshra.s32 %v1951, 3
        %v3371 = vshra.s32 %v1952, 3
        %v3372 = vshra.s32 %v1953, 3
        %v3373 = vshra.s32 %v1954, 3
        %v3374 = vshra.s32 %v1955, 3
        %v3375 = vshra.s32 %v1956, 3
        %v3376 = vshra.s32 %v1957, 3
        %v3377 = vshra.s32 %v1958, 3
        %v3378 = vshra.s32 %v1959, 3
        %v3379 = vshra.s32 %v1960, 3
        %v3380 = vshra.s32 %v1961, 3
        %v3381 = vshra.s32 %v1962, 3
        %v3382 = vshra.s32 %v1963, 3
        %v3383 = vshra.s32 %v1964, 3
        %v3384 = vshra.s32 %v1965, 3
        %v3385 = vand.u32 %v3369, 1
        %v3386 = vand.u32 %v3370, 1
        %v3387 = vand.u32 %v3371, 1
        %v3388 = vand.u32 %v3372, 1
        %v3389 = vand.u32 %v3373, 1
        %v3390 = vand.u32 %v3374, 1
        %v3391 = vand.u32 %v3375, 1
        %v3392 = vand.u32 %v3376, 1
        %v3393 = vand.u32 %v3377, 1
        %v3394 = vand.u32 %v3378, 1
        %v3395 = vand.u32 %v3379, 1
        %v3396 = vand.u32 %v3380, 1
        %v3397 = vand.u32 %v3381, 1
        %v3398 = vand.u32 %v3382, 1
        %v3399 = vand.u32 %v3383, 1
        %v3400 = vand.u32 %v3384, 1
        %vm3401 = vcmp.gt.s32.totalorder %v3385, 0
        %vm3402 = vcmp.gt.s32.totalorder %v3386, 0
        %vm3403 = vcmp.gt.s32.totalorder %v3387, 0
        %vm3404 = vcmp.gt.s32.totalorder %v3388, 0
        %vm3405 = vcmp.gt.s32.totalorder %v3389, 0
        %vm3406 = vcmp.gt.s32.totalorder %v3390, 0
        %vm3407 = vcmp.gt.s32.totalorder %v3391, 0
        %vm3408 = vcmp.gt.s32.totalorder %v3392, 0
        %vm3409 = vcmp.gt.s32.totalorder %v3393, 0
        %vm3410 = vcmp.gt.s32.totalorder %v3394, 0
        %vm3411 = vcmp.gt.s32.totalorder %v3395, 0
        %vm3412 = vcmp.gt.s32.totalorder %v3396, 0
        %vm3413 = vcmp.gt.s32.totalorder %v3397, 0
        %vm3414 = vcmp.gt.s32.totalorder %v3398, 0
        %vm3415 = vcmp.gt.s32.totalorder %v3399, 0
        %vm3416 = vcmp.gt.s32.totalorder %v3400, 0
        %v3417 = vsel %vm3401, 1, 0
        %v3418 = vsel %vm3402, 1, 0
        %v3419 = vsel %vm3403, 1, 0
        %v3420 = vsel %vm3404, 1, 0
        %v3421 = vsel %vm3405, 1, 0
        %v3422 = vsel %vm3406, 1, 0
        %v3423 = vsel %vm3407, 1, 0
        %v3424 = vsel %vm3408, 1, 0
        %v3425 = vsel %vm3409, 1, 0
        %v3426 = vsel %vm3410, 1, 0
        %v3427 = vsel %vm3411, 1, 0
        %v3428 = vsel %vm3412, 1, 0
        %v3429 = vsel %vm3413, 1, 0
        %v3430 = vsel %vm3414, 1, 0
        %v3431 = vsel %vm3415, 1, 0
        %v3432 = vsel %vm3416, 1, 0
        %vm3433 = vcmp.eq.s32.totalorder %v3417, 1
        %vm3434 = vcmp.eq.s32.totalorder %v3418, 1
        %vm3435 = vcmp.eq.s32.totalorder %v3419, 1
        %vm3436 = vcmp.eq.s32.totalorder %v3420, 1
        %vm3437 = vcmp.eq.s32.totalorder %v3421, 1
        %vm3438 = vcmp.eq.s32.totalorder %v3422, 1
        %vm3439 = vcmp.eq.s32.totalorder %v3423, 1
        %vm3440 = vcmp.eq.s32.totalorder %v3424, 1
        %vm3441 = vcmp.eq.s32.totalorder %v3425, 1
        %vm3442 = vcmp.eq.s32.totalorder %v3426, 1
        %vm3443 = vcmp.eq.s32.totalorder %v3427, 1
        %vm3444 = vcmp.eq.s32.totalorder %v3428, 1
        %vm3445 = vcmp.eq.s32.totalorder %v3429, 1
        %vm3446 = vcmp.eq.s32.totalorder %v3430, 1
        %vm3447 = vcmp.eq.s32.totalorder %v3431, 1
        %vm3448 = vcmp.eq.s32.totalorder %v3432, 1
        %v3449 = vsel %vm3433, %v2792, %v2148
        %v3450 = vsel %vm3433, %v2794, %v2150
        %v3451 = vsel %vm3434, %v2798, %v2154
        %v3452 = vsel %vm3434, %v2800, %v2156
        %v3453 = vsel %vm3435, %v2804, %v2160
        %v3454 = vsel %vm3435, %v2806, %v2162
        %v3455 = vsel %vm3436, %v2810, %v2166
        %v3456 = vsel %vm3436, %v2812, %v2168
        %v3457 = vsel %vm3437, %v2816, %v2172
        %v3458 = vsel %vm3437, %v2818, %v2174
        %v3459 = vsel %vm3438, %v2822, %v2178
        %v3460 = vsel %vm3438, %v2824, %v2180
        %v3461 = vsel %vm3439, %v2828, %v2184
        %v3462 = vsel %vm3439, %v2830, %v2186
        %v3463 = vsel %vm3440, %v2834, %v2190
        %v3464 = vsel %vm3440, %v2836, %v2192
        %v3465 = vsel %vm3441, %v2840, %v2196
        %v3466 = vsel %vm3441, %v2842, %v2198
        %v3467 = vsel %vm3442, %v2846, %v2202
        %v3468 = vsel %vm3442, %v2848, %v2204
        %v3469 = vsel %vm3443, %v2852, %v2208
        %v3470 = vsel %vm3443, %v2854, %v2210
        %v3471 = vsel %vm3444, %v2858, %v2214
        %v3472 = vsel %vm3444, %v2860, %v2216
        %v3473 = vsel %vm3445, %v2864, %v2220
        %v3474 = vsel %vm3445, %v2866, %v2222
        %v3475 = vsel %vm3446, %v2870, %v2226
        %v3476 = vsel %vm3446, %v2872, %v2228
        %v3477 = vsel %vm3447, %v2876, %v2232
        %v3478 = vsel %vm3447, %v2878, %v2234
        %v3479 = vsel %vm3448, %v2882, %v2238
        %v3480 = vsel %vm3448, %v2884, %v2240
        %v3481 = vshra.s32 %v1950, 2
        %v3482 = vshra.s32 %v1951, 2
        %v3483 = vshra.s32 %v1952, 2
        %v3484 = vshra.s32 %v1953, 2
        %v3485 = vshra.s32 %v1954, 2
        %v3486 = vshra.s32 %v1955, 2
        %v3487 = vshra.s32 %v1956, 2
        %v3488 = vshra.s32 %v1957, 2
        %v3489 = vshra.s32 %v1958, 2
        %v3490 = vshra.s32 %v1959, 2
        %v3491 = vshra.s32 %v1960, 2
        %v3492 = vshra.s32 %v1961, 2
        %v3493 = vshra.s32 %v1962, 2
        %v3494 = vshra.s32 %v1963, 2
        %v3495 = vshra.s32 %v1964, 2
        %v3496 = vshra.s32 %v1965, 2
        %v3497 = vand.u32 %v3481, 1
        %v3498 = vand.u32 %v3482, 1
        %v3499 = vand.u32 %v3483, 1
        %v3500 = vand.u32 %v3484, 1
        %v3501 = vand.u32 %v3485, 1
        %v3502 = vand.u32 %v3486, 1
        %v3503 = vand.u32 %v3487, 1
        %v3504 = vand.u32 %v3488, 1
        %v3505 = vand.u32 %v3489, 1
        %v3506 = vand.u32 %v3490, 1
        %v3507 = vand.u32 %v3491, 1
        %v3508 = vand.u32 %v3492, 1
        %v3509 = vand.u32 %v3493, 1
        %v3510 = vand.u32 %v3494, 1
        %v3511 = vand.u32 %v3495, 1
        %v3512 = vand.u32 %v3496, 1
        %vm3513 = vcmp.gt.s32.totalorder %v3497, 0
        %vm3514 = vcmp.gt.s32.totalorder %v3498, 0
        %vm3515 = vcmp.gt.s32.totalorder %v3499, 0
        %vm3516 = vcmp.gt.s32.totalorder %v3500, 0
        %vm3517 = vcmp.gt.s32.totalorder %v3501, 0
        %vm3518 = vcmp.gt.s32.totalorder %v3502, 0
        %vm3519 = vcmp.gt.s32.totalorder %v3503, 0
        %vm3520 = vcmp.gt.s32.totalorder %v3504, 0
        %vm3521 = vcmp.gt.s32.totalorder %v3505, 0
        %vm3522 = vcmp.gt.s32.totalorder %v3506, 0
        %vm3523 = vcmp.gt.s32.totalorder %v3507, 0
        %vm3524 = vcmp.gt.s32.totalorder %v3508, 0
        %vm3525 = vcmp.gt.s32.totalorder %v3509, 0
        %vm3526 = vcmp.gt.s32.totalorder %v3510, 0
        %vm3527 = vcmp.gt.s32.totalorder %v3511, 0
        %vm3528 = vcmp.gt.s32.totalorder %v3512, 0
        %v3529 = vsel %vm3513, 1, 0
        %v3530 = vsel %vm3514, 1, 0
        %v3531 = vsel %vm3515, 1, 0
        %v3532 = vsel %vm3516, 1, 0
        %v3533 = vsel %vm3517, 1, 0
        %v3534 = vsel %vm3518, 1, 0
        %v3535 = vsel %vm3519, 1, 0
        %v3536 = vsel %vm3520, 1, 0
        %v3537 = vsel %vm3521, 1, 0
        %v3538 = vsel %vm3522, 1, 0
        %v3539 = vsel %vm3523, 1, 0
        %v3540 = vsel %vm3524, 1, 0
        %v3541 = vsel %vm3525, 1, 0
        %v3542 = vsel %vm3526, 1, 0
        %v3543 = vsel %vm3527, 1, 0
        %v3544 = vsel %vm3528, 1, 0
        %vm3545 = vcmp.eq.s32.totalorder %v3529, 1
        %vm3546 = vcmp.eq.s32.totalorder %v3530, 1
        %vm3547 = vcmp.eq.s32.totalorder %v3531, 1
        %vm3548 = vcmp.eq.s32.totalorder %v3532, 1
        %vm3549 = vcmp.eq.s32.totalorder %v3533, 1
        %vm3550 = vcmp.eq.s32.totalorder %v3534, 1
        %vm3551 = vcmp.eq.s32.totalorder %v3535, 1
        %vm3552 = vcmp.eq.s32.totalorder %v3536, 1
        %vm3553 = vcmp.eq.s32.totalorder %v3537, 1
        %vm3554 = vcmp.eq.s32.totalorder %v3538, 1
        %vm3555 = vcmp.eq.s32.totalorder %v3539, 1
        %vm3556 = vcmp.eq.s32.totalorder %v3540, 1
        %vm3557 = vcmp.eq.s32.totalorder %v3541, 1
        %vm3558 = vcmp.eq.s32.totalorder %v3542, 1
        %vm3559 = vcmp.eq.s32.totalorder %v3543, 1
        %vm3560 = vcmp.eq.s32.totalorder %v3544, 1
        %v3561 = vsel %vm3545, %v2953, %v2309
        %v3562 = vsel %vm3545, %v2955, %v2311
        %v3563 = vsel %vm3546, %v2959, %v2315
        %v3564 = vsel %vm3546, %v2961, %v2317
        %v3565 = vsel %vm3547, %v2965, %v2321
        %v3566 = vsel %vm3547, %v2967, %v2323
        %v3567 = vsel %vm3548, %v2971, %v2327
        %v3568 = vsel %vm3548, %v2973, %v2329
        %v3569 = vsel %vm3549, %v2977, %v2333
        %v3570 = vsel %vm3549, %v2979, %v2335
        %v3571 = vsel %vm3550, %v2983, %v2339
        %v3572 = vsel %vm3550, %v2985, %v2341
        %v3573 = vsel %vm3551, %v2989, %v2345
        %v3574 = vsel %vm3551, %v2991, %v2347
        %v3575 = vsel %vm3552, %v2995, %v2351
        %v3576 = vsel %vm3552, %v2997, %v2353
        %v3577 = vsel %vm3553, %v3001, %v2357
        %v3578 = vsel %vm3553, %v3003, %v2359
        %v3579 = vsel %vm3554, %v3007, %v2363
        %v3580 = vsel %vm3554, %v3009, %v2365
        %v3581 = vsel %vm3555, %v3013, %v2369
        %v3582 = vsel %vm3555, %v3015, %v2371
        %v3583 = vsel %vm3556, %v3019, %v2375
        %v3584 = vsel %vm3556, %v3021, %v2377
        %v3585 = vsel %vm3557, %v3025, %v2381
        %v3586 = vsel %vm3557, %v3027, %v2383
        %v3587 = vsel %vm3558, %v3031, %v2387
        %v3588 = vsel %vm3558, %v3033, %v2389
        %v3589 = vsel %vm3559, %v3037, %v2393
        %v3590 = vsel %vm3559, %v3039, %v2395
        %v3591 = vsel %vm3560, %v3043, %v2399
        %v3592 = vsel %vm3560, %v3045, %v2401
        %v3593 = vmul.f32 %v3449, %v3561
        %v3594 = vmul.f32 %v3450, %v3562
        %v3595 = vmul.f32 %v3451, %v3563
        %v3596 = vmul.f32 %v3452, %v3564
        %v3597 = vmul.f32 %v3453, %v3565
        %v3598 = vmul.f32 %v3454, %v3566
        %v3599 = vmul.f32 %v3455, %v3567
        %v3600 = vmul.f32 %v3456, %v3568
        %v3601 = vmul.f32 %v3457, %v3569
        %v3602 = vmul.f32 %v3458, %v3570
        %v3603 = vmul.f32 %v3459, %v3571
        %v3604 = vmul.f32 %v3460, %v3572
        %v3605 = vmul.f32 %v3461, %v3573
        %v3606 = vmul.f32 %v3462, %v3574
        %v3607 = vmul.f32 %v3463, %v3575
        %v3608 = vmul.f32 %v3464, %v3576
        %v3609 = vmul.f32 %v3465, %v3577
        %v3610 = vmul.f32 %v3466, %v3578
        %v3611 = vmul.f32 %v3467, %v3579
        %v3612 = vmul.f32 %v3468, %v3580
        %v3613 = vmul.f32 %v3469, %v3581
        %v3614 = vmul.f32 %v3470, %v3582
        %v3615 = vmul.f32 %v3471, %v3583
        %v3616 = vmul.f32 %v3472, %v3584
        %v3617 = vmul.f32 %v3473, %v3585
        %v3618 = vmul.f32 %v3474, %v3586
        %v3619 = vmul.f32 %v3475, %v3587
        %v3620 = vmul.f32 %v3476, %v3588
        %v3621 = vmul.f32 %v3477, %v3589
        %v3622 = vmul.f32 %v3478, %v3590
        %v3623 = vmul.f32 %v3479, %v3591
        %v3624 = vmul.f32 %v3480, %v3592
        %v3625 = vshra.s32 %v1950, 1
        %v3626 = vshra.s32 %v1951, 1
        %v3627 = vshra.s32 %v1952, 1
        %v3628 = vshra.s32 %v1953, 1
        %v3629 = vshra.s32 %v1954, 1
        %v3630 = vshra.s32 %v1955, 1
        %v3631 = vshra.s32 %v1956, 1
        %v3632 = vshra.s32 %v1957, 1
        %v3633 = vshra.s32 %v1958, 1
        %v3634 = vshra.s32 %v1959, 1
        %v3635 = vshra.s32 %v1960, 1
        %v3636 = vshra.s32 %v1961, 1
        %v3637 = vshra.s32 %v1962, 1
        %v3638 = vshra.s32 %v1963, 1
        %v3639 = vshra.s32 %v1964, 1
        %v3640 = vshra.s32 %v1965, 1
        %v3641 = vand.u32 %v3625, 1
        %v3642 = vand.u32 %v3626, 1
        %v3643 = vand.u32 %v3627, 1
        %v3644 = vand.u32 %v3628, 1
        %v3645 = vand.u32 %v3629, 1
        %v3646 = vand.u32 %v3630, 1
        %v3647 = vand.u32 %v3631, 1
        %v3648 = vand.u32 %v3632, 1
        %v3649 = vand.u32 %v3633, 1
        %v3650 = vand.u32 %v3634, 1
        %v3651 = vand.u32 %v3635, 1
        %v3652 = vand.u32 %v3636, 1
        %v3653 = vand.u32 %v3637, 1
        %v3654 = vand.u32 %v3638, 1
        %v3655 = vand.u32 %v3639, 1
        %v3656 = vand.u32 %v3640, 1
        %vm3657 = vcmp.gt.s32.totalorder %v3641, 0
        %vm3658 = vcmp.gt.s32.totalorder %v3642, 0
        %vm3659 = vcmp.gt.s32.totalorder %v3643, 0
        %vm3660 = vcmp.gt.s32.totalorder %v3644, 0
        %vm3661 = vcmp.gt.s32.totalorder %v3645, 0
        %vm3662 = vcmp.gt.s32.totalorder %v3646, 0
        %vm3663 = vcmp.gt.s32.totalorder %v3647, 0
        %vm3664 = vcmp.gt.s32.totalorder %v3648, 0
        %vm3665 = vcmp.gt.s32.totalorder %v3649, 0
        %vm3666 = vcmp.gt.s32.totalorder %v3650, 0
        %vm3667 = vcmp.gt.s32.totalorder %v3651, 0
        %vm3668 = vcmp.gt.s32.totalorder %v3652, 0
        %vm3669 = vcmp.gt.s32.totalorder %v3653, 0
        %vm3670 = vcmp.gt.s32.totalorder %v3654, 0
        %vm3671 = vcmp.gt.s32.totalorder %v3655, 0
        %vm3672 = vcmp.gt.s32.totalorder %v3656, 0
        %v3673 = vsel %vm3657, 1, 0
        %v3674 = vsel %vm3658, 1, 0
        %v3675 = vsel %vm3659, 1, 0
        %v3676 = vsel %vm3660, 1, 0
        %v3677 = vsel %vm3661, 1, 0
        %v3678 = vsel %vm3662, 1, 0
        %v3679 = vsel %vm3663, 1, 0
        %v3680 = vsel %vm3664, 1, 0
        %v3681 = vsel %vm3665, 1, 0
        %v3682 = vsel %vm3666, 1, 0
        %v3683 = vsel %vm3667, 1, 0
        %v3684 = vsel %vm3668, 1, 0
        %v3685 = vsel %vm3669, 1, 0
        %v3686 = vsel %vm3670, 1, 0
        %v3687 = vsel %vm3671, 1, 0
        %v3688 = vsel %vm3672, 1, 0
        %vm3689 = vcmp.eq.s32.totalorder %v3673, 1
        %vm3690 = vcmp.eq.s32.totalorder %v3674, 1
        %vm3691 = vcmp.eq.s32.totalorder %v3675, 1
        %vm3692 = vcmp.eq.s32.totalorder %v3676, 1
        %vm3693 = vcmp.eq.s32.totalorder %v3677, 1
        %vm3694 = vcmp.eq.s32.totalorder %v3678, 1
        %vm3695 = vcmp.eq.s32.totalorder %v3679, 1
        %vm3696 = vcmp.eq.s32.totalorder %v3680, 1
        %vm3697 = vcmp.eq.s32.totalorder %v3681, 1
        %vm3698 = vcmp.eq.s32.totalorder %v3682, 1
        %vm3699 = vcmp.eq.s32.totalorder %v3683, 1
        %vm3700 = vcmp.eq.s32.totalorder %v3684, 1
        %vm3701 = vcmp.eq.s32.totalorder %v3685, 1
        %vm3702 = vcmp.eq.s32.totalorder %v3686, 1
        %vm3703 = vcmp.eq.s32.totalorder %v3687, 1
        %vm3704 = vcmp.eq.s32.totalorder %v3688, 1
        %v3705 = vsel %vm3689, %v3114, %v2470
        %v3706 = vsel %vm3689, %v3116, %v2472
        %v3707 = vsel %vm3690, %v3120, %v2476
        %v3708 = vsel %vm3690, %v3122, %v2478
        %v3709 = vsel %vm3691, %v3126, %v2482
        %v3710 = vsel %vm3691, %v3128, %v2484
        %v3711 = vsel %vm3692, %v3132, %v2488
        %v3712 = vsel %vm3692, %v3134, %v2490
        %v3713 = vsel %vm3693, %v3138, %v2494
        %v3714 = vsel %vm3693, %v3140, %v2496
        %v3715 = vsel %vm3694, %v3144, %v2500
        %v3716 = vsel %vm3694, %v3146, %v2502
        %v3717 = vsel %vm3695, %v3150, %v2506
        %v3718 = vsel %vm3695, %v3152, %v2508
        %v3719 = vsel %vm3696, %v3156, %v2512
        %v3720 = vsel %vm3696, %v3158, %v2514
        %v3721 = vsel %vm3697, %v3162, %v2518
        %v3722 = vsel %vm3697, %v3164, %v2520
        %v3723 = vsel %vm3698, %v3168, %v2524
        %v3724 = vsel %vm3698, %v3170, %v2526
        %v3725 = vsel %vm3699, %v3174, %v2530
        %v3726 = vsel %vm3699, %v3176, %v2532
        %v3727 = vsel %vm3700, %v3180, %v2536
        %v3728 = vsel %vm3700, %v3182, %v2538
        %v3729 = vsel %vm3701, %v3186, %v2542
        %v3730 = vsel %vm3701, %v3188, %v2544
        %v3731 = vsel %vm3702, %v3192, %v2548
        %v3732 = vsel %vm3702, %v3194, %v2550
        %v3733 = vsel %vm3703, %v3198, %v2554
        %v3734 = vsel %vm3703, %v3200, %v2556
        %v3735 = vsel %vm3704, %v3204, %v2560
        %v3736 = vsel %vm3704, %v3206, %v2562
        %v3737 = vmul.f32 %v3593, %v3705
        %v3738 = vmul.f32 %v3594, %v3706
        %v3739 = vmul.f32 %v3595, %v3707
        %v3740 = vmul.f32 %v3596, %v3708
        %v3741 = vmul.f32 %v3597, %v3709
        %v3742 = vmul.f32 %v3598, %v3710
        %v3743 = vmul.f32 %v3599, %v3711
        %v3744 = vmul.f32 %v3600, %v3712
        %v3745 = vmul.f32 %v3601, %v3713
        %v3746 = vmul.f32 %v3602, %v3714
        %v3747 = vmul.f32 %v3603, %v3715
        %v3748 = vmul.f32 %v3604, %v3716
        %v3749 = vmul.f32 %v3605, %v3717
        %v3750 = vmul.f32 %v3606, %v3718
        %v3751 = vmul.f32 %v3607, %v3719
        %v3752 = vmul.f32 %v3608, %v3720
        %v3753 = vmul.f32 %v3609, %v3721
        %v3754 = vmul.f32 %v3610, %v3722
        %v3755 = vmul.f32 %v3611, %v3723
        %v3756 = vmul.f32 %v3612, %v3724
        %v3757 = vmul.f32 %v3613, %v3725
        %v3758 = vmul.f32 %v3614, %v3726
        %v3759 = vmul.f32 %v3615, %v3727
        %v3760 = vmul.f32 %v3616, %v3728
        %v3761 = vmul.f32 %v3617, %v3729
        %v3762 = vmul.f32 %v3618, %v3730
        %v3763 = vmul.f32 %v3619, %v3731
        %v3764 = vmul.f32 %v3620, %v3732
        %v3765 = vmul.f32 %v3621, %v3733
        %v3766 = vmul.f32 %v3622, %v3734
        %v3767 = vmul.f32 %v3623, %v3735
        %v3768 = vmul.f32 %v3624, %v3736
        %v3769 = vand.u32 %v1950, 1
        %v3770 = vand.u32 %v1951, 1
        %v3771 = vand.u32 %v1952, 1
        %v3772 = vand.u32 %v1953, 1
        %v3773 = vand.u32 %v1954, 1
        %v3774 = vand.u32 %v1955, 1
        %v3775 = vand.u32 %v1956, 1
        %v3776 = vand.u32 %v1957, 1
        %v3777 = vand.u32 %v1958, 1
        %v3778 = vand.u32 %v1959, 1
        %v3779 = vand.u32 %v1960, 1
        %v3780 = vand.u32 %v1961, 1
        %v3781 = vand.u32 %v1962, 1
        %v3782 = vand.u32 %v1963, 1
        %v3783 = vand.u32 %v1964, 1
        %v3784 = vand.u32 %v1965, 1
        %vm3785 = vcmp.gt.s32.totalorder %v3769, 0
        %vm3786 = vcmp.gt.s32.totalorder %v3770, 0
        %vm3787 = vcmp.gt.s32.totalorder %v3771, 0
        %vm3788 = vcmp.gt.s32.totalorder %v3772, 0
        %vm3789 = vcmp.gt.s32.totalorder %v3773, 0
        %vm3790 = vcmp.gt.s32.totalorder %v3774, 0
        %vm3791 = vcmp.gt.s32.totalorder %v3775, 0
        %vm3792 = vcmp.gt.s32.totalorder %v3776, 0
        %vm3793 = vcmp.gt.s32.totalorder %v3777, 0
        %vm3794 = vcmp.gt.s32.totalorder %v3778, 0
        %vm3795 = vcmp.gt.s32.totalorder %v3779, 0
        %vm3796 = vcmp.gt.s32.totalorder %v3780, 0
        %vm3797 = vcmp.gt.s32.totalorder %v3781, 0
        %vm3798 = vcmp.gt.s32.totalorder %v3782, 0
        %vm3799 = vcmp.gt.s32.totalorder %v3783, 0
        %vm3800 = vcmp.gt.s32.totalorder %v3784, 0
        %v3801 = vsel %vm3785, 1, 0
        %v3802 = vsel %vm3786, 1, 0
        %v3803 = vsel %vm3787, 1, 0
        %v3804 = vsel %vm3788, 1, 0
        %v3805 = vsel %vm3789, 1, 0
        %v3806 = vsel %vm3790, 1, 0
        %v3807 = vsel %vm3791, 1, 0
        %v3808 = vsel %vm3792, 1, 0
        %v3809 = vsel %vm3793, 1, 0
        %v3810 = vsel %vm3794, 1, 0
        %v3811 = vsel %vm3795, 1, 0
        %v3812 = vsel %vm3796, 1, 0
        %v3813 = vsel %vm3797, 1, 0
        %v3814 = vsel %vm3798, 1, 0
        %v3815 = vsel %vm3799, 1, 0
        %v3816 = vsel %vm3800, 1, 0
        %vm3817 = vcmp.eq.s32.totalorder %v3801, 1
        %vm3818 = vcmp.eq.s32.totalorder %v3802, 1
        %vm3819 = vcmp.eq.s32.totalorder %v3803, 1
        %vm3820 = vcmp.eq.s32.totalorder %v3804, 1
        %vm3821 = vcmp.eq.s32.totalorder %v3805, 1
        %vm3822 = vcmp.eq.s32.totalorder %v3806, 1
        %vm3823 = vcmp.eq.s32.totalorder %v3807, 1
        %vm3824 = vcmp.eq.s32.totalorder %v3808, 1
        %vm3825 = vcmp.eq.s32.totalorder %v3809, 1
        %vm3826 = vcmp.eq.s32.totalorder %v3810, 1
        %vm3827 = vcmp.eq.s32.totalorder %v3811, 1
        %vm3828 = vcmp.eq.s32.totalorder %v3812, 1
        %vm3829 = vcmp.eq.s32.totalorder %v3813, 1
        %vm3830 = vcmp.eq.s32.totalorder %v3814, 1
        %vm3831 = vcmp.eq.s32.totalorder %v3815, 1
        %vm3832 = vcmp.eq.s32.totalorder %v3816, 1
        %v3833 = vsel %vm3817, %v3275, %v2631
        %v3834 = vsel %vm3817, %v3277, %v2633
        %v3835 = vsel %vm3818, %v3281, %v2637
        %v3836 = vsel %vm3818, %v3283, %v2639
        %v3837 = vsel %vm3819, %v3287, %v2643
        %v3838 = vsel %vm3819, %v3289, %v2645
        %v3839 = vsel %vm3820, %v3293, %v2649
        %v3840 = vsel %vm3820, %v3295, %v2651
        %v3841 = vsel %vm3821, %v3299, %v2655
        %v3842 = vsel %vm3821, %v3301, %v2657
        %v3843 = vsel %vm3822, %v3305, %v2661
        %v3844 = vsel %vm3822, %v3307, %v2663
        %v3845 = vsel %vm3823, %v3311, %v2667
        %v3846 = vsel %vm3823, %v3313, %v2669
        %v3847 = vsel %vm3824, %v3317, %v2673
        %v3848 = vsel %vm3824, %v3319, %v2675
        %v3849 = vsel %vm3825, %v3323, %v2679
        %v3850 = vsel %vm3825, %v3325, %v2681
        %v3851 = vsel %vm3826, %v3329, %v2685
        %v3852 = vsel %vm3826, %v3331, %v2687
        %v3853 = vsel %vm3827, %v3335, %v2691
        %v3854 = vsel %vm3827, %v3337, %v2693
        %v3855 = vsel %vm3828, %v3341, %v2697
        %v3856 = vsel %vm3828, %v3343, %v2699
        %v3857 = vsel %vm3829, %v3347, %v2703
        %v3858 = vsel %vm3829, %v3349, %v2705
        %v3859 = vsel %vm3830, %v3353, %v2709
        %v3860 = vsel %vm3830, %v3355, %v2711
        %v3861 = vsel %vm3831, %v3359, %v2715
        %v3862 = vsel %vm3831, %v3361, %v2717
        %v3863 = vsel %vm3832, %v3365, %v2721
        %v3864 = vsel %vm3832, %v3367, %v2723
        %v3865 = vmul.f32 %v3737, %v3833
        %v3866 = vmul.f32 %v3738, %v3834
        %v3867 = vmul.f32 %v3739, %v3835
        %v3868 = vmul.f32 %v3740, %v3836
        %v3869 = vmul.f32 %v3741, %v3837
        %v3870 = vmul.f32 %v3742, %v3838
        %v3871 = vmul.f32 %v3743, %v3839
        %v3872 = vmul.f32 %v3744, %v3840
        %v3873 = vmul.f32 %v3745, %v3841
        %v3874 = vmul.f32 %v3746, %v3842
        %v3875 = vmul.f32 %v3747, %v3843
        %v3876 = vmul.f32 %v3748, %v3844
        %v3877 = vmul.f32 %v3749, %v3845
        %v3878 = vmul.f32 %v3750, %v3846
        %v3879 = vmul.f32 %v3751, %v3847
        %v3880 = vmul.f32 %v3752, %v3848
        %v3881 = vmul.f32 %v3753, %v3849
        %v3882 = vmul.f32 %v3754, %v3850
        %v3883 = vmul.f32 %v3755, %v3851
        %v3884 = vmul.f32 %v3756, %v3852
        %v3885 = vmul.f32 %v3757, %v3853
        %v3886 = vmul.f32 %v3758, %v3854
        %v3887 = vmul.f32 %v3759, %v3855
        %v3888 = vmul.f32 %v3760, %v3856
        %v3889 = vmul.f32 %v3761, %v3857
        %v3890 = vmul.f32 %v3762, %v3858
        %v3891 = vmul.f32 %v3763, %v3859
        %v3892 = vmul.f32 %v3764, %v3860
        %v3893 = vmul.f32 %v3765, %v3861
        %v3894 = vmul.f32 %v3766, %v3862
        %v3895 = vmul.f32 %v3767, %v3863
        %v3896 = vmul.f32 %v3768, %v3864
        %v3897 = vld [vmem:[%s1] sm:$0xff]
        %v3898 = vld [vmem:[%s1 + $0x8] sm:$0xff]
        %v3899 = vld [vmem:[%s1 + $0x10] sm:$0xff]
        %v3900 = vld [vmem:[%s1 + $0x18] sm:$0xff]
        %v3901 = vld [vmem:[%s1 + $0x20] sm:$0xff]
        %v3902 = vld [vmem:[%s1 + $0x28] sm:$0xff]
        %v3903 = vld [vmem:[%s1 + $0x30] sm:$0xff]
        %v3904 = vld [vmem:[%s1 + $0x38] sm:$0xff]
        %v3905 = vld [vmem:[%s1 + $0x40] sm:$0xff]
        %v3906 = vld [vmem:[%s1 + $0x48] sm:$0xff]
        %v3907 = vld [vmem:[%s1 + $0x50] sm:$0xff]
        %v3908 = vld [vmem:[%s1 + $0x58] sm:$0xff]
        %v3909 = vld [vmem:[%s1 + $0x60] sm:$0xff]
        %v3910 = vld [vmem:[%s1 + $0x68] sm:$0xff]
        %v3911 = vld [vmem:[%s1 + $0x70] sm:$0xff]
        %v3912 = vld [vmem:[%s1 + $0x78] sm:$0xff]
        %3913 = vmatprep.subr.mxu0 %v3866
        %3914 = vmatpush1.msra.mxu0 %v3865
        %3915 = vmatprep.subr.mxu0 %v3868
        %3916 = vmatpush1.msra.mxu0 %v3867
        %3917 = vmatprep.subr.mxu0 %v3870
        %3918 = vmatpush1.msra.mxu0 %v3869
        %3919 = vmatprep.subr.mxu0 %v3872
        %3920 = vmatpush1.msra.mxu0 %v3871
        %3921 = vmatprep.subr.mxu0 %v3874
        %3922 = vmatpush1.msra.mxu0 %v3873
        %3923 = vmatprep.subr.mxu0 %v3876
        %3924 = vmatpush1.msra.mxu0 %v3875
        %3925 = vmatprep.subr.mxu0 %v3878
        %3926 = vmatpush1.msra.mxu0 %v3877
        %3927 = vmatprep.subr.mxu0 %v3880
        %3928 = vmatpush1.msra.mxu0 %v3879
        %3929 = vmatprep.subr.mxu0 %v3882
        %3930 = vmatpush1.msra.mxu0 %v3881
        %3931 = vmatprep.subr.mxu0 %v3884
        %3932 = vmatpush1.msra.mxu0 %v3883
        %3933 = vmatprep.subr.mxu0 %v3886
        %3934 = vmatpush1.msra.mxu0 %v3885
        %3935 = vmatprep.subr.mxu0 %v3888
        %3936 = vmatpush1.msra.mxu0 %v3887
        %3937 = vmatprep.subr.mxu0 %v3890
        %3938 = vmatpush1.msra.mxu0 %v3889
        %3939 = vmatprep.subr.mxu0 %v3892
        %3940 = vmatpush1.msra.mxu0 %v3891
        %3941 = vmatprep.subr.mxu0 %v3894
        %3942 = vmatpush1.msra.mxu0 %v3893
        %3943 = vmatprep.subr.mxu0 %v3896
        %3944 = vmatpush1.msra.mxu0 %v3895
        %3945 = vmatprep.subr.mxu0 0.0
        %3946 = vmatpush1.msra.mxu0 0.0
        %3947 = vmatprep.subr.mxu0 0.0
        %3948 = vmatpush1.msra.mxu0 0.0
        %3949 = vmatprep.subr.mxu0 0.0
        %3950 = vmatpush1.msra.mxu0 0.0
        %3951 = vmatprep.subr.mxu0 0.0
        %3952 = vmatpush1.msra.mxu0 0.0
        %3953 = vmatprep.subr.mxu0 0.0
        %3954 = vmatpush1.msra.mxu0 0.0
        %3955 = vmatprep.subr.mxu0 0.0
        %3956 = vmatpush1.msra.mxu0 0.0
        %3957 = vmatprep.subr.mxu0 0.0
        %3958 = vmatpush1.msra.mxu0 0.0
        %3959 = vmatprep.subr.mxu0 0.0
        %3960 = vmatpush1.msra.mxu0 0.0
        %3961 = vmatprep.subr.mxu0 0.0
        %3962 = vmatpush1.msra.mxu0 0.0
        %3963 = vmatprep.subr.mxu0 0.0
        %3964 = vmatpush1.msra.mxu0 0.0
        %3965 = vmatprep.subr.mxu0 0.0
        %3966 = vmatpush1.msra.mxu0 0.0
        %3967 = vmatprep.subr.mxu0 0.0
        %3968 = vmatpush1.msra.mxu0 0.0
        %3969 = vmatprep.subr.mxu0 0.0
        %3970 = vmatpush1.msra.mxu0 0.0
        %3971 = vmatprep.subr.mxu0 0.0
        %3972 = vmatpush1.msra.mxu0 0.0
        %3973 = vmatprep.subr.mxu0 0.0
        %3974 = vmatpush1.msra.mxu0 0.0
        %3975 = vmatprep.subr.mxu0 0.0
        %3976 = vmatpush1.msra.mxu0 0.0
        %3977 = vmatprep.mubr.f32.mxu0 0.0
        %3978 = vmatmul.mubr.f32.gmra.mrb[0].mxu0 %v3897
        %v3979 = vpop.f32.mrb[0].mxu0
        %v3980 = vadd.f32 0.0, %v3979
        %v3981 = vpop.f32.mrb[0].mxu0
        %v3982 = vadd.f32 0.0, %v3981
        %3983 = vmatprep.mubr.f32.mxu0 0.0
        %3984 = vmatmul.mubr.f32.gmra.mrb[0].mxu0 %v3898
        %v3985 = vpop.f32.mrb[0].mxu0
        %v3986 = vadd.f32 0.0, %v3985
        %v3987 = vpop.f32.mrb[0].mxu0
        %v3988 = vadd.f32 0.0, %v3987
        %3989 = vmatprep.mubr.f32.mxu0 0.0
        %3990 = vmatmul.mubr.f32.gmra.mrb[0].mxu0 %v3899
        %v3991 = vpop.f32.mrb[0].mxu0
        %v3992 = vadd.f32 0.0, %v3991
        %v3993 = vpop.f32.mrb[0].mxu0
        %v3994 = vadd.f32 0.0, %v3993
        %3995 = vmatprep.mubr.f32.mxu0 0.0
        %3996 = vmatmul.mubr.f32.gmra.mrb[0].mxu0 %v3900
        %v3997 = vpop.f32.mrb[0].mxu0
        %v3998 = vadd.f32 0.0, %v3997
        %v3999 = vpop.f32.mrb[0].mxu0
        %v4000 = vadd.f32 0.0, %v3999
        %4001 = vmatprep.mubr.f32.mxu0 0.0
        %4002 = vmatmul.mubr.f32.gmra.mrb[0].mxu0 %v3901
        %v4003 = vpop.f32.mrb[0].mxu0
        %v4004 = vadd.f32 0.0, %v4003
        %v4005 = vpop.f32.mrb[0].mxu0
        %v4006 = vadd.f32 0.0, %v4005
        %4007 = vmatprep.mubr.f32.mxu0 0.0
        %4008 = vmatmul.mubr.f32.gmra.mrb[0].mxu0 %v3902
        %v4009 = vpop.f32.mrb[0].mxu0
        %v4010 = vadd.f32 0.0, %v4009
        %v4011 = vpop.f32.mrb[0].mxu0
        %v4012 = vadd.f32 0.0, %v4011
        %4013 = vmatprep.mubr.f32.mxu0 0.0
        %4014 = vmatmul.mubr.f32.gmra.mrb[0].mxu0 %v3903
        %v4015 = vpop.f32.mrb[0].mxu0
        %v4016 = vadd.f32 0.0, %v4015
        %v4017 = vpop.f32.mrb[0].mxu0
        %v4018 = vadd.f32 0.0, %v4017
        %4019 = vmatprep.mubr.f32.mxu0 0.0
        %4020 = vmatmul.mubr.f32.gmra.mrb[0].mxu0 %v3904
        %v4021 = vpop.f32.mrb[0].mxu0
        %v4022 = vadd.f32 0.0, %v4021
        %v4023 = vpop.f32.mrb[0].mxu0
        %v4024 = vadd.f32 0.0, %v4023
        %4025 = vmatprep.mubr.f32.mxu0 0.0
        %4026 = vmatmul.mubr.f32.gmra.mrb[0].mxu0 %v3905
        %v4027 = vpop.f32.mrb[0].mxu0
        %v4028 = vadd.f32 0.0, %v4027
        %v4029 = vpop.f32.mrb[0].mxu0
        %v4030 = vadd.f32 0.0, %v4029
        %4031 = vmatprep.mubr.f32.mxu0 0.0
        %4032 = vmatmul.mubr.f32.gmra.mrb[0].mxu0 %v3906
        %v4033 = vpop.f32.mrb[0].mxu0
        %v4034 = vadd.f32 0.0, %v4033
        %v4035 = vpop.f32.mrb[0].mxu0
        %v4036 = vadd.f32 0.0, %v4035
        %4037 = vmatprep.mubr.f32.mxu0 0.0
        %4038 = vmatmul.mubr.f32.gmra.mrb[0].mxu0 %v3907
        %v4039 = vpop.f32.mrb[0].mxu0
        %v4040 = vadd.f32 0.0, %v4039
        %v4041 = vpop.f32.mrb[0].mxu0
        %v4042 = vadd.f32 0.0, %v4041
        %4043 = vmatprep.mubr.f32.mxu0 0.0
        %4044 = vmatmul.mubr.f32.gmra.mrb[0].mxu0 %v3908
        %v4045 = vpop.f32.mrb[0].mxu0
        %v4046 = vadd.f32 0.0, %v4045
        %v4047 = vpop.f32.mrb[0].mxu0
        %v4048 = vadd.f32 0.0, %v4047
        %4049 = vmatprep.mubr.f32.mxu0 0.0
        %4050 = vmatmul.mubr.f32.gmra.mrb[0].mxu0 %v3909
        %v4051 = vpop.f32.mrb[0].mxu0
        %v4052 = vadd.f32 0.0, %v4051
        %v4053 = vpop.f32.mrb[0].mxu0
        %v4054 = vadd.f32 0.0, %v4053
        %4055 = vmatprep.mubr.f32.mxu0 0.0
        %4056 = vmatmul.mubr.f32.gmra.mrb[0].mxu0 %v3910
        %v4057 = vpop.f32.mrb[0].mxu0
        %v4058 = vadd.f32 0.0, %v4057
        %v4059 = vpop.f32.mrb[0].mxu0
        %v4060 = vadd.f32 0.0, %v4059
        %4061 = vmatprep.mubr.f32.mxu0 0.0
        %4062 = vmatmul.mubr.f32.gmra.mrb[0].mxu0 %v3911
        %v4063 = vpop.f32.mrb[0].mxu0
        %v4064 = vadd.f32 0.0, %v4063
        %v4065 = vpop.f32.mrb[0].mxu0
        %v4066 = vadd.f32 0.0, %v4065
        %4067 = vmatprep.mubr.f32.mxu0 0.0
        %4068 = vmatmul.mubr.f32.gmra.mrb[0].mxu0 %v3912
        %v4069 = vpop.f32.mrb[0].mxu0
        %v4070 = vadd.f32 0.0, %v4069
        %v4071 = vpop.f32.mrb[0].mxu0
        %v4072 = vadd.f32 0.0, %v4071
        %4073 = vdwg.mxu0
        %v4074 = vmul.f32 %v3980, %v3980
        %v4075 = vmul.f32 %v3982, %v3982
        %v4076 = vmul.f32 %v3986, %v3986
        %v4077 = vmul.f32 %v3988, %v3988
        %v4078 = vmul.f32 %v3992, %v3992
        %v4079 = vmul.f32 %v3994, %v3994
        %v4080 = vmul.f32 %v3998, %v3998
        %v4081 = vmul.f32 %v4000, %v4000
        %v4082 = vmul.f32 %v4004, %v4004
        %v4083 = vmul.f32 %v4006, %v4006
        %v4084 = vmul.f32 %v4010, %v4010
        %v4085 = vmul.f32 %v4012, %v4012
        %v4086 = vmul.f32 %v4016, %v4016
        %v4087 = vmul.f32 %v4018, %v4018
        %v4088 = vmul.f32 %v4022, %v4022
        %v4089 = vmul.f32 %v4024, %v4024
        %v4090 = vmul.f32 %v4028, %v4028
        %v4091 = vmul.f32 %v4030, %v4030
        %v4092 = vmul.f32 %v4034, %v4034
        %v4093 = vmul.f32 %v4036, %v4036
        %v4094 = vmul.f32 %v4040, %v4040
        %v4095 = vmul.f32 %v4042, %v4042
        %v4096 = vmul.f32 %v4046, %v4046
        %v4097 = vmul.f32 %v4048, %v4048
        %v4098 = vmul.f32 %v4052, %v4052
        %v4099 = vmul.f32 %v4054, %v4054
        %v4100 = vmul.f32 %v4058, %v4058
        %v4101 = vmul.f32 %v4060, %v4060
        %v4102 = vmul.f32 %v4064, %v4064
        %v4103 = vmul.f32 %v4066, %v4066
        %v4104 = vmul.f32 %v4070, %v4070
        %v4105 = vmul.f32 %v4072, %v4072
        %v4106 = vld [vmem:[%s2] sm:$0xff]
        %v4107 = vld [vmem:[%s2 + $0x8] sm:$0xff]
        %v4108 = vld [vmem:[%s2 + $0x10] sm:$0xff]
        %v4109 = vld [vmem:[%s2 + $0x18] sm:$0xff]
        %4110 = vmatprep.subr.mxu0 %v4075
        %4111 = vmatpush1.msra.mxu0 %v4074
        %4112 = vmatprep.subr.mxu0 %v4077
        %4113 = vmatpush1.msra.mxu0 %v4076
        %4114 = vmatprep.subr.mxu0 %v4079
        %4115 = vmatpush1.msra.mxu0 %v4078
        %4116 = vmatprep.subr.mxu0 %v4081
        %4117 = vmatpush1.msra.mxu0 %v4080
        %4118 = vmatprep.subr.mxu0 %v4083
        %4119 = vmatpush1.msra.mxu0 %v4082
        %4120 = vmatprep.subr.mxu0 %v4085
        %4121 = vmatpush1.msra.mxu0 %v4084
        %4122 = vmatprep.subr.mxu0 %v4087
        %4123 = vmatpush1.msra.mxu0 %v4086
        %4124 = vmatprep.subr.mxu0 %v4089
        %4125 = vmatpush1.msra.mxu0 %v4088
        %4126 = vmatprep.subr.mxu0 %v4091
        %4127 = vmatpush1.msra.mxu0 %v4090
        %4128 = vmatprep.subr.mxu0 %v4093
        %4129 = vmatpush1.msra.mxu0 %v4092
        %4130 = vmatprep.subr.mxu0 %v4095
        %4131 = vmatpush1.msra.mxu0 %v4094
        %4132 = vmatprep.subr.mxu0 %v4097
        %4133 = vmatpush1.msra.mxu0 %v4096
        %4134 = vmatprep.subr.mxu0 %v4099
        %4135 = vmatpush1.msra.mxu0 %v4098
        %4136 = vmatprep.subr.mxu0 %v4101
        %4137 = vmatpush1.msra.mxu0 %v4100
        %4138 = vmatprep.subr.mxu0 %v4103
        %4139 = vmatpush1.msra.mxu0 %v4102
        %4140 = vmatprep.subr.mxu0 %v4105
        %4141 = vmatpush1.msra.mxu0 %v4104
        %4142 = vmatprep.subr.mxu0 0.0
        %4143 = vmatpush1.msra.mxu0 0.0
        %4144 = vmatprep.subr.mxu0 0.0
        %4145 = vmatpush1.msra.mxu0 0.0
        %4146 = vmatprep.subr.mxu0 0.0
        %4147 = vmatpush1.msra.mxu0 0.0
        %4148 = vmatprep.subr.mxu0 0.0
        %4149 = vmatpush1.msra.mxu0 0.0
        %4150 = vmatprep.subr.mxu0 0.0
        %4151 = vmatpush1.msra.mxu0 0.0
        %4152 = vmatprep.subr.mxu0 0.0
        %4153 = vmatpush1.msra.mxu0 0.0
        %4154 = vmatprep.subr.mxu0 0.0
        %4155 = vmatpush1.msra.mxu0 0.0
        %4156 = vmatprep.subr.mxu0 0.0
        %4157 = vmatpush1.msra.mxu0 0.0
        %4158 = vmatprep.subr.mxu0 0.0
        %4159 = vmatpush1.msra.mxu0 0.0
        %4160 = vmatprep.subr.mxu0 0.0
        %4161 = vmatpush1.msra.mxu0 0.0
        %4162 = vmatprep.subr.mxu0 0.0
        %4163 = vmatpush1.msra.mxu0 0.0
        %4164 = vmatprep.subr.mxu0 0.0
        %4165 = vmatpush1.msra.mxu0 0.0
        %4166 = vmatprep.subr.mxu0 0.0
        %4167 = vmatpush1.msra.mxu0 0.0
        %4168 = vmatprep.subr.mxu0 0.0
        %4169 = vmatpush1.msra.mxu0 0.0
        %4170 = vmatprep.subr.mxu0 0.0
        %4171 = vmatpush1.msra.mxu0 0.0
        %4172 = vmatprep.subr.mxu0 0.0
        %4173 = vmatpush1.msra.mxu0 0.0
        %4174 = vmatprep.mubr.f32.mxu0 0.0
        %4175 = vmatmul.mubr.f32.gmra.mrb[0].mxu0 %v4106
        %v4176 = vpop.f32.mrb[0].mxu0
        %v4177 = vadd.f32 0.0, %v4176
        %v4178 = vpop.f32.mrb[0].mxu0
        %v4179 = vadd.f32 0.0, %v4178
        %4180 = vmatprep.mubr.f32.mxu0 0.0
        %4181 = vmatmul.mubr.f32.gmra.mrb[0].mxu0 %v4107
        %v4182 = vpop.f32.mrb[0].mxu0
        %v4183 = vadd.f32 0.0, %v4182
        %v4184 = vpop.f32.mrb[0].mxu0
        %v4185 = vadd.f32 0.0, %v4184
        %4186 = vmatprep.mubr.f32.mxu0 0.0
        %4187 = vmatmul.mubr.f32.gmra.mrb[0].mxu0 %v4108
        %v4188 = vpop.f32.mrb[0].mxu0
        %v4189 = vadd.f32 0.0, %v4188
        %v4190 = vpop.f32.mrb[0].mxu0
        %v4191 = vadd.f32 0.0, %v4190
        %4192 = vmatprep.mubr.f32.mxu0 0.0
        %4193 = vmatmul.mubr.f32.gmra.mrb[0].mxu0 %v4109
        %v4194 = vpop.f32.mrb[0].mxu0
        %v4195 = vadd.f32 0.0, %v4194
        %v4196 = vpop.f32.mrb[0].mxu0
        %v4197 = vadd.f32 0.0, %v4196
        %4198 = vdwg.mxu0
        %v4199 = vld [vmem:[%s3] sm:$0xff]
        %v4200 = vld [vmem:[%s3 + $0x8] sm:$0xff]
        %v4201 = vld [vmem:[%s3 + $0x10] sm:$0xff]
        %v4202 = vld [vmem:[%s3 + $0x18] sm:$0xff]
        %v4203 = vld [vmem:[%s3 + $0x20] sm:$0xff]
        %v4204 = vld [vmem:[%s3 + $0x28] sm:$0xff]
        %v4205 = vld [vmem:[%s3 + $0x30] sm:$0xff]
        %v4206 = vld [vmem:[%s3 + $0x38] sm:$0xff]
        %v4207 = vld [vmem:[%s3 + $0x40] sm:$0xff]
        %v4208 = vld [vmem:[%s3 + $0x48] sm:$0xff]
        %v4209 = vld [vmem:[%s3 + $0x50] sm:$0xff]
        %v4210 = vld [vmem:[%s3 + $0x58] sm:$0xff]
        %v4211 = vld [vmem:[%s3 + $0x60] sm:$0xff]
        %v4212 = vld [vmem:[%s3 + $0x68] sm:$0xff]
        %v4213 = vld [vmem:[%s3 + $0x70] sm:$0xff]
        %v4214 = vld [vmem:[%s3 + $0x78] sm:$0xff]
        %v4215 = vld [vmem:[%s3 + $0x80] sm:$0xff]
        %v4216 = vld [vmem:[%s3 + $0x88] sm:$0xff]
        %v4217 = vld [vmem:[%s3 + $0x90] sm:$0xff]
        %v4218 = vld [vmem:[%s3 + $0x98] sm:$0xff]
        %v4219 = vld [vmem:[%s3 + $0xa0] sm:$0xff]
        %v4220 = vld [vmem:[%s3 + $0xa8] sm:$0xff]
        %v4221 = vld [vmem:[%s3 + $0xb0] sm:$0xff]
        %v4222 = vld [vmem:[%s3 + $0xb8] sm:$0xff]
        %v4223 = vld [vmem:[%s3 + $0xc0] sm:$0xff]
        %v4224 = vld [vmem:[%s3 + $0xc8] sm:$0xff]
        %v4225 = vld [vmem:[%s3 + $0xd0] sm:$0xff]
        %v4226 = vld [vmem:[%s3 + $0xd8] sm:$0xff]
        %v4227 = vld [vmem:[%s3 + $0xe0] sm:$0xff]
        %v4228 = vld [vmem:[%s3 + $0xe8] sm:$0xff]
        %v4229 = vld [vmem:[%s3 + $0xf0] sm:$0xff]
        %v4230 = vld [vmem:[%s3 + $0xf8] sm:$0xff]
        %s4231 = scalar_lea.vmem %s3, 256
        %v4232 = vld [vmem:[%s4231] sm:$0xff]
        %v4233 = vld [vmem:[%s4231 + $0x8] sm:$0xff]
        %v4234 = vld [vmem:[%s4231 + $0x10] sm:$0xff]
        %v4235 = vld [vmem:[%s4231 + $0x18] sm:$0xff]
        %v4236 = vld [vmem:[%s4231 + $0x20] sm:$0xff]
        %v4237 = vld [vmem:[%s4231 + $0x28] sm:$0xff]
        %v4238 = vld [vmem:[%s4231 + $0x30] sm:$0xff]
        %v4239 = vld [vmem:[%s4231 + $0x38] sm:$0xff]
        %v4240 = vld [vmem:[%s4231 + $0x40] sm:$0xff]
        %v4241 = vld [vmem:[%s4231 + $0x48] sm:$0xff]
        %v4242 = vld [vmem:[%s4231 + $0x50] sm:$0xff]
        %v4243 = vld [vmem:[%s4231 + $0x58] sm:$0xff]
        %v4244 = vld [vmem:[%s4231 + $0x60] sm:$0xff]
        %v4245 = vld [vmem:[%s4231 + $0x68] sm:$0xff]
        %v4246 = vld [vmem:[%s4231 + $0x70] sm:$0xff]
        %v4247 = vld [vmem:[%s4231 + $0x78] sm:$0xff]
        %v4248 = vld [vmem:[%s4231 + $0x80] sm:$0xff]
        %v4249 = vld [vmem:[%s4231 + $0x88] sm:$0xff]
        %v4250 = vld [vmem:[%s4231 + $0x90] sm:$0xff]
        %v4251 = vld [vmem:[%s4231 + $0x98] sm:$0xff]
        %v4252 = vld [vmem:[%s4231 + $0xa0] sm:$0xff]
        %v4253 = vld [vmem:[%s4231 + $0xa8] sm:$0xff]
        %v4254 = vld [vmem:[%s4231 + $0xb0] sm:$0xff]
        %v4255 = vld [vmem:[%s4231 + $0xb8] sm:$0xff]
        %v4256 = vld [vmem:[%s4231 + $0xc0] sm:$0xff]
        %v4257 = vld [vmem:[%s4231 + $0xc8] sm:$0xff]
        %v4258 = vld [vmem:[%s4231 + $0xd0] sm:$0xff]
        %v4259 = vld [vmem:[%s4231 + $0xd8] sm:$0xff]
        %v4260 = vld [vmem:[%s4231 + $0xe0] sm:$0xff]
        %v4261 = vld [vmem:[%s4231 + $0xe8] sm:$0xff]
        %v4262 = vld [vmem:[%s4231 + $0xf0] sm:$0xff]
        %v4263 = vld [vmem:[%s4231 + $0xf8] sm:$0xff]
        %4264 = vmatprep.subr.mxu0 0.0
        %4265 = vmatpush1.msra.mxu0 %v4232
        %4266 = vmatprep.subr.mxu0 0.0
        %4267 = vmatpush1.msra.mxu0 %v4233
        %4268 = vmatprep.subr.mxu0 0.0
        %4269 = vmatpush1.msra.mxu0 %v4234
        %4270 = vmatprep.subr.mxu0 0.0
        %4271 = vmatpush1.msra.mxu0 %v4235
        %4272 = vmatprep.subr.mxu0 0.0
        %4273 = vmatpush1.msra.mxu0 %v4236
        %4274 = vmatprep.subr.mxu0 0.0
        %4275 = vmatpush1.msra.mxu0 %v4237
        %4276 = vmatprep.subr.mxu0 0.0
        %4277 = vmatpush1.msra.mxu0 %v4238
        %4278 = vmatprep.subr.mxu0 0.0
        %4279 = vmatpush1.msra.mxu0 %v4239
        %4280 = vmatprep.subr.mxu0 0.0
        %4281 = vmatpush1.msra.mxu0 %v4240
        %4282 = vmatprep.subr.mxu0 0.0
        %4283 = vmatpush1.msra.mxu0 %v4241
        %4284 = vmatprep.subr.mxu0 0.0
        %4285 = vmatpush1.msra.mxu0 %v4242
        %4286 = vmatprep.subr.mxu0 0.0
        %4287 = vmatpush1.msra.mxu0 %v4243
        %4288 = vmatprep.subr.mxu0 0.0
        %4289 = vmatpush1.msra.mxu0 %v4244
        %4290 = vmatprep.subr.mxu0 0.0
        %4291 = vmatpush1.msra.mxu0 %v4245
        %4292 = vmatprep.subr.mxu0 0.0
        %4293 = vmatpush1.msra.mxu0 %v4246
        %4294 = vmatprep.subr.mxu0 0.0
        %4295 = vmatpush1.msra.mxu0 %v4247
        %4296 = vmatprep.subr.mxu0 0.0
        %4297 = vmatpush1.msra.mxu0 %v4248
        %4298 = vmatprep.subr.mxu0 0.0
        %4299 = vmatpush1.msra.mxu0 %v4249
        %4300 = vmatprep.subr.mxu0 0.0
        %4301 = vmatpush1.msra.mxu0 %v4250
        %4302 = vmatprep.subr.mxu0 0.0
        %4303 = vmatpush1.msra.mxu0 %v4251
        %4304 = vmatprep.subr.mxu0 0.0
        %4305 = vmatpush1.msra.mxu0 %v4252
        %4306 = vmatprep.subr.mxu0 0.0
        %4307 = vmatpush1.msra.mxu0 %v4253
        %4308 = vmatprep.subr.mxu0 0.0
        %4309 = vmatpush1.msra.mxu0 %v4254
        %4310 = vmatprep.subr.mxu0 0.0
        %4311 = vmatpush1.msra.mxu0 %v4255
        %4312 = vmatprep.subr.mxu0 0.0
        %4313 = vmatpush1.msra.mxu0 %v4256
        %4314 = vmatprep.subr.mxu0 0.0
        %4315 = vmatpush1.msra.mxu0 %v4257
        %4316 = vmatprep.subr.mxu0 0.0
        %4317 = vmatpush1.msra.mxu0 %v4258
        %4318 = vmatprep.subr.mxu0 0.0
        %4319 = vmatpush1.msra.mxu0 %v4259
        %4320 = vmatprep.subr.mxu0 0.0
        %4321 = vmatpush1.msra.mxu0 %v4260
        %4322 = vmatprep.subr.mxu0 0.0
        %4323 = vmatpush1.msra.mxu0 %v4261
        %4324 = vmatprep.subr.mxu0 0.0
        %4325 = vmatpush1.msra.mxu0 %v4262
        %4326 = vmatprep.subr.mxu0 0.0
        %4327 = vmatpush1.msra.mxu0 %v4263
        %4328 = vmatprep.mubr.f32.mxu0 %v4185
        %4329 = vmatmul.mubr.f32.gmra.mrb[0].mxu0 %v4183
        %v4330 = vpop.f32.mrb[0].mxu0
        %v4331 = vadd.f32 0.0, %v4330
        %v4332 = vpop.f32.mrb[0].mxu0
        %4333 = vdwg.mxu0
        %4334 = vmatprep.subr.mxu0 0.0
        %4335 = vmatpush1.msra.mxu0 %v4199
        %4336 = vmatprep.subr.mxu0 0.0
        %4337 = vmatpush1.msra.mxu0 %v4200
        %4338 = vmatprep.subr.mxu0 0.0
        %4339 = vmatpush1.msra.mxu0 %v4201
        %4340 = vmatprep.subr.mxu0 0.0
        %4341 = vmatpush1.msra.mxu0 %v4202
        %4342 = vmatprep.subr.mxu0 0.0
        %4343 = vmatpush1.msra.mxu0 %v4203
        %4344 = vmatprep.subr.mxu0 0.0
        %4345 = vmatpush1.msra.mxu0 %v4204
        %4346 = vmatprep.subr.mxu0 0.0
        %4347 = vmatpush1.msra.mxu0 %v4205
        %4348 = vmatprep.subr.mxu0 0.0
        %4349 = vmatpush1.msra.mxu0 %v4206
        %4350 = vmatprep.subr.mxu0 0.0
        %4351 = vmatpush1.msra.mxu0 %v4207
        %4352 = vmatprep.subr.mxu0 0.0
        %4353 = vmatpush1.msra.mxu0 %v4208
        %4354 = vmatprep.subr.mxu0 0.0
        %4355 = vmatpush1.msra.mxu0 %v4209
        %4356 = vmatprep.subr.mxu0 0.0
        %4357 = vmatpush1.msra.mxu0 %v4210
        %4358 = vmatprep.subr.mxu0 0.0
        %4359 = vmatpush1.msra.mxu0 %v4211
        %4360 = vmatprep.subr.mxu0 0.0
        %4361 = vmatpush1.msra.mxu0 %v4212
        %4362 = vmatprep.subr.mxu0 0.0
        %4363 = vmatpush1.msra.mxu0 %v4213
        %4364 = vmatprep.subr.mxu0 0.0
        %4365 = vmatpush1.msra.mxu0 %v4214
        %4366 = vmatprep.subr.mxu0 0.0
        %4367 = vmatpush1.msra.mxu0 %v4215
        %4368 = vmatprep.subr.mxu0 0.0
        %4369 = vmatpush1.msra.mxu0 %v4216
        %4370 = vmatprep.subr.mxu0 0.0
        %4371 = vmatpush1.msra.mxu0 %v4217
        %4372 = vmatprep.subr.mxu0 0.0
        %4373 = vmatpush1.msra.mxu0 %v4218
        %4374 = vmatprep.subr.mxu0 0.0
        %4375 = vmatpush1.msra.mxu0 %v4219
        %4376 = vmatprep.subr.mxu0 0.0
        %4377 = vmatpush1.msra.mxu0 %v4220
        %4378 = vmatprep.subr.mxu0 0.0
        %4379 = vmatpush1.msra.mxu0 %v4221
        %4380 = vmatprep.subr.mxu0 0.0
        %4381 = vmatpush1.msra.mxu0 %v4222
        %4382 = vmatprep.subr.mxu0 0.0
        %4383 = vmatpush1.msra.mxu0 %v4223
        %4384 = vmatprep.subr.mxu0 0.0
        %4385 = vmatpush1.msra.mxu0 %v4224
        %4386 = vmatprep.subr.mxu0 0.0
        %4387 = vmatpush1.msra.mxu0 %v4225
        %4388 = vmatprep.subr.mxu0 0.0
        %4389 = vmatpush1.msra.mxu0 %v4226
        %4390 = vmatprep.subr.mxu0 0.0
        %4391 = vmatpush1.msra.mxu0 %v4227
        %4392 = vmatprep.subr.mxu0 0.0
        %4393 = vmatpush1.msra.mxu0 %v4228
        %4394 = vmatprep.subr.mxu0 0.0
        %4395 = vmatpush1.msra.mxu0 %v4229
        %4396 = vmatprep.subr.mxu0 0.0
        %4397 = vmatpush1.msra.mxu0 %v4230
        %4398 = vmatprep.mubr.f32.mxu0 %v4179
        %4399 = vmatmul.mubr.f32.gmra.mrb[0].mxu0 %v4177
        %v4400 = vpop.f32.mrb[0].mxu0
        %v4401 = vadd.f32 %v4331, %v4400
        %v4402 = vpop.f32.mrb[0].mxu0
        %4403 = vdwg.mxu0
        %s4404 = scalar_lea.vmem %s3, 512
        %v4405 = vld [vmem:[%s4404] sm:$0xff]
        %v4406 = vld [vmem:[%s4404 + $0x8] sm:$0xff]
        %v4407 = vld [vmem:[%s4404 + $0x10] sm:$0xff]
        %v4408 = vld [vmem:[%s4404 + $0x18] sm:$0xff]
        %v4409 = vld [vmem:[%s4404 + $0x20] sm:$0xff]
        %v4410 = vld [vmem:[%s4404 + $0x28] sm:$0xff]
        %v4411 = vld [vmem:[%s4404 + $0x30] sm:$0xff]
        %v4412 = vld [vmem:[%s4404 + $0x38] sm:$0xff]
        %v4413 = vld [vmem:[%s4404 + $0x40] sm:$0xff]
        %v4414 = vld [vmem:[%s4404 + $0x48] sm:$0xff]
        %v4415 = vld [vmem:[%s4404 + $0x50] sm:$0xff]
        %v4416 = vld [vmem:[%s4404 + $0x58] sm:$0xff]
        %v4417 = vld [vmem:[%s4404 + $0x60] sm:$0xff]
        %v4418 = vld [vmem:[%s4404 + $0x68] sm:$0xff]
        %v4419 = vld [vmem:[%s4404 + $0x70] sm:$0xff]
        %v4420 = vld [vmem:[%s4404 + $0x78] sm:$0xff]
        %v4421 = vld [vmem:[%s4404 + $0x80] sm:$0xff]
        %v4422 = vld [vmem:[%s4404 + $0x88] sm:$0xff]
        %v4423 = vld [vmem:[%s4404 + $0x90] sm:$0xff]
        %v4424 = vld [vmem:[%s4404 + $0x98] sm:$0xff]
        %v4425 = vld [vmem:[%s4404 + $0xa0] sm:$0xff]
        %v4426 = vld [vmem:[%s4404 + $0xa8] sm:$0xff]
        %v4427 = vld [vmem:[%s4404 + $0xb0] sm:$0xff]
        %v4428 = vld [vmem:[%s4404 + $0xb8] sm:$0xff]
        %v4429 = vld [vmem:[%s4404 + $0xc0] sm:$0xff]
        %v4430 = vld [vmem:[%s4404 + $0xc8] sm:$0xff]
        %v4431 = vld [vmem:[%s4404 + $0xd0] sm:$0xff]
        %v4432 = vld [vmem:[%s4404 + $0xd8] sm:$0xff]
        %v4433 = vld [vmem:[%s4404 + $0xe0] sm:$0xff]
        %v4434 = vld [vmem:[%s4404 + $0xe8] sm:$0xff]
        %v4435 = vld [vmem:[%s4404 + $0xf0] sm:$0xff]
        %v4436 = vld [vmem:[%s4404 + $0xf8] sm:$0xff]
        %4437 = vmatprep.subr.mxu0 0.0
        %4438 = vmatpush1.msra.mxu0 %v4405
        %4439 = vmatprep.subr.mxu0 0.0
        %4440 = vmatpush1.msra.mxu0 %v4406
        %4441 = vmatprep.subr.mxu0 0.0
        %4442 = vmatpush1.msra.mxu0 %v4407
        %4443 = vmatprep.subr.mxu0 0.0
        %4444 = vmatpush1.msra.mxu0 %v4408
        %4445 = vmatprep.subr.mxu0 0.0
        %4446 = vmatpush1.msra.mxu0 %v4409
        %4447 = vmatprep.subr.mxu0 0.0
        %4448 = vmatpush1.msra.mxu0 %v4410
        %4449 = vmatprep.subr.mxu0 0.0
        %4450 = vmatpush1.msra.mxu0 %v4411
        %4451 = vmatprep.subr.mxu0 0.0
        %4452 = vmatpush1.msra.mxu0 %v4412
        %4453 = vmatprep.subr.mxu0 0.0
        %4454 = vmatpush1.msra.mxu0 %v4413
        %4455 = vmatprep.subr.mxu0 0.0
        %4456 = vmatpush1.msra.mxu0 %v4414
        %4457 = vmatprep.subr.mxu0 0.0
        %4458 = vmatpush1.msra.mxu0 %v4415
        %4459 = vmatprep.subr.mxu0 0.0
        %4460 = vmatpush1.msra.mxu0 %v4416
        %4461 = vmatprep.subr.mxu0 0.0
        %4462 = vmatpush1.msra.mxu0 %v4417
        %4463 = vmatprep.subr.mxu0 0.0
        %4464 = vmatpush1.msra.mxu0 %v4418
        %4465 = vmatprep.subr.mxu0 0.0
        %4466 = vmatpush1.msra.mxu0 %v4419
        %4467 = vmatprep.subr.mxu0 0.0
        %4468 = vmatpush1.msra.mxu0 %v4420
        %4469 = vmatprep.subr.mxu0 0.0
        %4470 = vmatpush1.msra.mxu0 %v4421
        %4471 = vmatprep.subr.mxu0 0.0
        %4472 = vmatpush1.msra.mxu0 %v4422
        %4473 = vmatprep.subr.mxu0 0.0
        %4474 = vmatpush1.msra.mxu0 %v4423
        %4475 = vmatprep.subr.mxu0 0.0
        %4476 = vmatpush1.msra.mxu0 %v4424
        %4477 = vmatprep.subr.mxu0 0.0
        %4478 = vmatpush1.msra.mxu0 %v4425
        %4479 = vmatprep.subr.mxu0 0.0
        %4480 = vmatpush1.msra.mxu0 %v4426
        %4481 = vmatprep.subr.mxu0 0.0
        %4482 = vmatpush1.msra.mxu0 %v4427
        %4483 = vmatprep.subr.mxu0 0.0
        %4484 = vmatpush1.msra.mxu0 %v4428
        %4485 = vmatprep.subr.mxu0 0.0
        %4486 = vmatpush1.msra.mxu0 %v4429
        %4487 = vmatprep.subr.mxu0 0.0
        %4488 = vmatpush1.msra.mxu0 %v4430
        %4489 = vmatprep.subr.mxu0 0.0
        %4490 = vmatpush1.msra.mxu0 %v4431
        %4491 = vmatprep.subr.mxu0 0.0
        %4492 = vmatpush1.msra.mxu0 %v4432
        %4493 = vmatprep.subr.mxu0 0.0
        %4494 = vmatpush1.msra.mxu0 %v4433
        %4495 = vmatprep.subr.mxu0 0.0
        %4496 = vmatpush1.msra.mxu0 %v4434
        %4497 = vmatprep.subr.mxu0 0.0
        %4498 = vmatpush1.msra.mxu0 %v4435
        %4499 = vmatprep.subr.mxu0 0.0
        %4500 = vmatpush1.msra.mxu0 %v4436
        %4501 = vmatprep.mubr.f32.mxu0 %v4191
        %4502 = vmatmul.mubr.f32.gmra.mrb[0].mxu0 %v4189
        %v4503 = vpop.f32.mrb[0].mxu0
        %v4504 = vadd.f32 0.0, %v4503
        %v4505 = vpop.f32.mrb[0].mxu0
        %4506 = vdwg.mxu0
        %v4507 = vadd.f32 %v4401, %v4504
        %s4508 = scalar_lea.vmem %s3, 768
        %v4509 = vld [vmem:[%s4508] sm:$0xff]
        %v4510 = vld [vmem:[%s4508 + $0x8] sm:$0xff]
        %v4511 = vld [vmem:[%s4508 + $0x10] sm:$0xff]
        %v4512 = vld [vmem:[%s4508 + $0x18] sm:$0xff]
        %v4513 = vld [vmem:[%s4508 + $0x20] sm:$0xff]
        %v4514 = vld [vmem:[%s4508 + $0x28] sm:$0xff]
        %v4515 = vld [vmem:[%s4508 + $0x30] sm:$0xff]
        %v4516 = vld [vmem:[%s4508 + $0x38] sm:$0xff]
        %v4517 = vld [vmem:[%s4508 + $0x40] sm:$0xff]
        %v4518 = vld [vmem:[%s4508 + $0x48] sm:$0xff]
        %v4519 = vld [vmem:[%s4508 + $0x50] sm:$0xff]
        %v4520 = vld [vmem:[%s4508 + $0x58] sm:$0xff]
        %v4521 = vld [vmem:[%s4508 + $0x60] sm:$0xff]
        %v4522 = vld [vmem:[%s4508 + $0x68] sm:$0xff]
        %v4523 = vld [vmem:[%s4508 + $0x70] sm:$0xff]
        %v4524 = vld [vmem:[%s4508 + $0x78] sm:$0xff]
        %v4525 = vld [vmem:[%s4508 + $0x80] sm:$0xff]
        %v4526 = vld [vmem:[%s4508 + $0x88] sm:$0xff]
        %v4527 = vld [vmem:[%s4508 + $0x90] sm:$0xff]
        %v4528 = vld [vmem:[%s4508 + $0x98] sm:$0xff]
        %v4529 = vld [vmem:[%s4508 + $0xa0] sm:$0xff]
        %v4530 = vld [vmem:[%s4508 + $0xa8] sm:$0xff]
        %v4531 = vld [vmem:[%s4508 + $0xb0] sm:$0xff]
        %v4532 = vld [vmem:[%s4508 + $0xb8] sm:$0xff]
        %v4533 = vld [vmem:[%s4508 + $0xc0] sm:$0xff]
        %v4534 = vld [vmem:[%s4508 + $0xc8] sm:$0xff]
        %v4535 = vld [vmem:[%s4508 + $0xd0] sm:$0xff]
        %v4536 = vld [vmem:[%s4508 + $0xd8] sm:$0xff]
        %v4537 = vld [vmem:[%s4508 + $0xe0] sm:$0xff]
        %v4538 = vld [vmem:[%s4508 + $0xe8] sm:$0xff]
        %v4539 = vld [vmem:[%s4508 + $0xf0] sm:$0xff]
        %v4540 = vld [vmem:[%s4508 + $0xf8] sm:$0xff]
        %4541 = vmatprep.subr.mxu0 0.0
        %4542 = vmatpush1.msra.mxu0 %v4509
        %4543 = vmatprep.subr.mxu0 0.0
        %4544 = vmatpush1.msra.mxu0 %v4510
        %4545 = vmatprep.subr.mxu0 0.0
        %4546 = vmatpush1.msra.mxu0 %v4511
        %4547 = vmatprep.subr.mxu0 0.0
        %4548 = vmatpush1.msra.mxu0 %v4512
        %4549 = vmatprep.subr.mxu0 0.0
        %4550 = vmatpush1.msra.mxu0 %v4513
        %4551 = vmatprep.subr.mxu0 0.0
        %4552 = vmatpush1.msra.mxu0 %v4514
        %4553 = vmatprep.subr.mxu0 0.0
        %4554 = vmatpush1.msra.mxu0 %v4515
        %4555 = vmatprep.subr.mxu0 0.0
        %4556 = vmatpush1.msra.mxu0 %v4516
        %4557 = vmatprep.subr.mxu0 0.0
        %4558 = vmatpush1.msra.mxu0 %v4517
        %4559 = vmatprep.subr.mxu0 0.0
        %4560 = vmatpush1.msra.mxu0 %v4518
        %4561 = vmatprep.subr.mxu0 0.0
        %4562 = vmatpush1.msra.mxu0 %v4519
        %4563 = vmatprep.subr.mxu0 0.0
        %4564 = vmatpush1.msra.mxu0 %v4520
        %4565 = vmatprep.subr.mxu0 0.0
        %4566 = vmatpush1.msra.mxu0 %v4521
        %4567 = vmatprep.subr.mxu0 0.0
        %4568 = vmatpush1.msra.mxu0 %v4522
        %4569 = vmatprep.subr.mxu0 0.0
        %4570 = vmatpush1.msra.mxu0 %v4523
        %4571 = vmatprep.subr.mxu0 0.0
        %4572 = vmatpush1.msra.mxu0 %v4524
        %4573 = vmatprep.subr.mxu0 0.0
        %4574 = vmatpush1.msra.mxu0 %v4525
        %4575 = vmatprep.subr.mxu0 0.0
        %4576 = vmatpush1.msra.mxu0 %v4526
        %4577 = vmatprep.subr.mxu0 0.0
        %4578 = vmatpush1.msra.mxu0 %v4527
        %4579 = vmatprep.subr.mxu0 0.0
        %4580 = vmatpush1.msra.mxu0 %v4528
        %4581 = vmatprep.subr.mxu0 0.0
        %4582 = vmatpush1.msra.mxu0 %v4529
        %4583 = vmatprep.subr.mxu0 0.0
        %4584 = vmatpush1.msra.mxu0 %v4530
        %4585 = vmatprep.subr.mxu0 0.0
        %4586 = vmatpush1.msra.mxu0 %v4531
        %4587 = vmatprep.subr.mxu0 0.0
        %4588 = vmatpush1.msra.mxu0 %v4532
        %4589 = vmatprep.subr.mxu0 0.0
        %4590 = vmatpush1.msra.mxu0 %v4533
        %4591 = vmatprep.subr.mxu0 0.0
        %4592 = vmatpush1.msra.mxu0 %v4534
        %4593 = vmatprep.subr.mxu0 0.0
        %4594 = vmatpush1.msra.mxu0 %v4535
        %4595 = vmatprep.subr.mxu0 0.0
        %4596 = vmatpush1.msra.mxu0 %v4536
        %4597 = vmatprep.subr.mxu0 0.0
        %4598 = vmatpush1.msra.mxu0 %v4537
        %4599 = vmatprep.subr.mxu0 0.0
        %4600 = vmatpush1.msra.mxu0 %v4538
        %4601 = vmatprep.subr.mxu0 0.0
        %4602 = vmatpush1.msra.mxu0 %v4539
        %4603 = vmatprep.subr.mxu0 0.0
        %4604 = vmatpush1.msra.mxu0 %v4540
        %4605 = vmatprep.mubr.f32.mxu0 %v4197
        %4606 = vmatmul.mubr.f32.gmra.mrb[0].mxu0 %v4195
        %v4607 = vpop.f32.mrb[0].mxu0
        %v4608 = vadd.f32 0.0, %v4607
        %v4609 = vpop.f32.mrb[0].mxu0
        %4610 = vdwg.mxu0
        %v4611 = vadd.f32 %v4507, %v4608
        %v4612 = vld [vmem:[%s4] sm:$0x1]
        %v4614 = vlaneseq
        %v4615 = vshrl.u32 %v4614, 7
        %v4616 = vsub.s32 0, %v4615
        %v4617 = vrot.slane %v4612, %v4616
        %v4619 = vadd.f32 %v4611, %v4617
        %v4620 = vmax.f32 %v4619, 0.0
        %v4621 = vld [vmem:[%s5] sm:$0xff]
        %v4622 = vld [vmem:[%s5 + $0x8] sm:$0xff]
        %v4623 = vld [vmem:[%s5 + $0x10] sm:$0xff]
        %v4624 = vld [vmem:[%s5 + $0x18] sm:$0xff]
        %v4625 = vld [vmem:[%s5 + $0x20] sm:$0xff]
        %v4626 = vld [vmem:[%s5 + $0x28] sm:$0xff]
        %v4627 = vld [vmem:[%s5 + $0x30] sm:$0xff]
        %v4628 = vld [vmem:[%s5 + $0x38] sm:$0xff]
        %v4629 = vld [vmem:[%s5 + $0x40] sm:$0xff]
        %v4630 = vld [vmem:[%s5 + $0x48] sm:$0xff]
        %v4631 = vld [vmem:[%s5 + $0x50] sm:$0xff]
        %v4632 = vld [vmem:[%s5 + $0x58] sm:$0xff]
        %v4633 = vld [vmem:[%s5 + $0x60] sm:$0xff]
        %v4634 = vld [vmem:[%s5 + $0x68] sm:$0xff]
        %v4635 = vld [vmem:[%s5 + $0x70] sm:$0xff]
        %v4636 = vld [vmem:[%s5 + $0x78] sm:$0xff]
        %v4637 = vld [vmem:[%s6] sm:$0x1]
        %v4639 = vlaneseq
        %v4640 = vshrl.u32 %v4639, 7
        %v4641 = vsub.s32 0, %v4640
        %v4642 = vrot.slane %v4637, %v4641
        %4644 = vmatprep.subr.mxu0 0.0
        %4645 = vmatpush1.msra.mxu0 %v4621
        %4646 = vmatprep.subr.mxu0 0.0
        %4647 = vmatpush1.msra.mxu0 %v4622
        %4648 = vmatprep.subr.mxu0 0.0
        %4649 = vmatpush1.msra.mxu0 %v4623
        %4650 = vmatprep.subr.mxu0 0.0
        %4651 = vmatpush1.msra.mxu0 %v4624
        %4652 = vmatprep.subr.mxu0 0.0
        %4653 = vmatpush1.msra.mxu0 %v4625
        %4654 = vmatprep.subr.mxu0 0.0
        %4655 = vmatpush1.msra.mxu0 %v4626
        %4656 = vmatprep.subr.mxu0 0.0
        %4657 = vmatpush1.msra.mxu0 %v4627
        %4658 = vmatprep.subr.mxu0 0.0
        %4659 = vmatpush1.msra.mxu0 %v4628
        %4660 = vmatprep.subr.mxu0 0.0
        %4661 = vmatpush1.msra.mxu0 %v4629
        %4662 = vmatprep.subr.mxu0 0.0
        %4663 = vmatpush1.msra.mxu0 %v4630
        %4664 = vmatprep.subr.mxu0 0.0
        %4665 = vmatpush1.msra.mxu0 %v4631
        %4666 = vmatprep.subr.mxu0 0.0
        %4667 = vmatpush1.msra.mxu0 %v4632
        %4668 = vmatprep.subr.mxu0 0.0
        %4669 = vmatpush1.msra.mxu0 %v4633
        %4670 = vmatprep.subr.mxu0 0.0
        %4671 = vmatpush1.msra.mxu0 %v4634
        %4672 = vmatprep.subr.mxu0 0.0
        %4673 = vmatpush1.msra.mxu0 %v4635
        %4674 = vmatprep.subr.mxu0 0.0
        %4675 = vmatpush1.msra.mxu0 %v4636
        %4676 = vmatprep.subr.mxu0 0.0
        %4677 = vmatpush1.msra.mxu0 0.0
        %4678 = vmatprep.subr.mxu0 0.0
        %4679 = vmatpush1.msra.mxu0 0.0
        %4680 = vmatprep.subr.mxu0 0.0
        %4681 = vmatpush1.msra.mxu0 0.0
        %4682 = vmatprep.subr.mxu0 0.0
        %4683 = vmatpush1.msra.mxu0 0.0
        %4684 = vmatprep.subr.mxu0 0.0
        %4685 = vmatpush1.msra.mxu0 0.0
        %4686 = vmatprep.subr.mxu0 0.0
        %4687 = vmatpush1.msra.mxu0 0.0
        %4688 = vmatprep.subr.mxu0 0.0
        %4689 = vmatpush1.msra.mxu0 0.0
        %4690 = vmatprep.subr.mxu0 0.0
        %4691 = vmatpush1.msra.mxu0 0.0
        %4692 = vmatprep.subr.mxu0 0.0
        %4693 = vmatpush1.msra.mxu0 0.0
        %4694 = vmatprep.subr.mxu0 0.0
        %4695 = vmatpush1.msra.mxu0 0.0
        %4696 = vmatprep.subr.mxu0 0.0
        %4697 = vmatpush1.msra.mxu0 0.0
        %4698 = vmatprep.subr.mxu0 0.0
        %4699 = vmatpush1.msra.mxu0 0.0
        %4700 = vmatprep.subr.mxu0 0.0
        %4701 = vmatpush1.msra.mxu0 0.0
        %4702 = vmatprep.subr.mxu0 0.0
        %4703 = vmatpush1.msra.mxu0 0.0
        %4704 = vmatprep.subr.mxu0 0.0
        %4705 = vmatpush1.msra.mxu0 0.0
        %4706 = vmatprep.subr.mxu0 0.0
        %4707 = vmatpush1.msra.mxu0 0.0
        %4708 = vmatprep.mubr.f32.mxu0 0.0
        %4709 = vmatmul.mubr.f32.gmra.mrb[0].mxu0 %v4620
        %v4710 = vpop.f32.mrb[0].mxu0
        %v4711 = vadd.f32 %v4642, %v4710
        %v4712 = vpop.f32.mrb[0].mxu0
        %4713 = vdwg.mxu0
        %4714 = vst [vmem:[%s271] sm:$0xff] %v4711
        %s4715 = sand.u32 %s181, 1
        %s4716 = scalar_lea.sflag [#allocation3], %s4715
        %s4717 = sand.u32 %s181, 1
        %s4718 = smul.addr %s4717, 8
        %s4719 = scalar_lea.vmem [#allocation2], %s4718
        // Predicated region
        $region49: #{net_forward.1} parent=47 // pred_check
          %p4720 = pneg %p191
        $region50: #{net_forward.1} parent=47 // pred_check_branch
          %4722 = sbr.rel (%p4720) target = $region52
        $region51: #{net_forward.1} parent=47 // pred_region
          %s4724 = ssub.s32 128, 128
          %4725 = vsyncadd %s4716, %s4724
          %s4726 = smul.addr %s21, 128
          %s4727 = scalar_lea.hbm %s7, %s4726
          %s4729 = sshll.u32 %s4719, 4
          %s4730 = int_to_ptr.vmem [resolvable:$true] %s4729
          %4732 = dma.vmem_to_hbm [thread:$0]  %s4730, 128, %s4727, %s4716
        $region52: #{net_forward.1} parent=47 // pred_fallthru
          _
      $region48: #{net_forward.1} parent=5 // pred_fallthru
        _
      %p4733 = scmp.le.s32.totalorder 2, %s16
      // Predicated region
      $region53: #{net_forward.1} parent=5 // pred_check
        %p4734 = pneg %p4733
      $region54: #{net_forward.1} parent=5 // pred_check_branch
        %4736 = sbr.rel (%p4734) target = $region56
      $region55: #{net_forward.1} parent=5 // pred_region
        %s4737 = ssub.s32 %s16, 2
        // Predicated region
        $region57: #{net_forward.1} parent=55 // pred_check
          %p4738 = pneg %p197
        $region58: #{net_forward.1} parent=55 // pred_check_branch
          %4740 = sbr.rel (%p4738) target = $region60
        $region59: #{net_forward.1} parent=55 // pred_region
          %s4741 = sand.u32 %s182, 1
          %s4742 = scalar_lea.sflag [#allocation3], %s4741
          %s4743 = sand.u32 %s182, 1
          %s4744 = smul.addr %s4743, 8
          %s4745 = scalar_lea.vmem [#allocation2], %s4744
          %4746 = dma.done %s4742, 128
        $region60: #{net_forward.1} parent=55 // pred_fallthru
          _
      $region56: #{net_forward.1} parent=5 // pred_fallthru
        _
    $region6: #{net_forward.1} parent=1 // loop_footer
      %s20 = sadd.s32 1, %s16
    $region7: #{net_forward.1} parent=1 // loop_footer_branch
      %15 = sbr.rel target = $region3
    $region8: #{net_forward.1} parent=1 // loop_exit
      _
    %4747 = vsyncpa [#allocation3], 1
    %s4748 = scalar_lea.sflag [#allocation3], 1
    %4749 = vsyncpa %s4748, 1

</llo_original>
